<compile_context>
chip_gen: v6e
topology: v6e:2x2x1
jax: 0.10.0
libtpu: 0.0.40
codegen_flags: <defaults>
</compile_context>

<pallas_src>
import functools

import jax
import jax.numpy as jnp
from jax import lax
from jax.experimental import pallas as pl
from jax.experimental.pallas import tpu as pltpu


# ------------------------------ tiling helper -------------------------------

def _pick_tile(dim, target, step):
    """Largest multiple of `step` <= target that divides `dim`; else full dim."""
    if dim <= target:
        return dim
    t = (target // step) * step
    while t >= step and dim % t != 0:
        t -= step
    return t if (t >= step and dim % t == 0) else dim


# -------------------------- tiled matmul (+bias+gelu) ------------------------

def _matmul_bias_kernel(x_ref, w_ref, b_ref, o_ref, acc_ref, *, activation):
    k = pl.program_id(2)

    @pl.when(k == 0)
    def _():
        acc_ref[...] = jnp.zeros_like(acc_ref)

    acc_ref[...] += jnp.dot(x_ref[...], w_ref[...],
                            preferred_element_type=jnp.float32)

    @pl.when(k == pl.num_programs(2) - 1)
    def _():
        acc = acc_ref[...] + b_ref[...].astype(jnp.float32)  # (1, tn) broadcast
        if activation == "gelu":                              # exact (erf) GELU
            acc = 0.5 * acc * (1.0 + lax.erf(acc * (1.0 / jnp.sqrt(2.0))))
        o_ref[...] = acc.astype(o_ref.dtype)


def matmul_bias(x, w, b, activation=None, out_dtype=jnp.bfloat16,
                tm_target=256, tn_target=256, tk_target=512):
    """x: (M, K), w: (K, N) bf16, b: (N,) f32 -> (M, N) out_dtype.

    Tile targets (bf16) keep the double-buffered footprint well under the
    v7x 32 MiB default scoped-VMEM limit (~2 MiB here)."""
    M, K = x.shape
    N = w.shape[1]
    tm = _pick_tile(M, tm_target, 8)
    tn = _pick_tile(N, tn_target, 128)
    tk = _pick_tile(K, tk_target, 128)
    grid = (M // tm, N // tn, K // tk)
    return pl.pallas_call(
        functools.partial(_matmul_bias_kernel, activation=activation),
        out_shape=jax.ShapeDtypeStruct((M, N), out_dtype),
        grid_spec=pltpu.PrefetchScalarGridSpec(
            num_scalar_prefetch=0,
            grid=grid,
            in_specs=[
                pl.BlockSpec((tm, tk), lambda i, j, k: (i, k)),
                pl.BlockSpec((tk, tn), lambda i, j, k: (k, j)),
                pl.BlockSpec((1, tn), lambda i, j, k: (0, j)),
            ],
            out_specs=pl.BlockSpec((tm, tn), lambda i, j, k: (i, j)),
            scratch_shapes=[pltpu.VMEM((tm, tn), jnp.float32)],
        ),
        compiler_params=pltpu.CompilerParams(
            dimension_semantics=("parallel", "parallel", "arbitrary")),
    )(x.astype(jnp.bfloat16), w.astype(jnp.bfloat16), b.reshape(1, N))


# --------------------------- layernorm (+residual) ---------------------------

def _ln_finish(x, g_ref, b_ref, o_ref, eps):
    mean = jnp.mean(x, axis=-1, keepdims=True)
    var = jnp.mean((x - mean) ** 2, axis=-1, keepdims=True)
    inv = lax.rsqrt(var + eps)
    o_ref[...] = ((x - mean) * inv * g_ref[...] + b_ref[...]).astype(o_ref.dtype)


def _layernorm_kernel(x_ref, g_ref, b_ref, o_ref, *, eps):
    _ln_finish(x_ref[...].astype(jnp.float32), g_ref, b_ref, o_ref, eps)


def _add_layernorm_kernel(x_ref, r_ref, g_ref, b_ref, o_ref, *, eps):
    x = x_ref[...].astype(jnp.float32) + r_ref[...].astype(jnp.float32)
    _ln_finish(x, g_ref, b_ref, o_ref, eps)


def layernorm(x, gamma, beta, eps=1e-12, out_dtype=jnp.bfloat16, tm_target=512):
    M, H = x.shape
    tm = _pick_tile(M, tm_target, 8)
    return pl.pallas_call(
        functools.partial(_layernorm_kernel, eps=eps),
        out_shape=jax.ShapeDtypeStruct((M, H), out_dtype),
        grid=(M // tm,),
        in_specs=[
            pl.BlockSpec((tm, H), lambda i: (i, 0)),
            pl.BlockSpec((1, H), lambda i: (0, 0)),
            pl.BlockSpec((1, H), lambda i: (0, 0)),
        ],
        out_specs=pl.BlockSpec((tm, H), lambda i: (i, 0)),
        compiler_params=pltpu.CompilerParams(dimension_semantics=("parallel",)),
    )(x, gamma.reshape(1, H), beta.reshape(1, H))


def add_layernorm(x, r, gamma, beta, eps=1e-12, out_dtype=jnp.bfloat16,
                  tm_target=512):
    """LayerNorm(x + r): residual add fused into the LN kernel (one HBM pass)."""
    M, H = x.shape
    tm = _pick_tile(M, tm_target, 8)
    return pl.pallas_call(
        functools.partial(_add_layernorm_kernel, eps=eps),
        out_shape=jax.ShapeDtypeStruct((M, H), out_dtype),
        grid=(M // tm,),
        in_specs=[
            pl.BlockSpec((tm, H), lambda i: (i, 0)),
            pl.BlockSpec((tm, H), lambda i: (i, 0)),
            pl.BlockSpec((1, H), lambda i: (0, 0)),
            pl.BlockSpec((1, H), lambda i: (0, 0)),
        ],
        out_specs=pl.BlockSpec((tm, H), lambda i: (i, 0)),
        compiler_params=pltpu.CompilerParams(dimension_semantics=("parallel",)),
    )(x, r, gamma.reshape(1, H), beta.reshape(1, H))


# ------------------------- masked multi-head attention -----------------------

def _attention_kernel(q_ref, k_ref, v_ref, m_ref, o_ref, *, n_heads, scale):
    q = q_ref[0]                            # (S, H) bf16
    k = k_ref[0]
    v = v_ref[0]
    mask = m_ref[0]                         # (1, S) f32 additive
    H = q.shape[-1]
    dH = H // n_heads
    dn = (((1,), (1,)), ((), ()))           # contract last dims; no transpose
    outs = []
    for h in range(n_heads):                # static loop; heads sliced in-kernel
        lo, hi = h * dH, (h + 1) * dH
        qh, kh, vh = q[:, lo:hi], k[:, lo:hi], v[:, lo:hi]
        s = lax.dot_general(qh, kh, dn,
                            preferred_element_type=jnp.float32) * scale  # (S, S)
        s = s + mask
        s = s - jnp.max(s, axis=-1, keepdims=True)
        p = jnp.exp(s)
        p = p * pl.reciprocal(jnp.sum(p, axis=-1, keepdims=True), approx=True)
        outs.append(jnp.dot(p.astype(v.dtype), vh,
                            preferred_element_type=jnp.float32))
    # single lane-dense (S, H) store
    o_ref[0] = jnp.concatenate(outs, axis=-1).astype(o_ref.dtype)


def attention(q, k, v, add_mask, n_heads):
    """q,k,v: (B, S, H) bf16 (all heads packed on lanes); add_mask: (B, 1, S) f32."""
    B, S, H = q.shape
    dH = H // n_heads
    scale = 1.0 / (dH ** 0.5)
    # TODO(synk): for long S, split into a flash-style grid=(B, S//tq) with an
    # online-softmax accumulator; full-S blocks are fine at BERT's S<=512.
    return pl.pallas_call(
        functools.partial(_attention_kernel, n_heads=n_heads, scale=scale),
        out_shape=jax.ShapeDtypeStruct((B, S, H), jnp.bfloat16),
        grid=(B,),
        in_specs=[
            pl.BlockSpec((1, S, H), lambda b: (b, 0, 0)),
            pl.BlockSpec((1, S, H), lambda b: (b, 0, 0)),
            pl.BlockSpec((1, S, H), lambda b: (b, 0, 0)),
            pl.BlockSpec((1, 1, S), lambda b: (b, 0, 0)),
        ],
        out_specs=pl.BlockSpec((1, S, H), lambda b: (b, 0, 0)),
        compiler_params=pltpu.CompilerParams(dimension_semantics=("parallel",)),
    )(q, k, v, add_mask)


# ------------------------------ BERT forward --------------------------------

def encoder_layer(h, add_mask, p, B, S, n_heads):
    M, H = h.shape
    # fused QKV projection: one GEMM against [H, 3H]
    qkv = matmul_bias(h, p["wqkv"], p["bqkv"])            # (M, 3H) bf16
    q = qkv[:, :H].reshape(B, S, H)
    k = qkv[:, H:2 * H].reshape(B, S, H)
    v = qkv[:, 2 * H:].reshape(B, S, H)

    # lane-dense all-heads attention; no head-split transposes in HBM
    ctx = attention(q, k, v, add_mask, n_heads).reshape(M, H)

    attn_out = matmul_bias(ctx, p["wo"], p["bo"])
    h = add_layernorm(h, attn_out, p["ln1_g"], p["ln1_b"])

    inter = matmul_bias(h, p["wi"], p["bi"], activation="gelu")   # bf16 intermediate
    ffn_out = matmul_bias(inter, p["wo2"], p["bo2"])
    h = add_layernorm(h, ffn_out, p["ln2_g"], p["ln2_b"])
    return h


def bert_forward(params, x, segs, mask_src, mask_cls, clss, *, n_heads):
    """Mirrors Bert.forward for model_name='bert' (finetune=False path: the
    eval/no-grad branch has identical math). mask_cls/clss are unused by the
    BERT branch (they only matter for the longformer branch)."""
    del mask_cls, clss
    B, S = x.shape
    H = params["word_emb"].shape[1]

    # Embeddings (gather kept in plain JAX glue) + LayerNorm (Pallas).
    pos = jnp.arange(S)
    h = (params["word_emb"][x]
         + params["pos_emb"][pos][None, :, :]
         + params["type_emb"][segs])
    h = layernorm(h.reshape(B * S, H), params["emb_ln_g"], params["emb_ln_b"])

    # HF-style extended attention mask: (1 - mask) * -10000
    add_mask = ((1.0 - mask_src.astype(jnp.float32)) * -10000.0).reshape(B, 1, S)

    for layer_params in params["layers"]:
        h = encoder_layer(h, add_mask, layer_params, B, S, n_heads)

    return h.reshape(B, S, H).astype(jnp.float32)   # last_hidden_state / top_vec


# --------------------------- Deterministic init ------------------------------

def init_params(key, vocab, hidden, ffn, n_layers, max_pos=512, type_vocab=2):
    def norm(k, shape, dtype=jnp.float32):
        return (jax.random.normal(k, shape, jnp.float32) * 0.02).astype(dtype)

    keys = jax.random.split(key, 3 + n_layers)
    params = {
        "word_emb": norm(keys[0], (vocab, hidden)),
        "pos_emb": norm(keys[1], (max_pos, hidden)),
        "type_emb": norm(keys[2], (type_vocab, hidden)),
        "emb_ln_g": jnp.ones((hidden,), jnp.float32),
        "emb_ln_b": jnp.zeros((hidden,), jnp.float32),
        "layers": [],
    }
    for l in range(n_layers):
        lk = jax.random.split(keys[3 + l], 10)
        wq = norm(lk[0], (hidden, hidden))
        wk = norm(lk[1], (hidden, hidden))
        wv = norm(lk[2], (hidden, hidden))
        params["layers"].append({
            "wqkv": jnp.concatenate([wq, wk, wv], axis=1).astype(jnp.bfloat16),
            "bqkv": norm(lk[3], (3 * hidden,)),
            "wo": norm(lk[4], (hidden, hidden), jnp.bfloat16),
            "bo": norm(lk[5], (hidden,)),
            "ln1_g": jnp.ones((hidden,), jnp.float32),
            "ln1_b": jnp.zeros((hidden,), jnp.float32),
            "wi": norm(lk[6], (hidden, ffn), jnp.bfloat16),
            "bi": norm(lk[7], (ffn,)),
            "wo2": norm(lk[8], (ffn, hidden), jnp.bfloat16),
            "bo2": norm(lk[9], (hidden,)),
            "ln2_g": jnp.ones((hidden,), jnp.float32),
            "ln2_b": jnp.zeros((hidden,), jnp.float32),
        })
    return params


# ----------------------------------- main ------------------------------------

if __name__ == "__main__":
    B, S = 2, 8
    H, nH, F = 128, 4, 512
    V, L = 128, 2

    key = jax.random.PRNGKey(0)
    k_params, k_x, k_segs = jax.random.split(key, 3)

    params = init_params(k_params, vocab=V, hidden=H, ffn=F, n_layers=L)

    x = jax.random.randint(k_x, (B, S), 0, V, dtype=jnp.int32)
    segs = jax.random.randint(k_segs, (B, S), 0, 2, dtype=jnp.int32)
    # sequence 0 has length 8, sequence 1 has length 6 (rest padded/masked)
    lengths = jnp.array([[8], [6]], dtype=jnp.int32)
    mask_src = (jnp.arange(S)[None, :] < lengths).astype(jnp.float32)
    mask_cls = jnp.ones((B, 2), jnp.float32)      # unused by the BERT branch
    clss = jnp.zeros((B, 2), jnp.int32)           # unused by the BERT branch

    fwd = jax.jit(functools.partial(bert_forward, n_heads=nH))
    top_vec = fwd(params, x, segs, mask_src, mask_cls, clss)
    jax.block_until_ready(top_vec)

    assert top_vec.shape == (B, S, H)
    assert top_vec.dtype == jnp.float32
    assert bool(jnp.all(jnp.isfinite(top_vec)))
    print("KERNEL_OK")
</pallas_src>

<mosaic_0001>
module attributes {stable_mosaic.version = 11 : i64} {
  func.func @_matmul_bias_kernel(%arg0: i32, %arg1: i32, %arg2: i32, %arg3: memref<16x128xbf16, #tpu.memory_space<vmem>>, %arg4: memref<128x128xbf16, #tpu.memory_space<vmem>>, %arg5: memref<1x128xf32, #tpu.memory_space<vmem>>, %arg6: memref<16x128xbf16, #tpu.memory_space<vmem>>, %arg7: memref<16x128xf32, #tpu.memory_space<vmem>>) attributes {dimension_semantics = [#tpu.dimension_semantics<parallel>, #tpu.dimension_semantics<parallel>, #tpu.dimension_semantics<arbitrary>], iteration_bounds = array<i64: 1, 3, 1>, scalar_prefetch = 0 : i64, scratch_operands = 1 : i64, tpu.core_type = #tpu.core_type<tc>, window_params = [{transform_indices = @transform_0, window_bounds = array<i64: 16, 128>}, {transform_indices = @transform_1, window_bounds = array<i64: 128, 128>}, {transform_indices = @transform_2, window_bounds = array<i64: 1, 128>}, {transform_indices = @transform_3, window_bounds = array<i64: 16, 128>}]} {
    %c0_i32 = arith.constant 0 : i32
    %0 = arith.cmpi eq, %arg2, %c0_i32 : i32
    %1 = arith.extui %0 : i1 to i32
    %c0_i32_0 = arith.constant 0 : i32
    %2 = arith.cmpi ne, %1, %c0_i32_0 : i32
    scf.if %2 {
      %cst_10 = arith.constant 0.000000e+00 : f32
      %12 = vector.broadcast %cst_10 : f32 to vector<16x128xf32>
      %c0_11 = arith.constant 0 : index
      %c0_12 = arith.constant 0 : index
      %13 = vector.load %arg7[%c0_11, %c0_12] : memref<16x128xf32, #tpu.memory_space<vmem>>, vector<16x128xf32>
      tpu.vector_store %arg7[%c0_11, %c0_12], %12 {strides = array<i32>} : memref<16x128xf32, #tpu.memory_space<vmem>>, vector<16x128xf32>,
    } else {
    }
    %c0 = arith.constant 0 : index
    %c0_1 = arith.constant 0 : index
    %3 = vector.load %arg7[%c0, %c0_1] : memref<16x128xf32, #tpu.memory_space<vmem>>, vector<16x128xf32>
    %c0_2 = arith.constant 0 : index
    %c0_3 = arith.constant 0 : index
    %4 = vector.load %arg3[%c0_2, %c0_3] : memref<16x128xbf16, #tpu.memory_space<vmem>>, vector<16x128xbf16>
    %c0_4 = arith.constant 0 : index
    %c0_5 = arith.constant 0 : index
    %5 = vector.load %arg4[%c0_4, %c0_5] : memref<128x128xbf16, #tpu.memory_space<vmem>>, vector<128x128xbf16>
    %cst = arith.constant dense<0.000000e+00> : vector<16x128xf32>
    %6 = tpu.matmul %4, %5, %cst {dimension_numbers = #tpu.dot_dimension_numbers<[1], [0], [0], [1], [0, 0, 1, 1], [], []>} : vector<16x128xbf16>, vector<128x128xbf16>, vector<16x128xf32> -> vector<16x128xf32>
    %7 = arith.addf %3, %6 : vector<16x128xf32>
    %c0_6 = arith.constant 0 : index
    %c0_7 = arith.constant 0 : index
    %8 = vector.load %arg7[%c0_6, %c0_7] : memref<16x128xf32, #tpu.memory_space<vmem>>, vector<16x128xf32>
    tpu.vector_store %arg7[%c0_6, %c0_7], %7 {strides = array<i32>} : memref<16x128xf32, #tpu.memory_space<vmem>>, vector<16x128xf32>,
    %c0_i32_8 = arith.constant 0 : i32
    %9 = arith.cmpi eq, %arg2, %c0_i32_8 : i32
    %10 = arith.extui %9 : i1 to i32
    %c0_i32_9 = arith.constant 0 : i32
    %11 = arith.cmpi ne, %10, %c0_i32_9 : i32
    scf.if %11 {
      %c0_10 = arith.constant 0 : index
      %c0_11 = arith.constant 0 : index
      %12 = vector.load %arg7[%c0_10, %c0_11] : memref<16x128xf32, #tpu.memory_space<vmem>>, vector<16x128xf32>
      %c0_12 = arith.constant 0 : index
      %c0_13 = arith.constant 0 : index
      %13 = vector.load %arg5[%c0_12, %c0_13] : memref<1x128xf32, #tpu.memory_space<vmem>>, vector<1x128xf32>
      %14 = vector.broadcast %13 : vector<1x128xf32> to vector<16x128xf32>
      %15 = arith.addf %12, %14 : vector<16x128xf32>
      %16 = arith.truncf %15 : vector<16x128xf32> to vector<16x128xbf16>
      %c0_14 = arith.constant 0 : index
      %c0_15 = arith.constant 0 : index
      %17 = vector.load %arg6[%c0_14, %c0_15] : memref<16x128xbf16, #tpu.memory_space<vmem>>, vector<16x128xbf16>
      tpu.vector_store %arg6[%c0_14, %c0_15], %16 {strides = array<i32>} : memref<16x128xbf16, #tpu.memory_space<vmem>>, vector<16x128xbf16>,
    } else {
    }
    return
  }
  func.func @transform_0(%arg0: i32, %arg1: i32, %arg2: i32) -> (i32, i32) {
    %c0_i32 = arith.constant 0 : i32
    return %arg0, %arg2 : i32, i32
  }
  func.func @transform_1(%arg0: i32, %arg1: i32, %arg2: i32) -> (i32, i32) {
    %c0_i32 = arith.constant 0 : i32
    return %arg2, %arg1 : i32, i32
  }
  func.func @transform_2(%arg0: i32, %arg1: i32, %arg2: i32) -> (i32, i32) {
    %c0_i32 = arith.constant 0 : i32
    %c0_i32_0 = arith.constant 0 : i32
    return %c0_i32, %arg1 : i32, i32
  }
  func.func @transform_3(%arg0: i32, %arg1: i32, %arg2: i32) -> (i32, i32) {
    %c0_i32 = arith.constant 0 : i32
    return %arg0, %arg1 : i32, i32
  }
}

module attributes {stable_mosaic.version = 11 : i64} {
  func.func @_layernorm_kernel(%arg0: i32, %arg1: memref<16x128xf32, #tpu.memory_space<vmem>>, %arg2: memref<1x128xf32, #tpu.memory_space<vmem>>, %arg3: memref<1x128xf32, #tpu.memory_space<vmem>>, %arg4: memref<16x128xbf16, #tpu.memory_space<vmem>>) attributes {dimension_semantics = [#tpu.dimension_semantics<parallel>], iteration_bounds = array<i64: 1>, scalar_prefetch = 0 : i64, scratch_operands = 0 : i64, tpu.core_type = #tpu.core_type<tc>, window_params = [{transform_indices = @transform_0, window_bounds = array<i64: 16, 128>}, {pipeline_mode = #tpu.pipeline_mode<synchronous>, transform_indices = @transform_1, window_bounds = array<i64: 1, 128>}, {pipeline_mode = #tpu.pipeline_mode<synchronous>, transform_indices = @transform_2, window_bounds = array<i64: 1, 128>}, {transform_indices = @transform_3, window_bounds = array<i64: 16, 128>}]} {
    %c0 = arith.constant 0 : index
    %c0_0 = arith.constant 0 : index
    %0 = vector.load %arg1[%c0, %c0_0] : memref<16x128xf32, #tpu.memory_space<vmem>>, vector<16x128xf32>
    %cst = arith.constant dense<0.000000e+00> : vector<16xf32>
    %1 = vector.multi_reduction <add>, %0, %cst [1] : vector<16x128xf32> to vector<16xf32>
    %2 = vector.shape_cast %1 : vector<16xf32> to vector<16x1xf32>
    %cst_1 = arith.constant 1.280000e+02 : f32
    %3 = vector.broadcast %cst_1 : f32 to vector<16x1xf32>
    %4 = arith.divf %2, %3 : vector<16x1xf32>
    %5 = vector.broadcast %4 : vector<16x1xf32> to vector<16x128xf32>
    %6 = arith.subf %0, %5 : vector<16x128xf32>
    %7 = arith.mulf %6, %6 : vector<16x128xf32>
    %cst_2 = arith.constant dense<0.000000e+00> : vector<16xf32>
    %8 = vector.multi_reduction <add>, %7, %cst_2 [1] : vector<16x128xf32> to vector<16xf32>
    %9 = vector.shape_cast %8 : vector<16xf32> to vector<16x1xf32>
    %cst_3 = arith.constant 1.280000e+02 : f32
    %10 = vector.broadcast %cst_3 : f32 to vector<16x1xf32>
    %11 = arith.divf %9, %10 : vector<16x1xf32>
    %cst_4 = arith.constant 9.99999996E-13 : f32
    %12 = vector.broadcast %cst_4 : f32 to vector<16x1xf32>
    %13 = arith.addf %11, %12 : vector<16x1xf32>
    %14 = math.rsqrt %13 : vector<16x1xf32>
    %15 = vector.broadcast %4 : vector<16x1xf32> to vector<16x128xf32>
    %16 = arith.subf %0, %15 : vector<16x128xf32>
    %17 = vector.broadcast %14 : vector<16x1xf32> to vector<16x128xf32>
    %18 = arith.mulf %16, %17 : vector<16x128xf32>
    %c0_5 = arith.constant 0 : index
    %c0_6 = arith.constant 0 : index
    %19 = vector.load %arg2[%c0_5, %c0_6] : memref<1x128xf32, #tpu.memory_space<vmem>>, vector<1x128xf32>
    %20 = vector.broadcast %19 : vector<1x128xf32> to vector<16x128xf32>
    %21 = arith.mulf %18, %20 : vector<16x128xf32>
    %c0_7 = arith.constant 0 : index
    %c0_8 = arith.constant 0 : index
    %22 = vector.load %arg3[%c0_7, %c0_8] : memref<1x128xf32, #tpu.memory_space<vmem>>, vector<1x128xf32>
    %23 = vector.broadcast %22 : vector<1x128xf32> to vector<16x128xf32>
    %24 = arith.addf %21, %23 : vector<16x128xf32>
    %25 = arith.truncf %24 : vector<16x128xf32> to vector<16x128xbf16>
    %c0_9 = arith.constant 0 : index
    %c0_10 = arith.constant 0 : index
    %26 = vector.load %arg4[%c0_9, %c0_10] : memref<16x128xbf16, #tpu.memory_space<vmem>>, vector<16x128xbf16>
    tpu.vector_store %arg4[%c0_9, %c0_10], %25 {strides = array<i32>} : memref<16x128xbf16, #tpu.memory_space<vmem>>, vector<16x128xbf16>,
    return
  }
  func.func @transform_0(%arg0: i32) -> (i32, i32) {
    %c0_i32 = arith.constant 0 : i32
    %c0_i32_0 = arith.constant 0 : i32
    return %arg0, %c0_i32 : i32, i32
  }
  func.func @transform_1(%arg0: i32) -> (i32, i32) {
    %c0_i32 = arith.constant 0 : i32
    %c0_i32_0 = arith.constant 0 : i32
    %c0_i32_1 = arith.constant 0 : i32
    return %c0_i32, %c0_i32_0 : i32, i32
  }
  func.func @transform_2(%arg0: i32) -> (i32, i32) {
    %c0_i32 = arith.constant 0 : i32
    %c0_i32_0 = arith.constant 0 : i32
    %c0_i32_1 = arith.constant 0 : i32
    return %c0_i32, %c0_i32_0 : i32, i32
  }
  func.func @transform_3(%arg0: i32) -> (i32, i32) {
    %c0_i32 = arith.constant 0 : i32
    %c0_i32_0 = arith.constant 0 : i32
    return %arg0, %c0_i32 : i32, i32
  }
}

module attributes {stable_mosaic.version = 11 : i64} {
  func.func @_attention_kernel(%arg0: i32, %arg1: memref<1x8x128xbf16, #tpu.memory_space<vmem>>, %arg2: memref<1x8x128xbf16, #tpu.memory_space<vmem>>, %arg3: memref<1x8x128xbf16, #tpu.memory_space<vmem>>, %arg4: memref<1x1x8xf32, #tpu.memory_space<vmem>>, %arg5: memref<1x8x128xbf16, #tpu.memory_space<vmem>>) attributes {dimension_semantics = [#tpu.dimension_semantics<parallel>], iteration_bounds = array<i64: 2>, scalar_prefetch = 0 : i64, scratch_operands = 0 : i64, tpu.core_type = #tpu.core_type<tc>, window_params = [{transform_indices = @transform_0, window_bounds = array<i64: 1, 8, 128>}, {transform_indices = @transform_1, window_bounds = array<i64: 1, 8, 128>}, {transform_indices = @transform_2, window_bounds = array<i64: 1, 8, 128>}, {transform_indices = @transform_3, window_bounds = array<i64: 1, 1, 8>}, {transform_indices = @transform_4, window_bounds = array<i64: 1, 8, 128>}]} {
    %c0 = arith.constant 0 : index
    %c0_0 = arith.constant 0 : index
    %c0_1 = arith.constant 0 : index
    %0 = vector.load %arg1[%c0, %c0_0, %c0_1] : memref<1x8x128xbf16, #tpu.memory_space<vmem>>, vector<1x8x128xbf16>
    %1 = vector.shape_cast %0 : vector<1x8x128xbf16> to vector<8x128xbf16>
    %c0_2 = arith.constant 0 : index
    %c0_3 = arith.constant 0 : index
    %c0_4 = arith.constant 0 : index
    %2 = vector.load %arg2[%c0_2, %c0_3, %c0_4] : memref<1x8x128xbf16, #tpu.memory_space<vmem>>, vector<1x8x128xbf16>
    %3 = vector.shape_cast %2 : vector<1x8x128xbf16> to vector<8x128xbf16>
    %c0_5 = arith.constant 0 : index
    %c0_6 = arith.constant 0 : index
    %c0_7 = arith.constant 0 : index
    %4 = vector.load %arg3[%c0_5, %c0_6, %c0_7] : memref<1x8x128xbf16, #tpu.memory_space<vmem>>, vector<1x8x128xbf16>
    %5 = vector.shape_cast %4 : vector<1x8x128xbf16> to vector<8x128xbf16>
    %c0_8 = arith.constant 0 : index
    %c0_9 = arith.constant 0 : index
    %c0_10 = arith.constant 0 : index
    %6 = vector.load %arg4[%c0_8, %c0_9, %c0_10] : memref<1x1x8xf32, #tpu.memory_space<vmem>>, vector<1x1x8xf32>
    %7 = vector.shape_cast %6 : vector<1x1x8xf32> to vector<1x8xf32>
    %8 = vector.extract_strided_slice %1 {offsets = [0, 0], sizes = [8, 32], strides = [1, 1]} : vector<8x128xbf16> to vector<8x32xbf16>
    %9 = vector.extract_strided_slice %3 {offsets = [0, 0], sizes = [8, 32], strides = [1, 1]} : vector<8x128xbf16> to vector<8x32xbf16>
    %10 = vector.extract_strided_slice %5 {offsets = [0, 0], sizes = [8, 32], strides = [1, 1]} : vector<8x128xbf16> to vector<8x32xbf16>
    %cst = arith.constant dense<0.000000e+00> : vector<8x8xf32>
    %11 = tpu.matmul %8, %9, %cst {dimension_numbers = #tpu.dot_dimension_numbers<[1], [1], [0], [0], [0, 0, 1, 0], [], []>} : vector<8x32xbf16>, vector<8x32xbf16>, vector<8x8xf32> -> vector<8x8xf32>
    %cst_11 = arith.constant 0.176776692 : f32
    %12 = vector.broadcast %cst_11 : f32 to vector<8x8xf32>
    %13 = arith.mulf %11, %12 : vector<8x8xf32>
    %14 = vector.broadcast %7 : vector<1x8xf32> to vector<8x8xf32>
    %15 = arith.addf %13, %14 : vector<8x8xf32>
    %cst_12 = arith.constant dense<0xFF800000> : vector<8xf32>
    %16 = vector.multi_reduction <maximumf>, %15, %cst_12 [1] : vector<8x8xf32> to vector<8xf32>
    %17 = vector.shape_cast %16 : vector<8xf32> to vector<8x1xf32>
    %18 = vector.broadcast %17 : vector<8x1xf32> to vector<8x8xf32>
    %19 = arith.subf %15, %18 : vector<8x8xf32>
    %20 = math.exp %19 : vector<8x8xf32>
    %cst_13 = arith.constant dense<0.000000e+00> : vector<8xf32>
    %21 = vector.multi_reduction <add>, %20, %cst_13 [1] : vector<8x8xf32> to vector<8xf32>
    %22 = vector.shape_cast %21 : vector<8xf32> to vector<8x1xf32>
    %23 = tpu.reciprocal %22 {approx = true} : vector<8x1xf32> -> vector<8x1xf32>
    %24 = vector.broadcast %23 : vector<8x1xf32> to vector<8x8xf32>
    %25 = arith.mulf %20, %24 : vector<8x8xf32>
    %26 = arith.truncf %25 : vector<8x8xf32> to vector<8x8xbf16>
    %cst_14 = arith.constant dense<0.000000e+00> : vector<8x32xf32>
    %27 = tpu.matmul %26, %10, %cst_14 {dimension_numbers = #tpu.dot_dimension_numbers<[1], [0], [0], [1], [0, 0, 1, 1], [], []>} : vector<8x8xbf16>, vector<8x32xbf16>, vector<8x32xf32> -> vector<8x32xf32>
    %28 = vector.extract_strided_slice %1 {offsets = [0, 32], sizes = [8, 32], strides = [1, 1]} : vector<8x128xbf16> to vector<8x32xbf16>
    %29 = vector.extract_strided_slice %3 {offsets = [0, 32], sizes = [8, 32], strides = [1, 1]} : vector<8x128xbf16> to vector<8x32xbf16>
    %30 = vector.extract_strided_slice %5 {offsets = [0, 32], sizes = [8, 32], strides = [1, 1]} : vector<8x128xbf16> to vector<8x32xbf16>
    %cst_15 = arith.constant dense<0.000000e+00> : vector<8x8xf32>
    %31 = tpu.matmul %28, %29, %cst_15 {dimension_numbers = #tpu.dot_dimension_numbers<[1], [1], [0], [0], [0, 0, 1, 0], [], []>} : vector<8x32xbf16>, vector<8x32xbf16>, vector<8x8xf32> -> vector<8x8xf32>
    %cst_16 = arith.constant 0.176776692 : f32
    %32 = vector.broadcast %cst_16 : f32 to vector<8x8xf32>
    %33 = arith.mulf %31, %32 : vector<8x8xf32>
    %34 = vector.broadcast %7 : vector<1x8xf32> to vector<8x8xf32>
    %35 = arith.addf %33, %34 : vector<8x8xf32>
    %cst_17 = arith.constant dense<0xFF800000> : vector<8xf32>
    %36 = vector.multi_reduction <maximumf>, %35, %cst_17 [1] : vector<8x8xf32> to vector<8xf32>
    %37 = vector.shape_cast %36 : vector<8xf32> to vector<8x1xf32>
    %38 = vector.broadcast %37 : vector<8x1xf32> to vector<8x8xf32>
    %39 = arith.subf %35, %38 : vector<8x8xf32>
    %40 = math.exp %39 : vector<8x8xf32>
    %cst_18 = arith.constant dense<0.000000e+00> : vector<8xf32>
    %41 = vector.multi_reduction <add>, %40, %cst_18 [1] : vector<8x8xf32> to vector<8xf32>
    %42 = vector.shape_cast %41 : vector<8xf32> to vector<8x1xf32>
    %43 = tpu.reciprocal %42 {approx = true} : vector<8x1xf32> -> vector<8x1xf32>
    %44 = vector.broadcast %43 : vector<8x1xf32> to vector<8x8xf32>
    %45 = arith.mulf %40, %44 : vector<8x8xf32>
    %46 = arith.truncf %45 : vector<8x8xf32> to vector<8x8xbf16>
    %cst_19 = arith.constant dense<0.000000e+00> : vector<8x32xf32>
    %47 = tpu.matmul %46, %30, %cst_19 {dimension_numbers = #tpu.dot_dimension_numbers<[1], [0], [0], [1], [0, 0, 1, 1], [], []>} : vector<8x8xbf16>, vector<8x32xbf16>, vector<8x32xf32> -> vector<8x32xf32>
    %48 = vector.extract_strided_slice %1 {offsets = [0, 64], sizes = [8, 32], strides = [1, 1]} : vector<8x128xbf16> to vector<8x32xbf16>
    %49 = vector.extract_strided_slice %3 {offsets = [0, 64], sizes = [8, 32], strides = [1, 1]} : vector<8x128xbf16> to vector<8x32xbf16>
    %50 = vector.extract_strided_slice %5 {offsets = [0, 64], sizes = [8, 32], strides = [1, 1]} : vector<8x128xbf16> to vector<8x32xbf16>
    %cst_20 = arith.constant dense<0.000000e+00> : vector<8x8xf32>
    %51 = tpu.matmul %48, %49, %cst_20 {dimension_numbers = #tpu.dot_dimension_numbers<[1], [1], [0], [0], [0, 0, 1, 0], [], []>} : vector<8x32xbf16>, vector<8x32xbf16>, vector<8x8xf32> -> vector<8x8xf32>
    %cst_21 = arith.constant 0.176776692 : f32
    %52 = vector.broadcast %cst_21 : f32 to vector<8x8xf32>
    %53 = arith.mulf %51, %52 : vector<8x8xf32>
    %54 = vector.broadcast %7 : vector<1x8xf32> to vector<8x8xf32>
    %55 = arith.addf %53, %54 : vector<8x8xf32>
    %cst_22 = arith.constant dense<0xFF800000> : vector<8xf32>
    %56 = vector.multi_reduction <maximumf>, %55, %cst_22 [1] : vector<8x8xf32> to vector<8xf32>
    %57 = vector.shape_cast %56 : vector<8xf32> to vector<8x1xf32>
    %58 = vector.broadcast %57 : vector<8x1xf32> to vector<8x8xf32>
    %59 = arith.subf %55, %58 : vector<8x8xf32>
    %60 = math.exp %59 : vector<8x8xf32>
    %cst_23 = arith.constant dense<0.000000e+00> : vector<8xf32>
    %61 = vector.multi_reduction <add>, %60, %cst_23 [1] : vector<8x8xf32> to vector<8xf32>
    %62 = vector.shape_cast %61 : vector<8xf32> to vector<8x1xf32>
    %63 = tpu.reciprocal %62 {approx = true} : vector<8x1xf32> -> vector<8x1xf32>
    %64 = vector.broadcast %63 : vector<8x1xf32> to vector<8x8xf32>
    %65 = arith.mulf %60, %64 : vector<8x8xf32>
    %66 = arith.truncf %65 : vector<8x8xf32> to vector<8x8xbf16>
    %cst_24 = arith.constant dense<0.000000e+00> : vector<8x32xf32>
    %67 = tpu.matmul %66, %50, %cst_24 {dimension_numbers = #tpu.dot_dimension_numbers<[1], [0], [0], [1], [0, 0, 1, 1], [], []>} : vector<8x8xbf16>, vector<8x32xbf16>, vector<8x32xf32> -> vector<8x32xf32>
    %68 = vector.extract_strided_slice %1 {offsets = [0, 96], sizes = [8, 32], strides = [1, 1]} : vector<8x128xbf16> to vector<8x32xbf16>
    %69 = vector.extract_strided_slice %3 {offsets = [0, 96], sizes = [8, 32], strides = [1, 1]} : vector<8x128xbf16> to vector<8x32xbf16>
    %70 = vector.extract_strided_slice %5 {offsets = [0, 96], sizes = [8, 32], strides = [1, 1]} : vector<8x128xbf16> to vector<8x32xbf16>
    %cst_25 = arith.constant dense<0.000000e+00> : vector<8x8xf32>
    %71 = tpu.matmul %68, %69, %cst_25 {dimension_numbers = #tpu.dot_dimension_numbers<[1], [1], [0], [0], [0, 0, 1, 0], [], []>} : vector<8x32xbf16>, vector<8x32xbf16>, vector<8x8xf32> -> vector<8x8xf32>
    %cst_26 = arith.constant 0.176776692 : f32
    %72 = vector.broadcast %cst_26 : f32 to vector<8x8xf32>
    %73 = arith.mulf %71, %72 : vector<8x8xf32>
    %74 = vector.broadcast %7 : vector<1x8xf32> to vector<8x8xf32>
    %75 = arith.addf %73, %74 : vector<8x8xf32>
    %cst_27 = arith.constant dense<0xFF800000> : vector<8xf32>
    %76 = vector.multi_reduction <maximumf>, %75, %cst_27 [1] : vector<8x8xf32> to vector<8xf32>
    %77 = vector.shape_cast %76 : vector<8xf32> to vector<8x1xf32>
    %78 = vector.broadcast %77 : vector<8x1xf32> to vector<8x8xf32>
    %79 = arith.subf %75, %78 : vector<8x8xf32>
    %80 = math.exp %79 : vector<8x8xf32>
    %cst_28 = arith.constant dense<0.000000e+00> : vector<8xf32>
    %81 = vector.multi_reduction <add>, %80, %cst_28 [1] : vector<8x8xf32> to vector<8xf32>
    %82 = vector.shape_cast %81 : vector<8xf32> to vector<8x1xf32>
    %83 = tpu.reciprocal %82 {approx = true} : vector<8x1xf32> -> vector<8x1xf32>
    %84 = vector.broadcast %83 : vector<8x1xf32> to vector<8x8xf32>
    %85 = arith.mulf %80, %84 : vector<8x8xf32>
    %86 = arith.truncf %85 : vector<8x8xf32> to vector<8x8xbf16>
    %cst_29 = arith.constant dense<0.000000e+00> : vector<8x32xf32>
    %87 = tpu.matmul %86, %70, %cst_29 {dimension_numbers = #tpu.dot_dimension_numbers<[1], [0], [0], [1], [0, 0, 1, 1], [], []>} : vector<8x8xbf16>, vector<8x32xbf16>, vector<8x32xf32> -> vector<8x32xf32>
    %88 = tpu.concatenate %27, %47, %67, %87 in 1 : vector<8x32xf32>, vector<8x32xf32>, vector<8x32xf32>, vector<8x32xf32> -> vector<8x128xf32>
    %89 = arith.truncf %88 : vector<8x128xf32> to vector<8x128xbf16>
    %c0_30 = arith.constant 0 : index
    %c0_31 = arith.constant 0 : index
    %c0_32 = arith.constant 0 : index
    %90 = vector.load %arg5[%c0_30, %c0_31, %c0_32] : memref<1x8x128xbf16, #tpu.memory_space<vmem>>, vector<1x8x128xbf16>
    %91 = vector.shape_cast %90 : vector<1x8x128xbf16> to vector<8x128xbf16>
    %92 = vector.shape_cast %89 : vector<8x128xbf16> to vector<1x8x128xbf16>
    tpu.vector_store %arg5[%c0_30, %c0_31, %c0_32], %92 {strides = array<i32>} : memref<1x8x128xbf16, #tpu.memory_space<vmem>>, vector<1x8x128xbf16>,
    return
  }
  func.func @transform_0(%arg0: i32) -> (i32, i32, i32) {
    %c0_i32 = arith.constant 0 : i32
    %c0_i32_0 = arith.constant 0 : i32
    %c0_i32_1 = arith.constant 0 : i32
    return %arg0, %c0_i32, %c0_i32_0 : i32, i32, i32
  }
  func.func @transform_1(%arg0: i32) -> (i32, i32, i32) {
    %c0_i32 = arith.constant 0 : i32
    %c0_i32_0 = arith.constant 0 : i32
    %c0_i32_1 = arith.constant 0 : i32
    return %arg0, %c0_i32, %c0_i32_0 : i32, i32, i32
  }
  func.func @transform_2(%arg0: i32) -> (i32, i32, i32) {
    %c0_i32 = arith.constant 0 : i32
    %c0_i32_0 = arith.constant 0 : i32
    %c0_i32_1 = arith.constant 0 : i32
    return %arg0, %c0_i32, %c0_i32_0 : i32, i32, i32
  }
  func.func @transform_3(%arg0: i32) -> (i32, i32, i32) {
    %c0_i32 = arith.constant 0 : i32
    %c0_i32_0 = arith.constant 0 : i32
    %c0_i32_1 = arith.constant 0 : i32
    return %arg0, %c0_i32, %c0_i32_0 : i32, i32, i32
  }
  func.func @transform_4(%arg0: i32) -> (i32, i32, i32) {
    %c0_i32 = arith.constant 0 : i32
    %c0_i32_0 = arith.constant 0 : i32
    %c0_i32_1 = arith.constant 0 : i32
    return %arg0, %c0_i32, %c0_i32_0 : i32, i32, i32
  }
}

module attributes {stable_mosaic.version = 11 : i64} {
  func.func @_matmul_bias_kernel(%arg0: i32, %arg1: i32, %arg2: i32, %arg3: memref<16x128xbf16, #tpu.memory_space<vmem>>, %arg4: memref<128x128xbf16, #tpu.memory_space<vmem>>, %arg5: memref<1x128xf32, #tpu.memory_space<vmem>>, %arg6: memref<16x128xbf16, #tpu.memory_space<vmem>>, %arg7: memref<16x128xf32, #tpu.memory_space<vmem>>) attributes {dimension_semantics = [#tpu.dimension_semantics<parallel>, #tpu.dimension_semantics<parallel>, #tpu.dimension_semantics<arbitrary>], iteration_bounds = array<i64: 1, 1, 1>, scalar_prefetch = 0 : i64, scratch_operands = 1 : i64, tpu.core_type = #tpu.core_type<tc>, window_params = [{transform_indices = @transform_0, window_bounds = array<i64: 16, 128>}, {transform_indices = @transform_1, window_bounds = array<i64: 128, 128>}, {transform_indices = @transform_2, window_bounds = array<i64: 1, 128>}, {transform_indices = @transform_3, window_bounds = array<i64: 16, 128>}]} {
    %c0_i32 = arith.constant 0 : i32
    %0 = arith.cmpi eq, %arg2, %c0_i32 : i32
    %1 = arith.extui %0 : i1 to i32
    %c0_i32_0 = arith.constant 0 : i32
    %2 = arith.cmpi ne, %1, %c0_i32_0 : i32
    scf.if %2 {
      %cst_10 = arith.constant 0.000000e+00 : f32
      %12 = vector.broadcast %cst_10 : f32 to vector<16x128xf32>
      %c0_11 = arith.constant 0 : index
      %c0_12 = arith.constant 0 : index
      %13 = vector.load %arg7[%c0_11, %c0_12] : memref<16x128xf32, #tpu.memory_space<vmem>>, vector<16x128xf32>
      tpu.vector_store %arg7[%c0_11, %c0_12], %12 {strides = array<i32>} : memref<16x128xf32, #tpu.memory_space<vmem>>, vector<16x128xf32>,
    } else {
    }
    %c0 = arith.constant 0 : index
    %c0_1 = arith.constant 0 : index
    %3 = vector.load %arg7[%c0, %c0_1] : memref<16x128xf32, #tpu.memory_space<vmem>>, vector<16x128xf32>
    %c0_2 = arith.constant 0 : index
    %c0_3 = arith.constant 0 : index
    %4 = vector.load %arg3[%c0_2, %c0_3] : memref<16x128xbf16, #tpu.memory_space<vmem>>, vector<16x128xbf16>
    %c0_4 = arith.constant 0 : index
    %c0_5 = arith.constant 0 : index
    %5 = vector.load %arg4[%c0_4, %c0_5] : memref<128x128xbf16, #tpu.memory_space<vmem>>, vector<128x128xbf16>
    %cst = arith.constant dense<0.000000e+00> : vector<16x128xf32>
    %6 = tpu.matmul %4, %5, %cst {dimension_numbers = #tpu.dot_dimension_numbers<[1], [0], [0], [1], [0, 0, 1, 1], [], []>} : vector<16x128xbf16>, vector<128x128xbf16>, vector<16x128xf32> -> vector<16x128xf32>
    %7 = arith.addf %3, %6 : vector<16x128xf32>
    %c0_6 = arith.constant 0 : index
    %c0_7 = arith.constant 0 : index
    %8 = vector.load %arg7[%c0_6, %c0_7] : memref<16x128xf32, #tpu.memory_space<vmem>>, vector<16x128xf32>
    tpu.vector_store %arg7[%c0_6, %c0_7], %7 {strides = array<i32>} : memref<16x128xf32, #tpu.memory_space<vmem>>, vector<16x128xf32>,
    %c0_i32_8 = arith.constant 0 : i32
    %9 = arith.cmpi eq, %arg2, %c0_i32_8 : i32
    %10 = arith.extui %9 : i1 to i32
    %c0_i32_9 = arith.constant 0 : i32
    %11 = arith.cmpi ne, %10, %c0_i32_9 : i32
    scf.if %11 {
      %c0_10 = arith.constant 0 : index
      %c0_11 = arith.constant 0 : index
      %12 = vector.load %arg7[%c0_10, %c0_11] : memref<16x128xf32, #tpu.memory_space<vmem>>, vector<16x128xf32>
      %c0_12 = arith.constant 0 : index
      %c0_13 = arith.constant 0 : index
      %13 = vector.load %arg5[%c0_12, %c0_13] : memref<1x128xf32, #tpu.memory_space<vmem>>, vector<1x128xf32>
      %14 = vector.broadcast %13 : vector<1x128xf32> to vector<16x128xf32>
      %15 = arith.addf %12, %14 : vector<16x128xf32>
      %16 = arith.truncf %15 : vector<16x128xf32> to vector<16x128xbf16>
      %c0_14 = arith.constant 0 : index
      %c0_15 = arith.constant 0 : index
      %17 = vector.load %arg6[%c0_14, %c0_15] : memref<16x128xbf16, #tpu.memory_space<vmem>>, vector<16x128xbf16>
      tpu.vector_store %arg6[%c0_14, %c0_15], %16 {strides = array<i32>} : memref<16x128xbf16, #tpu.memory_space<vmem>>, vector<16x128xbf16>,
    } else {
    }
    return
  }
  func.func @transform_0(%arg0: i32, %arg1: i32, %arg2: i32) -> (i32, i32) {
    %c0_i32 = arith.constant 0 : i32
    return %arg0, %arg2 : i32, i32
  }
  func.func @transform_1(%arg0: i32, %arg1: i32, %arg2: i32) -> (i32, i32) {
    %c0_i32 = arith.constant 0 : i32
    return %arg2, %arg1 : i32, i32
  }
  func.func @transform_2(%arg0: i32, %arg1: i32, %arg2: i32) -> (i32, i32) {
    %c0_i32 = arith.constant 0 : i32
    %c0_i32_0 = arith.constant 0 : i32
    return %c0_i32, %arg1 : i32, i32
  }
  func.func @transform_3(%arg0: i32, %arg1: i32, %arg2: i32) -> (i32, i32) {
    %c0_i32 = arith.constant 0 : i32
    return %arg0, %arg1 : i32, i32
  }
}

module attributes {stable_mosaic.version = 11 : i64} {
  func.func @_matmul_bias_kernel(%arg0: i32, %arg1: i32, %arg2: i32, %arg3: memref<16x128xbf16, #tpu.memory_space<vmem>>, %arg4: memref<128x256xbf16, #tpu.memory_space<vmem>>, %arg5: memref<1x256xf32, #tpu.memory_space<vmem>>, %arg6: memref<16x256xbf16, #tpu.memory_space<vmem>>, %arg7: memref<16x256xf32, #tpu.memory_space<vmem>>) attributes {dimension_semantics = [#tpu.dimension_semantics<parallel>, #tpu.dimension_semantics<parallel>, #tpu.dimension_semantics<arbitrary>], iteration_bounds = array<i64: 1, 2, 1>, scalar_prefetch = 0 : i64, scratch_operands = 1 : i64, tpu.core_type = #tpu.core_type<tc>, window_params = [{transform_indices = @transform_0, window_bounds = array<i64: 16, 128>}, {transform_indices = @transform_1, window_bounds = array<i64: 128, 256>}, {transform_indices = @transform_2, window_bounds = array<i64: 1, 256>}, {transform_indices = @transform_3, window_bounds = array<i64: 16, 256>}]} {
    %c0_i32 = arith.constant 0 : i32
    %0 = arith.cmpi eq, %arg2, %c0_i32 : i32
    %1 = arith.extui %0 : i1 to i32
    %c0_i32_0 = arith.constant 0 : i32
    %2 = arith.cmpi ne, %1, %c0_i32_0 : i32
    scf.if %2 {
      %cst_10 = arith.constant 0.000000e+00 : f32
      %12 = vector.broadcast %cst_10 : f32 to vector<16x256xf32>
      %c0_11 = arith.constant 0 : index
      %c0_12 = arith.constant 0 : index
      %13 = vector.load %arg7[%c0_11, %c0_12] : memref<16x256xf32, #tpu.memory_space<vmem>>, vector<16x256xf32>
      tpu.vector_store %arg7[%c0_11, %c0_12], %12 {strides = array<i32>} : memref<16x256xf32, #tpu.memory_space<vmem>>, vector<16x256xf32>,
    } else {
    }
    %c0 = arith.constant 0 : index
    %c0_1 = arith.constant 0 : index
    %3 = vector.load %arg7[%c0, %c0_1] : memref<16x256xf32, #tpu.memory_space<vmem>>, vector<16x256xf32>
    %c0_2 = arith.constant 0 : index
    %c0_3 = arith.constant 0 : index
    %4 = vector.load %arg3[%c0_2, %c0_3] : memref<16x128xbf16, #tpu.memory_space<vmem>>, vector<16x128xbf16>
    %c0_4 = arith.constant 0 : index
    %c0_5 = arith.constant 0 : index
    %5 = vector.load %arg4[%c0_4, %c0_5] : memref<128x256xbf16, #tpu.memory_space<vmem>>, vector<128x256xbf16>
    %cst = arith.constant dense<0.000000e+00> : vector<16x256xf32>
    %6 = tpu.matmul %4, %5, %cst {dimension_numbers = #tpu.dot_dimension_numbers<[1], [0], [0], [1], [0, 0, 1, 1], [], []>} : vector<16x128xbf16>, vector<128x256xbf16>, vector<16x256xf32> -> vector<16x256xf32>
    %7 = arith.addf %3, %6 : vector<16x256xf32>
    %c0_6 = arith.constant 0 : index
    %c0_7 = arith.constant 0 : index
    %8 = vector.load %arg7[%c0_6, %c0_7] : memref<16x256xf32, #tpu.memory_space<vmem>>, vector<16x256xf32>
    tpu.vector_store %arg7[%c0_6, %c0_7], %7 {strides = array<i32>} : memref<16x256xf32, #tpu.memory_space<vmem>>, vector<16x256xf32>,
    %c0_i32_8 = arith.constant 0 : i32
    %9 = arith.cmpi eq, %arg2, %c0_i32_8 : i32
    %10 = arith.extui %9 : i1 to i32
    %c0_i32_9 = arith.constant 0 : i32
    %11 = arith.cmpi ne, %10, %c0_i32_9 : i32
    scf.if %11 {
      %c0_10 = arith.constant 0 : index
      %c0_11 = arith.constant 0 : index
      %12 = vector.load %arg7[%c0_10, %c0_11] : memref<16x256xf32, #tpu.memory_space<vmem>>, vector<16x256xf32>
      %c0_12 = arith.constant 0 : index
      %c0_13 = arith.constant 0 : index
      %13 = vector.load %arg5[%c0_12, %c0_13] : memref<1x256xf32, #tpu.memory_space<vmem>>, vector<1x256xf32>
      %14 = vector.broadcast %13 : vector<1x256xf32> to vector<16x256xf32>
      %15 = arith.addf %12, %14 : vector<16x256xf32>
      %cst_14 = arith.constant 5.000000e-01 : f32
      %16 = vector.broadcast %cst_14 : f32 to vector<16x256xf32>
      %17 = arith.mulf %16, %15 : vector<16x256xf32>
      %cst_15 = arith.constant 2.000000e+00 : f32
      %18 = math.sqrt %cst_15 : f32
      %cst_16 = arith.constant 1.000000e+00 : f32
      %19 = arith.divf %cst_16, %18 : f32
      %20 = vector.broadcast %19 : f32 to vector<16x256xf32>
      %21 = arith.mulf %15, %20 : vector<16x256xf32>
      %22 = math.erf %21 : vector<16x256xf32>
      %cst_17 = arith.constant 1.000000e+00 : f32
      %23 = vector.broadcast %cst_17 : f32 to vector<16x256xf32>
      %24 = arith.addf %23, %22 : vector<16x256xf32>
      %25 = arith.mulf %17, %24 : vector<16x256xf32>
      %26 = arith.truncf %25 : vector<16x256xf32> to vector<16x256xbf16>
      %c0_18 = arith.constant 0 : index
      %c0_19 = arith.constant 0 : index
      %27 = vector.load %arg6[%c0_18, %c0_19] : memref<16x256xbf16, #tpu.memory_space<vmem>>, vector<16x256xbf16>
      tpu.vector_store %arg6[%c0_18, %c0_19], %26 {strides = array<i32>} : memref<16x256xbf16, #tpu.memory_space<vmem>>, vector<16x256xbf16>,
    } else {
    }
    return
  }
  func.func @transform_0(%arg0: i32, %arg1: i32, %arg2: i32) -> (i32, i32) {
    %c0_i32 = arith.constant 0 : i32
    return %arg0, %arg2 : i32, i32
  }
  func.func @transform_1(%arg0: i32, %arg1: i32, %arg2: i32) -> (i32, i32) {
    %c0_i32 = arith.constant 0 : i32
    return %arg2, %arg1 : i32, i32
  }
  func.func @transform_2(%arg0: i32, %arg1: i32, %arg2: i32) -> (i32, i32) {
    %c0_i32 = arith.constant 0 : i32
    %c0_i32_0 = arith.constant 0 : i32
    return %c0_i32, %arg1 : i32, i32
  }
  func.func @transform_3(%arg0: i32, %arg1: i32, %arg2: i32) -> (i32, i32) {
    %c0_i32 = arith.constant 0 : i32
    return %arg0, %arg1 : i32, i32
  }
}

module attributes {stable_mosaic.version = 11 : i64} {
  func.func @_add_layernorm_kernel(%arg0: i32, %arg1: memref<16x128xbf16, #tpu.memory_space<vmem>>, %arg2: memref<16x128xbf16, #tpu.memory_space<vmem>>, %arg3: memref<1x128xf32, #tpu.memory_space<vmem>>, %arg4: memref<1x128xf32, #tpu.memory_space<vmem>>, %arg5: memref<16x128xbf16, #tpu.memory_space<vmem>>) attributes {dimension_semantics = [#tpu.dimension_semantics<parallel>], iteration_bounds = array<i64: 1>, scalar_prefetch = 0 : i64, scratch_operands = 0 : i64, tpu.core_type = #tpu.core_type<tc>, window_params = [{transform_indices = @transform_0, window_bounds = array<i64: 16, 128>}, {transform_indices = @transform_1, window_bounds = array<i64: 16, 128>}, {pipeline_mode = #tpu.pipeline_mode<synchronous>, transform_indices = @transform_2, window_bounds = array<i64: 1, 128>}, {pipeline_mode = #tpu.pipeline_mode<synchronous>, transform_indices = @transform_3, window_bounds = array<i64: 1, 128>}, {transform_indices = @transform_4, window_bounds = array<i64: 16, 128>}]} {
    %c0 = arith.constant 0 : index
    %c0_0 = arith.constant 0 : index
    %0 = vector.load %arg1[%c0, %c0_0] : memref<16x128xbf16, #tpu.memory_space<vmem>>, vector<16x128xbf16>
    %1 = arith.extf %0 : vector<16x128xbf16> to vector<16x128xf32>
    %c0_1 = arith.constant 0 : index
    %c0_2 = arith.constant 0 : index
    %2 = vector.load %arg2[%c0_1, %c0_2] : memref<16x128xbf16, #tpu.memory_space<vmem>>, vector<16x128xbf16>
    %3 = arith.extf %2 : vector<16x128xbf16> to vector<16x128xf32>
    %4 = arith.addf %1, %3 : vector<16x128xf32>
    %cst = arith.constant dense<0.000000e+00> : vector<16xf32>
    %5 = vector.multi_reduction <add>, %4, %cst [1] : vector<16x128xf32> to vector<16xf32>
    %6 = vector.shape_cast %5 : vector<16xf32> to vector<16x1xf32>
    %cst_3 = arith.constant 1.280000e+02 : f32
    %7 = vector.broadcast %cst_3 : f32 to vector<16x1xf32>
    %8 = arith.divf %6, %7 : vector<16x1xf32>
    %9 = vector.broadcast %8 : vector<16x1xf32> to vector<16x128xf32>
    %10 = arith.subf %4, %9 : vector<16x128xf32>
    %11 = arith.mulf %10, %10 : vector<16x128xf32>
    %cst_4 = arith.constant dense<0.000000e+00> : vector<16xf32>
    %12 = vector.multi_reduction <add>, %11, %cst_4 [1] : vector<16x128xf32> to vector<16xf32>
    %13 = vector.shape_cast %12 : vector<16xf32> to vector<16x1xf32>
    %cst_5 = arith.constant 1.280000e+02 : f32
    %14 = vector.broadcast %cst_5 : f32 to vector<16x1xf32>
    %15 = arith.divf %13, %14 : vector<16x1xf32>
    %cst_6 = arith.constant 9.99999996E-13 : f32
    %16 = vector.broadcast %cst_6 : f32 to vector<16x1xf32>
    %17 = arith.addf %15, %16 : vector<16x1xf32>
    %18 = math.rsqrt %17 : vector<16x1xf32>
    %19 = vector.broadcast %8 : vector<16x1xf32> to vector<16x128xf32>
    %20 = arith.subf %4, %19 : vector<16x128xf32>
    %21 = vector.broadcast %18 : vector<16x1xf32> to vector<16x128xf32>
    %22 = arith.mulf %20, %21 : vector<16x128xf32>
    %c0_7 = arith.constant 0 : index
    %c0_8 = arith.constant 0 : index
    %23 = vector.load %arg3[%c0_7, %c0_8] : memref<1x128xf32, #tpu.memory_space<vmem>>, vector<1x128xf32>
    %24 = vector.broadcast %23 : vector<1x128xf32> to vector<16x128xf32>
    %25 = arith.mulf %22, %24 : vector<16x128xf32>
    %c0_9 = arith.constant 0 : index
    %c0_10 = arith.constant 0 : index
    %26 = vector.load %arg4[%c0_9, %c0_10] : memref<1x128xf32, #tpu.memory_space<vmem>>, vector<1x128xf32>
    %27 = vector.broadcast %26 : vector<1x128xf32> to vector<16x128xf32>
    %28 = arith.addf %25, %27 : vector<16x128xf32>
    %29 = arith.truncf %28 : vector<16x128xf32> to vector<16x128xbf16>
    %c0_11 = arith.constant 0 : index
    %c0_12 = arith.constant 0 : index
    %30 = vector.load %arg5[%c0_11, %c0_12] : memref<16x128xbf16, #tpu.memory_space<vmem>>, vector<16x128xbf16>
    tpu.vector_store %arg5[%c0_11, %c0_12], %29 {strides = array<i32>} : memref<16x128xbf16, #tpu.memory_space<vmem>>, vector<16x128xbf16>,
    return
  }
  func.func @transform_0(%arg0: i32) -> (i32, i32) {
    %c0_i32 = arith.constant 0 : i32
    %c0_i32_0 = arith.constant 0 : i32
    return %arg0, %c0_i32 : i32, i32
  }
  func.func @transform_1(%arg0: i32) -> (i32, i32) {
    %c0_i32 = arith.constant 0 : i32
    %c0_i32_0 = arith.constant 0 : i32
    return %arg0, %c0_i32 : i32, i32
  }
  func.func @transform_2(%arg0: i32) -> (i32, i32) {
    %c0_i32 = arith.constant 0 : i32
    %c0_i32_0 = arith.constant 0 : i32
    %c0_i32_1 = arith.constant 0 : i32
    return %c0_i32, %c0_i32_0 : i32, i32
  }
  func.func @transform_3(%arg0: i32) -> (i32, i32) {
    %c0_i32 = arith.constant 0 : i32
    %c0_i32_0 = arith.constant 0 : i32
    %c0_i32_1 = arith.constant 0 : i32
    return %c0_i32, %c0_i32_0 : i32, i32
  }
  func.func @transform_4(%arg0: i32) -> (i32, i32) {
    %c0_i32 = arith.constant 0 : i32
    %c0_i32_0 = arith.constant 0 : i32
    return %arg0, %c0_i32 : i32, i32
  }
}

module attributes {stable_mosaic.version = 11 : i64} {
  func.func @_matmul_bias_kernel(%arg0: i32, %arg1: i32, %arg2: i32, %arg3: memref<16x512xbf16, #tpu.memory_space<vmem>>, %arg4: memref<512x128xbf16, #tpu.memory_space<vmem>>, %arg5: memref<1x128xf32, #tpu.memory_space<vmem>>, %arg6: memref<16x128xbf16, #tpu.memory_space<vmem>>, %arg7: memref<16x128xf32, #tpu.memory_space<vmem>>) attributes {dimension_semantics = [#tpu.dimension_semantics<parallel>, #tpu.dimension_semantics<parallel>, #tpu.dimension_semantics<arbitrary>], iteration_bounds = array<i64: 1, 1, 1>, scalar_prefetch = 0 : i64, scratch_operands = 1 : i64, tpu.core_type = #tpu.core_type<tc>, window_params = [{transform_indices = @transform_0, window_bounds = array<i64: 16, 512>}, {transform_indices = @transform_1, window_bounds = array<i64: 512, 128>}, {transform_indices = @transform_2, window_bounds = array<i64: 1, 128>}, {transform_indices = @transform_3, window_bounds = array<i64: 16, 128>}]} {
    %c0_i32 = arith.constant 0 : i32
    %0 = arith.cmpi eq, %arg2, %c0_i32 : i32
    %1 = arith.extui %0 : i1 to i32
    %c0_i32_0 = arith.constant 0 : i32
    %2 = arith.cmpi ne, %1, %c0_i32_0 : i32
    scf.if %2 {
      %cst_10 = arith.constant 0.000000e+00 : f32
      %12 = vector.broadcast %cst_10 : f32 to vector<16x128xf32>
      %c0_11 = arith.constant 0 : index
      %c0_12 = arith.constant 0 : index
      %13 = vector.load %arg7[%c0_11, %c0_12] : memref<16x128xf32, #tpu.memory_space<vmem>>, vector<16x128xf32>
      tpu.vector_store %arg7[%c0_11, %c0_12], %12 {strides = array<i32>} : memref<16x128xf32, #tpu.memory_space<vmem>>, vector<16x128xf32>,
    } else {
    }
    %c0 = arith.constant 0 : index
    %c0_1 = arith.constant 0 : index
    %3 = vector.load %arg7[%c0, %c0_1] : memref<16x128xf32, #tpu.memory_space<vmem>>, vector<16x128xf32>
    %c0_2 = arith.constant 0 : index
    %c0_3 = arith.constant 0 : index
    %4 = vector.load %arg3[%c0_2, %c0_3] : memref<16x512xbf16, #tpu.memory_space<vmem>>, vector<16x512xbf16>
    %c0_4 = arith.constant 0 : index
    %c0_5 = arith.constant 0 : index
    %5 = vector.load %arg4[%c0_4, %c0_5] : memref<512x128xbf16, #tpu.memory_space<vmem>>, vector<512x128xbf16>
    %cst = arith.constant dense<0.000000e+00> : vector<16x128xf32>
    %6 = tpu.matmul %4, %5, %cst {dimension_numbers = #tpu.dot_dimension_numbers<[1], [0], [0], [1], [0, 0, 1, 1], [], []>} : vector<16x512xbf16>, vector<512x128xbf16>, vector<16x128xf32> -> vector<16x128xf32>
    %7 = arith.addf %3, %6 : vector<16x128xf32>
    %c0_6 = arith.constant 0 : index
    %c0_7 = arith.constant 0 : index
    %8 = vector.load %arg7[%c0_6, %c0_7] : memref<16x128xf32, #tpu.memory_space<vmem>>, vector<16x128xf32>
    tpu.vector_store %arg7[%c0_6, %c0_7], %7 {strides = array<i32>} : memref<16x128xf32, #tpu.memory_space<vmem>>, vector<16x128xf32>,
    %c0_i32_8 = arith.constant 0 : i32
    %9 = arith.cmpi eq, %arg2, %c0_i32_8 : i32
    %10 = arith.extui %9 : i1 to i32
    %c0_i32_9 = arith.constant 0 : i32
    %11 = arith.cmpi ne, %10, %c0_i32_9 : i32
    scf.if %11 {
      %c0_10 = arith.constant 0 : index
      %c0_11 = arith.constant 0 : index
      %12 = vector.load %arg7[%c0_10, %c0_11] : memref<16x128xf32, #tpu.memory_space<vmem>>, vector<16x128xf32>
      %c0_12 = arith.constant 0 : index
      %c0_13 = arith.constant 0 : index
      %13 = vector.load %arg5[%c0_12, %c0_13] : memref<1x128xf32, #tpu.memory_space<vmem>>, vector<1x128xf32>
      %14 = vector.broadcast %13 : vector<1x128xf32> to vector<16x128xf32>
      %15 = arith.addf %12, %14 : vector<16x128xf32>
      %16 = arith.truncf %15 : vector<16x128xf32> to vector<16x128xbf16>
      %c0_14 = arith.constant 0 : index
      %c0_15 = arith.constant 0 : index
      %17 = vector.load %arg6[%c0_14, %c0_15] : memref<16x128xbf16, #tpu.memory_space<vmem>>, vector<16x128xbf16>
      tpu.vector_store %arg6[%c0_14, %c0_15], %16 {strides = array<i32>} : memref<16x128xbf16, #tpu.memory_space<vmem>>, vector<16x128xbf16>,
    } else {
    }
    return
  }
  func.func @transform_0(%arg0: i32, %arg1: i32, %arg2: i32) -> (i32, i32) {
    %c0_i32 = arith.constant 0 : i32
    return %arg0, %arg2 : i32, i32
  }
  func.func @transform_1(%arg0: i32, %arg1: i32, %arg2: i32) -> (i32, i32) {
    %c0_i32 = arith.constant 0 : i32
    return %arg2, %arg1 : i32, i32
  }
  func.func @transform_2(%arg0: i32, %arg1: i32, %arg2: i32) -> (i32, i32) {
    %c0_i32 = arith.constant 0 : i32
    %c0_i32_0 = arith.constant 0 : i32
    return %c0_i32, %arg1 : i32, i32
  }
  func.func @transform_3(%arg0: i32, %arg1: i32, %arg2: i32) -> (i32, i32) {
    %c0_i32 = arith.constant 0 : i32
    return %arg0, %arg1 : i32, i32
  }
}

</mosaic_0001>

<llo_original>
// kernel: bert_forward.18
$region0: #{bert_forward.18}
  #allocation0 [shape = 'u32[]', space=smem, size = 0x4, offset = 0x4, fixed_abs, tag = 'smem constant byte address 0x4 - core index']
  #allocation1 [shape = 'u32[144,128]{1,0:T(1,128)}', space=vmem, size = 0x12000, scoped, tag = 'internal scratch']
  #allocation2 [shape = 'f32[16,128]{1,0:T(8,128)}', space=vmem, size = 0x2000, scoped, tag = 'scratch operand']
  %s0 = inlined_call_operand.vmem [shape: bf16[16,128], index: 0, kind: input, shape index: {}]
  %s1 = inlined_call_operand.vmem [shape: bf16[128,128], index: 1, kind: input, shape index: {}]
  %s2 = inlined_call_operand.vmem [shape: f32[1,128], index: 2, kind: input, shape index: {}]
  %s3 = inlined_call_operand.vmem [shape: bf16[16,128], index: 3, kind: output, shape index: {}]
  %s4 = sld [smem:[#allocation0]]
  $region30: #{bert_forward.18} parent=0
    _
  %s6 = ssub.s32 1, %s4
  %s7 = scalar_select 0, %s6, %s4
  // Predicated region
  $region2: #{bert_forward.18} parent=0 // pred_check
    _
  $region3: #{bert_forward.18} parent=0 // pred_check_branch
    %9 = sbr.rel (0) target = $region5
  $region4: #{bert_forward.18} parent=0 // pred_region
    _
  $region5: #{bert_forward.18} parent=0 // pred_fallthru
    _
  // Predicated region
  $region6: #{bert_forward.18} parent=0 // pred_check
    _
  $region7: #{bert_forward.18} parent=0 // pred_check_branch
    %11 = sbr.rel (0) target = $region9
  $region8: #{bert_forward.18} parent=0 // pred_region
    _
  $region9: #{bert_forward.18} parent=0 // pred_fallthru
    _
  // Predicated region
  $region10: #{bert_forward.18} parent=0 // pred_check
    _
  $region11: #{bert_forward.18} parent=0 // pred_check_branch
    %13 = sbr.rel (0) target = $region13
  $region12: #{bert_forward.18} parent=0 // pred_region
    _
  $region13: #{bert_forward.18} parent=0 // pred_fallthru
    _
  %p15 = scmp.eq.s32.totalorder 0, 0
  // Predicated region
  $region14: #{bert_forward.18} parent=0 // pred_check
    %p16 = pneg %p15
  $region15: #{bert_forward.18} parent=0 // pred_check_branch
    %18 = sbr.rel (%p16) target = $region17
  $region16: #{bert_forward.18} parent=0 // pred_region
    %19 = vst [vmem:[#allocation2] sm:$0xff] 0.0
    %20 = vst [vmem:[#allocation2 + $0x8] sm:$0xff] 0.0
  $region17: #{bert_forward.18} parent=0 // pred_fallthru
    _
  %v21 = vld [vmem:[#allocation2] sm:$0xff]
  %v22 = vld [vmem:[#allocation2 + $0x8] sm:$0xff]
  %v23 = vld [vmem:[%s0] sm:$0xf]
  %v24 = vld [vmem:[%s0 + $0x4] sm:$0xf]
  %v25 = vld [vmem:[%s1] sm:$0xf]
  %v26 = vld [vmem:[%s1 + $0x4] sm:$0xf]
  %v27 = vld [vmem:[%s1 + $0x8] sm:$0xf]
  %v28 = vld [vmem:[%s1 + $0xc] sm:$0xf]
  %v29 = vld [vmem:[%s1 + $0x10] sm:$0xf]
  %v30 = vld [vmem:[%s1 + $0x14] sm:$0xf]
  %v31 = vld [vmem:[%s1 + $0x18] sm:$0xf]
  %v32 = vld [vmem:[%s1 + $0x1c] sm:$0xf]
  %v33 = vld [vmem:[%s1 + $0x20] sm:$0xf]
  %v34 = vld [vmem:[%s1 + $0x24] sm:$0xf]
  %v35 = vld [vmem:[%s1 + $0x28] sm:$0xf]
  %v36 = vld [vmem:[%s1 + $0x2c] sm:$0xf]
  %v37 = vld [vmem:[%s1 + $0x30] sm:$0xf]
  %v38 = vld [vmem:[%s1 + $0x34] sm:$0xf]
  %v39 = vld [vmem:[%s1 + $0x38] sm:$0xf]
  %v40 = vld [vmem:[%s1 + $0x3c] sm:$0xf]
  %v43 = vunpack.c.l.b16 %v23
  %v44 = vunpack.c.l.b16 %v24
  %v45 = vpack.c.b16 %v44, %v43
  %v63 = vunpack.c.l.b16 %v25
  %v64 = vunpack.c.l.b16 %v26
  %v65 = vunpack.c.l.b16 %v27
  %v66 = vunpack.c.l.b16 %v28
  %v67 = vunpack.c.l.b16 %v29
  %v68 = vunpack.c.l.b16 %v30
  %v69 = vunpack.c.l.b16 %v31
  %v70 = vunpack.c.l.b16 %v32
  %v71 = vunpack.c.l.b16 %v33
  %v72 = vunpack.c.l.b16 %v34
  %v73 = vunpack.c.l.b16 %v35
  %v74 = vunpack.c.l.b16 %v36
  %v75 = vunpack.c.l.b16 %v37
  %v76 = vunpack.c.l.b16 %v38
  %v77 = vunpack.c.l.b16 %v39
  %v78 = vunpack.c.l.b16 %v40
  %v79 = vpack.c.b16 %v64, %v63
  %v80 = vpack.c.b16 %v66, %v65
  %v81 = vpack.c.b16 %v68, %v67
  %v82 = vpack.c.b16 %v70, %v69
  %v83 = vpack.c.b16 %v72, %v71
  %v84 = vpack.c.b16 %v74, %v73
  %v85 = vpack.c.b16 %v76, %v75
  %v86 = vpack.c.b16 %v78, %v77
  %95 = vmatprep.subr.bf16.mxu0 0
  %96 = vmatpush1.bf16.msra.mxu0 %v86
  %97 = vmatprep.subr.bf16.mxu0 0
  %98 = vmatpush1.bf16.msra.mxu0 %v85
  %99 = vmatprep.subr.bf16.mxu0 0
  %100 = vmatpush1.bf16.msra.mxu0 %v84
  %101 = vmatprep.subr.bf16.mxu0 0
  %102 = vmatpush1.bf16.msra.mxu0 %v83
  %103 = vmatprep.subr.bf16.mxu0 0
  %104 = vmatpush1.bf16.msra.mxu0 %v82
  %105 = vmatprep.subr.bf16.mxu0 0
  %106 = vmatpush1.bf16.msra.mxu0 %v81
  %107 = vmatprep.subr.bf16.mxu0 0
  %108 = vmatpush1.bf16.msra.mxu0 %v80
  %109 = vmatprep.subr.bf16.mxu0 0
  %110 = vmatpush1.bf16.msra.mxu0 %v79
  %111 = vmatprep.subr.bf16.mxu0 0
  %112 = vmatpush2.bf16.msra.mxu0 0
  %113 = vmatprep.subr.bf16.mxu0 0
  %114 = vmatpush2.bf16.msra.mxu0 0
  %115 = vmatprep.subr.bf16.mxu0 0
  %116 = vmatpush2.bf16.msra.mxu0 0
  %117 = vmatprep.subr.bf16.mxu0 0
  %118 = vmatpush2.bf16.msra.mxu0 0
  %119 = vmatprep.subr.bf16.mxu0 0
  %120 = vmatpush2.bf16.msra.mxu0 0
  %121 = vmatprep.subr.bf16.mxu0 0
  %122 = vmatpush2.bf16.msra.mxu0 0
  %123 = vmatprep.subr.bf16.mxu0 0
  %124 = vmatpush2.bf16.msra.mxu0 0
  %125 = vmatprep.subr.bf16.mxu0 0
  %126 = vmatpush2.bf16.msra.mxu0 0
  %127 = vmatprep.mubr.bf16.mxu0 0
  %128 = vmatmul.mubr.bf16.gmra.mxu0 %v45
  %v129 = vpop.f32.mrf.mxu0
  %v130 = vadd.f32 0.0, %v129
  %v131 = vpop.f32.mrf.mxu0
  %v132 = vpop.f32.mrf.mxu0
  %v133 = vadd.f32 0.0, %v132
  %v134 = vpop.f32.mrf.mxu0
  %135 = vdwg.mxu0
  %v136 = vadd.f32 %v21, %v130
  %v137 = vadd.f32 %v22, %v133
  %138 = vst [vmem:[#allocation2] sm:$0xff] %v136
  %139 = vst [vmem:[#allocation2 + $0x8] sm:$0xff] %v137
  // Predicated region
  $region18: #{bert_forward.18} parent=0 // pred_check
    %p140 = pneg %p15
  $region19: #{bert_forward.18} parent=0 // pred_check_branch
    %142 = sbr.rel (%p140) target = $region21
  $region20: #{bert_forward.18} parent=0 // pred_region
    %v143 = vld [vmem:[#allocation2] sm:$0xff]
    %v144 = vld [vmem:[#allocation2 + $0x8] sm:$0xff]
    %v145 = vld [vmem:[%s2] sm:$0x1]
    %v147 = vlaneseq
    %v148 = vshrl.u32 %v147, 7
    %v149 = vsub.s32 0, %v148
    %v150 = vrot.slane %v145, %v149
    %v152 = vadd.f32 %v143, %v150
    %v153 = vadd.f32 %v144, %v150
    %v154 = vpack.c.bf16 %v153, %v152
    %v156 = vunpack.c.l.b16 %v154
    %v157 = vunpack.c.h.b16 %v154
    %v158 = vpack.c.b16 %v156, %v156
    %v159 = vpack.c.b16 %v157, %v157
    %162 = vst [vmem:[%s3] sm:$0xf] %v158
    %163 = vst [vmem:[%s3 + $0x4] sm:$0xf] %v159
  $region21: #{bert_forward.18} parent=0 // pred_fallthru
    _
  // Predicated region
  $region22: #{bert_forward.18} parent=0 // pred_check
    _
  $region23: #{bert_forward.18} parent=0 // pred_check_branch
    %165 = sbr.rel (0) target = $region25
  $region24: #{bert_forward.18} parent=0 // pred_region
    _
  $region25: #{bert_forward.18} parent=0 // pred_fallthru
    _
  // Predicated region
  $region26: #{bert_forward.18} parent=0 // pred_check
    _
  $region27: #{bert_forward.18} parent=0 // pred_check_branch
    %167 = sbr.rel (0) target = $region29
  $region28: #{bert_forward.18} parent=0 // pred_region
    _
  $region29: #{bert_forward.18} parent=0 // pred_fallthru
    _

// kernel: bert_forward.15
$region0: #{bert_forward.15}
  #allocation0 [shape = 'u32[]', space=smem, size = 0x4, offset = 0x4, fixed_abs, tag = 'smem constant byte address 0x4 - core index']
  #allocation1 [shape = 'u32[144,128]{1,0:T(1,128)}', space=vmem, size = 0x12000, scoped, tag = 'internal scratch']
  %s0 = inlined_call_operand.vmem [shape: f32[16,128], index: 0, kind: input, shape index: {}]
  %s1 = inlined_call_operand.vmem [shape: f32[1,128], index: 1, kind: input, shape index: {}]
  %s2 = inlined_call_operand.vmem [shape: f32[1,128], index: 2, kind: input, shape index: {}]
  %s3 = inlined_call_operand.vmem [shape: bf16[16,128], index: 3, kind: output, shape index: {}]
  %s4 = sld [smem:[#allocation0]]
  $region22: #{bert_forward.15} parent=0
    _
  %s6 = ssub.s32 1, %s4
  %s7 = scalar_select 0, %s6, %s4
  // Predicated region
  $region2: #{bert_forward.15} parent=0 // pred_check
    _
  $region3: #{bert_forward.15} parent=0 // pred_check_branch
    %9 = sbr.rel (0) target = $region5
  $region4: #{bert_forward.15} parent=0 // pred_region
    _
  $region5: #{bert_forward.15} parent=0 // pred_fallthru
    _
  // Predicated region
  $region6: #{bert_forward.15} parent=0 // pred_check
    _
  $region7: #{bert_forward.15} parent=0 // pred_check_branch
    %11 = sbr.rel (0) target = $region9
  $region8: #{bert_forward.15} parent=0 // pred_region
    _
  $region9: #{bert_forward.15} parent=0 // pred_fallthru
    _
  // Predicated region
  $region10: #{bert_forward.15} parent=0 // pred_check
    _
  $region11: #{bert_forward.15} parent=0 // pred_check_branch
    %13 = sbr.rel (0) target = $region13
  $region12: #{bert_forward.15} parent=0 // pred_region
    _
  $region13: #{bert_forward.15} parent=0 // pred_fallthru
    _
  %v14 = vld [vmem:[%s0] sm:$0xff]
  %v15 = vld [vmem:[%s0 + $0x8] sm:$0xff]
  %16 = vadd.xlane.f32.xlu0 %v14
  %v17 = vpop.xlane.xlu0 %16
  %18 = vadd.xlane.f32.xlu0 %v15
  %v19 = vpop.xlane.xlu0 %18
  %v20 = vrcp.pop 128.0
  %v21 = vmul.f32 %v17, %v20
  %v22 = vmul.f32 %v19, %v20
  %v23 = vsub.f32 %v14, %v21
  %v24 = vsub.f32 %v15, %v22
  %v25 = vmul.f32 %v23, %v23
  %v26 = vmul.f32 %v24, %v24
  %27 = vadd.xlane.f32.xlu0 %v25
  %v28 = vpop.xlane.xlu0 %27
  %29 = vadd.xlane.f32.xlu0 %v26
  %v30 = vpop.xlane.xlu0 %29
  %v31 = vmul.f32 %v28, %v20
  %v32 = vmul.f32 %v30, %v20
  %v33 = vadd.f32 %v31, 1e-12
  %v34 = vadd.f32 %v32, 1e-12
  %v35 = vrsqrt.pop %v33
  %v36 = vrsqrt.pop %v34
  %v37 = vmul.f32 %v23, %v35
  %v38 = vmul.f32 %v24, %v36
  %v39 = vld [vmem:[%s1] sm:$0x1]
  %v41 = vlaneseq
  %v42 = vshrl.u32 %v41, 7
  %v43 = vsub.s32 0, %v42
  %v44 = vrot.slane %v39, %v43
  %v46 = vmul.f32 %v37, %v44
  %v47 = vmul.f32 %v38, %v44
  %v48 = vld [vmem:[%s2] sm:$0x1]
  %v50 = vlaneseq
  %v51 = vshrl.u32 %v50, 7
  %v52 = vsub.s32 0, %v51
  %v53 = vrot.slane %v48, %v52
  %v55 = vadd.f32 %v46, %v53
  %v56 = vadd.f32 %v47, %v53
  %v57 = vpack.c.bf16 %v56, %v55
  %v59 = vunpack.c.l.b16 %v57
  %v60 = vunpack.c.h.b16 %v57
  %v61 = vpack.c.b16 %v59, %v59
  %v62 = vpack.c.b16 %v60, %v60
  %65 = vst [vmem:[%s3] sm:$0xf] %v61
  %66 = vst [vmem:[%s3 + $0x4] sm:$0xf] %v62
  // Predicated region
  $region14: #{bert_forward.15} parent=0 // pred_check
    _
  $region15: #{bert_forward.15} parent=0 // pred_check_branch
    %68 = sbr.rel (0) target = $region17
  $region16: #{bert_forward.15} parent=0 // pred_region
    _
  $region17: #{bert_forward.15} parent=0 // pred_fallthru
    _
  // Predicated region
  $region18: #{bert_forward.15} parent=0 // pred_check
    _
  $region19: #{bert_forward.15} parent=0 // pred_check_branch
    %70 = sbr.rel (0) target = $region21
  $region20: #{bert_forward.15} parent=0 // pred_region
    _
  $region21: #{bert_forward.15} parent=0 // pred_fallthru
    _

// kernel: bert_forward.16
$region0: #{bert_forward.16}
  #allocation0 [shape = 'u32[]', space=smem, size = 0x4, offset = 0x4, fixed_abs, tag = 'smem constant byte address 0x4 - core index']
  #allocation1 [shape = 'u32[144,128]{1,0:T(1,128)}', space=vmem, size = 0x12000, scoped, tag = 'internal scratch']
  #allocation2 [shape = 'f32[16,128]{1,0:T(8,128)}', space=vmem, size = 0x2000, scoped, tag = 'scratch operand']
  %s0 = inlined_call_operand.vmem [shape: bf16[16,128], index: 0, kind: input, shape index: {}]
  %s1 = inlined_call_operand.vmem [shape: bf16[128,384], index: 1, kind: input, shape index: {}]
  %s2 = inlined_call_operand.vmem [shape: f32[1,384], index: 2, kind: input, shape index: {}]
  %s3 = inlined_call_operand.vmem [shape: bf16[16,384], index: 3, kind: output, shape index: {}]
  %s4 = sld [smem:[#allocation0]]
  $region131: #{bert_forward.16} parent=0
    _
  %s6 = ssub.s32 1, %s4
  %s7 = scalar_select 0, %s6, %s4
  $region1: #{bert_forward.16} parent=0
    #allocation3 [shape = 'u8[65536]{0}', space=vmem, size = 0x10000, scoped, tag = 'input window, operand 1']
    #allocation4 [shape = 'u8[8192]{0}', space=vmem, size = 0x2000, scoped, tag = 'output window, operand 0']
    loop: start=0, step=1, limit=5
    $region2: #{bert_forward.16} parent=1 // loop_pre_header
      _
    $region3: #{bert_forward.16} parent=1 // loop_header
      %s9 = sphi 0, %s13
      %p10 = scmp.ge.s32.totalorder %s9, 5
      %s16 = sphi 0, %s35
      %s17 = sphi 0, %s31
      %s18 = sphi 0, %s27
      %s19 = sphi 0, %s16
      %s20 = sphi 0, %s17
      %s21 = sphi 0, %s18
      %s22 = sphi 0, %s19
      %s23 = sphi 0, %s20
      %s24 = sphi 0, %s21
      %s40 = sphi 0, %s42
      %s43 = sphi 0, %s40
      %s44 = sphi 0, %s43
      %s60 = sphi 0, %s44
      %s68 = sphi 0, %s70
      %s71 = sphi 0, %s68
      %s72 = sphi 0, %s71
      %s88 = sphi 0, %s72
      %s94 = sphi 0, %s96
      %s97 = sphi 0, %s94
      %s98 = sphi 0, %s97
      %s114 = sphi 0, %s98
      %s122 = sphi 0, %s124
      %s125 = sphi 0, %s122
      %s126 = sphi 0, %s125
      %s142 = sphi 0, %s126
    $region4: #{bert_forward.16} parent=1 // loop_header_branch
      %12 = sbr.rel (%p10) target = $region8
    $region5: #{bert_forward.16} parent=1 // loop_body
      %s14 = ssub.s32 %s9, 1
      %s15 = ssub.s32 %s9, 2
      %s25 = sadd.s32 1, %s18
      %p26 = scmp.ge.s32.totalorder %s25, 1
      %s27 = scalar_select %p26, 0, %s25
      %s28 = sadd.s32 1, %s17
      %s29 = scalar_select %p26, %s28, %s17
      %p30 = scmp.ge.s32.totalorder %s29, 3
      %s31 = scalar_select %p30, 0, %s29
      %s32 = sadd.s32 1, %s16
      %s33 = scalar_select %p30, %s32, %s16
      %p34 = scmp.ge.s32.totalorder %s33, 1
      %s35 = scalar_select %p34, 0, %s33
      %s36 = ssub.s32 %s16, %s35
      %s37 = ssub.s32 %s18, %s27
      %s38 = sor.u32 %s36, %s37
      %p39 = scmp.eq.s32.totalorder %s38, 0
      %s41 = sadd.s32 %s40, 1
      %s42 = scalar_select %p39, %s40, %s41
      %p45 = pneg %p39
      %p46 = scmp.eq.s32.totalorder %s9, 2
      %p47 = por %p45, %p46
      %p48 = scmp.ne.s32.totalorder %s40, %s43
      %p49 = scmp.eq.s32.totalorder %s9, 0
      %p50 = por %p48, %p49
      %p51 = scmp.ne.s32.totalorder %s40, %s43
      %p52 = scmp.eq.s32.totalorder %s14, 2
      %p53 = por %p51, %p52
      %p54 = scmp.ne.s32.totalorder %s43, %s44
      %p55 = scmp.eq.s32.totalorder %s14, 0
      %p56 = por %p54, %p55
      %p57 = scmp.ne.s32.totalorder %s43, %s44
      %p58 = scmp.eq.s32.totalorder %s15, 2
      %p59 = por %p57, %p58
      %p61 = scmp.ne.s32.totalorder %s44, %s60
      %p62 = scmp.eq.s32.totalorder %s15, 0
      %p63 = por %p61, %p62
      %s64 = ssub.s32 %s18, %s27
      %s65 = ssub.s32 %s17, %s31
      %s66 = sor.u32 %s64, %s65
      %p67 = scmp.eq.s32.totalorder %s66, 0
      %s69 = sadd.s32 %s68, 1
      %s70 = scalar_select %p67, %s68, %s69
      %p73 = pneg %p67
      %p74 = scmp.eq.s32.totalorder %s9, 2
      %p75 = por %p73, %p74
      %p76 = scmp.ne.s32.totalorder %s68, %s71
      %p77 = scmp.eq.s32.totalorder %s9, 0
      %p78 = por %p76, %p77
      %p79 = scmp.ne.s32.totalorder %s68, %s71
      %p80 = scmp.eq.s32.totalorder %s14, 2
      %p81 = por %p79, %p80
      %p82 = scmp.ne.s32.totalorder %s71, %s72
      %p83 = scmp.eq.s32.totalorder %s14, 0
      %p84 = por %p82, %p83
      %p85 = scmp.ne.s32.totalorder %s71, %s72
      %p86 = scmp.eq.s32.totalorder %s15, 2
      %p87 = por %p85, %p86
      %p89 = scmp.ne.s32.totalorder %s72, %s88
      %p90 = scmp.eq.s32.totalorder %s15, 0
      %p91 = por %p89, %p90
      %s92 = ssub.s32 %s17, %s31
      %p93 = scmp.eq.s32.totalorder %s92, 0
      %s95 = sadd.s32 %s94, 1
      %s96 = scalar_select %p93, %s94, %s95
      %p99 = pneg %p93
      %p100 = scmp.eq.s32.totalorder %s9, 2
      %p101 = por %p99, %p100
      %p102 = scmp.ne.s32.totalorder %s94, %s97
      %p103 = scmp.eq.s32.totalorder %s9, 0
      %p104 = por %p102, %p103
      %p105 = scmp.ne.s32.totalorder %s94, %s97
      %p106 = scmp.eq.s32.totalorder %s14, 2
      %p107 = por %p105, %p106
      %p108 = scmp.ne.s32.totalorder %s97, %s98
      %p109 = scmp.eq.s32.totalorder %s14, 0
      %p110 = por %p108, %p109
      %p111 = scmp.ne.s32.totalorder %s97, %s98
      %p112 = scmp.eq.s32.totalorder %s15, 2
      %p113 = por %p111, %p112
      %p115 = scmp.ne.s32.totalorder %s98, %s114
      %p116 = scmp.eq.s32.totalorder %s15, 0
      %p117 = por %p115, %p116
      %s118 = ssub.s32 %s16, %s35
      %s119 = ssub.s32 %s17, %s31
      %s120 = sor.u32 %s118, %s119
      %p121 = scmp.eq.s32.totalorder %s120, 0
      %s123 = sadd.s32 %s122, 1
      %s124 = scalar_select %p121, %s122, %s123
      %p127 = pneg %p121
      %p128 = scmp.eq.s32.totalorder %s9, 2
      %p129 = por %p127, %p128
      %p130 = scmp.ne.s32.totalorder %s122, %s125
      %p131 = scmp.eq.s32.totalorder %s9, 0
      %p132 = por %p130, %p131
      %p133 = scmp.ne.s32.totalorder %s122, %s125
      %p134 = scmp.eq.s32.totalorder %s14, 2
      %p135 = por %p133, %p134
      %p136 = scmp.ne.s32.totalorder %s125, %s126
      %p137 = scmp.eq.s32.totalorder %s14, 0
      %p138 = por %p136, %p137
      %p139 = scmp.ne.s32.totalorder %s125, %s126
      %p140 = scmp.eq.s32.totalorder %s15, 2
      %p141 = por %p139, %p140
      %p143 = scmp.ne.s32.totalorder %s126, %s142
      %p144 = scmp.eq.s32.totalorder %s15, 0
      %p145 = por %p143, %p144
      %p146 = scmp.le.s32.totalorder 1, %s9
      %p147 = scmp.lt.s32.totalorder %s9, 4
      %p148 = pnand %p146, %p147
      %p149 = pneg %p148
      // Predicated region
      $region9: #{bert_forward.16} parent=5 // pred_check
        _
      $region10: #{bert_forward.16} parent=5 // pred_check_branch
        %151 = sbr.rel (%p148) target = $region12
      $region11: #{bert_forward.16} parent=5 // pred_region
        %s152 = ssub.s32 %s9, 1
        // Predicated region
        $region13: #{bert_forward.16} parent=11 // pred_check
          %p153 = pneg %p56
        $region14: #{bert_forward.16} parent=11 // pred_check_branch
          %155 = sbr.rel (%p153) target = $region16
        $region15: #{bert_forward.16} parent=11 // pred_region
          %s156 = smul.u32 2, %s19
          %p157 = scmp.lt.s32.totalorder %s156, 1
          %s158 = scalar_select %p157, %s156, 1
          %p159 = scmp.lt.s32.totalorder %s21, 0
          %s160 = scalar_select %p159, %s21, 0
          %s161 = sadd.s32 %s160, %s158
          %s162 = smul.addr %s161, 4
          %s163 = scalar_lea.vmem %s0, %s162
          %s164 = smul.u32 2, %s19
        $region16: #{bert_forward.16} parent=11 // pred_fallthru
          _
      $region12: #{bert_forward.16} parent=5 // pred_fallthru
        _
      %p165 = scmp.lt.s32.totalorder %s9, 3
      // Predicated region
      $region17: #{bert_forward.16} parent=5 // pred_check
        %p166 = pneg %p165
      $region18: #{bert_forward.16} parent=5 // pred_check_branch
        %168 = sbr.rel (%p166) target = $region20
      $region19: #{bert_forward.16} parent=5 // pred_region
        // Predicated region
        $region21: #{bert_forward.16} parent=19 // pred_check
          %p169 = pneg %p78
        $region22: #{bert_forward.16} parent=19 // pred_check_branch
          %171 = sbr.rel (%p169) target = $region24
        $region23: #{bert_forward.16} parent=19 // pred_region
          %s172 = sand.u32 %s68, 1
          %s173 = sand.u32 %s68, 1
          %s174 = smul.addr %s173, 64
          %s175 = scalar_lea.vmem [#allocation3], %s174
          %s176 = smul.u32 16, %s18
          %s177 = smul.addr %s176, 3
          %s178 = sadd.s32 %s17, %s177
          %s179 = smul.addr %s178, 4
          %s180 = scalar_lea.vmem %s1, %s179
          // Predicated region
          $region25: #{bert_forward.16} parent=23 // pred_check
            _
          $region26: #{bert_forward.16} parent=23 // pred_check_branch
            %182 = sbr.rel (0) target = $region28
          $region27: #{bert_forward.16} parent=23 // pred_region
            // Predicated region
            $region29: #{bert_forward.16} parent=27 // pred_check
              _
            $region30: #{bert_forward.16} parent=27 // pred_check_branch
              %184 = sbr.rel target = $region32
            $region31: #{bert_forward.16} parent=27 // pred_region
              // Predicated region
              $region44: #{bert_forward.16} parent=31 // pred_check
                _
              $region45: #{bert_forward.16} parent=31 // pred_check_branch
                %230 = sbr.rel (0) target = $region47
              $region46: #{bert_forward.16} parent=31 // pred_region
                loop: start=0, step=1, limit=1
                $region48: #{bert_forward.16} parent=46 // loop_pre_header
                  _
                $region49: #{bert_forward.16} parent=46 // loop_header
                  %s232 = sphi 0, %s236
                  %p233 = scmp.ge.s32.totalorder %s232, 1
                  %s237 = sphi %s180, %s180
                  %s238 = sphi %s175, %s175
                $region50: #{bert_forward.16} parent=46 // loop_header_branch
                  %235 = sbr.rel (%p233) target = $region54
                $region51: #{bert_forward.16} parent=46 // loop_body
                  _
                $region52: #{bert_forward.16} parent=46 // loop_footer
                  %s236 = sadd.s32 1, %s232
                $region53: #{bert_forward.16} parent=46 // loop_footer_branch
                  %231 = sbr.rel target = $region49
                $region54: #{bert_forward.16} parent=46 // loop_exit
                  _
                %s240 = ssub.s32 16, 1
                loop: start=0, step=1, limit=1
                $region55: #{bert_forward.16} parent=46 // loop_pre_header
                  _
                $region56: #{bert_forward.16} parent=46 // loop_header
                  %s242 = sphi 0, %s246
                  %p243 = scmp.ge.s32.totalorder %s242, 1
                  %s247 = sphi %s180, %s180
                  %s248 = sphi %s175, %s175
                $region57: #{bert_forward.16} parent=46 // loop_header_branch
                  %245 = sbr.rel (%p243) target = $region61
                $region58: #{bert_forward.16} parent=46 // loop_body
                  %v249 = vld [vmem:[%s247] sm:%s240]
                  %250 = vst [vmem:[%s248] sm:%s240] %v249
                  %v251 = vld [vmem:[%s247 + $0xc] sm:%s240]
                  %252 = vst [vmem:[%s248 + $0x4] sm:%s240] %v251
                  %v253 = vld [vmem:[%s247 + $0x18] sm:%s240]
                  %254 = vst [vmem:[%s248 + $0x8] sm:%s240] %v253
                  %v255 = vld [vmem:[%s247 + $0x24] sm:%s240]
                  %256 = vst [vmem:[%s248 + $0xc] sm:%s240] %v255
                  %v257 = vld [vmem:[%s247 + $0x30] sm:%s240]
                  %258 = vst [vmem:[%s248 + $0x10] sm:%s240] %v257
                  %v259 = vld [vmem:[%s247 + $0x3c] sm:%s240]
                  %260 = vst [vmem:[%s248 + $0x14] sm:%s240] %v259
                  %v261 = vld [vmem:[%s247 + $0x48] sm:%s240]
                  %262 = vst [vmem:[%s248 + $0x18] sm:%s240] %v261
                  %v263 = vld [vmem:[%s247 + $0x54] sm:%s240]
                  %264 = vst [vmem:[%s248 + $0x1c] sm:%s240] %v263
                  %v265 = vld [vmem:[%s247 + $0x60] sm:%s240]
                  %266 = vst [vmem:[%s248 + $0x20] sm:%s240] %v265
                  %v267 = vld [vmem:[%s247 + $0x6c] sm:%s240]
                  %268 = vst [vmem:[%s248 + $0x24] sm:%s240] %v267
                  %v269 = vld [vmem:[%s247 + $0x78] sm:%s240]
                  %270 = vst [vmem:[%s248 + $0x28] sm:%s240] %v269
                  %v271 = vld [vmem:[%s247 + $0x84] sm:%s240]
                  %272 = vst [vmem:[%s248 + $0x2c] sm:%s240] %v271
                  %v273 = vld [vmem:[%s247 + $0x90] sm:%s240]
                  %274 = vst [vmem:[%s248 + $0x30] sm:%s240] %v273
                  %v275 = vld [vmem:[%s247 + $0x9c] sm:%s240]
                  %276 = vst [vmem:[%s248 + $0x34] sm:%s240] %v275
                  %v277 = vld [vmem:[%s247 + $0xa8] sm:%s240]
                  %278 = vst [vmem:[%s248 + $0x38] sm:%s240] %v277
                  %v279 = vld [vmem:[%s247 + $0xb4] sm:%s240]
                  %280 = vst [vmem:[%s248 + $0x3c] sm:%s240] %v279
                $region59: #{bert_forward.16} parent=46 // loop_footer
                  %s246 = sadd.s32 1, %s242
                $region60: #{bert_forward.16} parent=46 // loop_footer_branch
                  %241 = sbr.rel target = $region56
                $region61: #{bert_forward.16} parent=46 // loop_exit
                  _
              $region47: #{bert_forward.16} parent=31 // pred_fallthru
                _
            $region32: #{bert_forward.16} parent=27 // pred_fallthru
              _
            // Predicated region
            $region33: #{bert_forward.16} parent=27 // pred_check
              _
            $region34: #{bert_forward.16} parent=27 // pred_check_branch
              %186 = sbr.rel (0) target = $region36
            $region35: #{bert_forward.16} parent=27 // pred_region
              %s188 = ssub.s32 16, 1
              loop: start=0, step=1, limit=1
              $region37: #{bert_forward.16} parent=35 // loop_pre_header
                _
              $region38: #{bert_forward.16} parent=35 // loop_header
                %s190 = sphi 0, %s194
                %p191 = scmp.ge.s32.totalorder %s190, 1
                %s195 = sphi %s180, %s180
                %s196 = sphi %s175, %s175
              $region39: #{bert_forward.16} parent=35 // loop_header_branch
                %193 = sbr.rel (%p191) target = $region43
              $region40: #{bert_forward.16} parent=35 // loop_body
                %v197 = vld [vmem:[%s195] sm:%s188]
                %198 = vst [vmem:[%s196] sm:%s188] %v197
                %v199 = vld [vmem:[%s195 + $0xc] sm:%s188]
                %200 = vst [vmem:[%s196 + $0x4] sm:%s188] %v199
                %v201 = vld [vmem:[%s195 + $0x18] sm:%s188]
                %202 = vst [vmem:[%s196 + $0x8] sm:%s188] %v201
                %v203 = vld [vmem:[%s195 + $0x24] sm:%s188]
                %204 = vst [vmem:[%s196 + $0xc] sm:%s188] %v203
                %v205 = vld [vmem:[%s195 + $0x30] sm:%s188]
                %206 = vst [vmem:[%s196 + $0x10] sm:%s188] %v205
                %v207 = vld [vmem:[%s195 + $0x3c] sm:%s188]
                %208 = vst [vmem:[%s196 + $0x14] sm:%s188] %v207
                %v209 = vld [vmem:[%s195 + $0x48] sm:%s188]
                %210 = vst [vmem:[%s196 + $0x18] sm:%s188] %v209
                %v211 = vld [vmem:[%s195 + $0x54] sm:%s188]
                %212 = vst [vmem:[%s196 + $0x1c] sm:%s188] %v211
                %v213 = vld [vmem:[%s195 + $0x60] sm:%s188]
                %214 = vst [vmem:[%s196 + $0x20] sm:%s188] %v213
                %v215 = vld [vmem:[%s195 + $0x6c] sm:%s188]
                %216 = vst [vmem:[%s196 + $0x24] sm:%s188] %v215
                %v217 = vld [vmem:[%s195 + $0x78] sm:%s188]
                %218 = vst [vmem:[%s196 + $0x28] sm:%s188] %v217
                %v219 = vld [vmem:[%s195 + $0x84] sm:%s188]
                %220 = vst [vmem:[%s196 + $0x2c] sm:%s188] %v219
                %v221 = vld [vmem:[%s195 + $0x90] sm:%s188]
                %222 = vst [vmem:[%s196 + $0x30] sm:%s188] %v221
                %v223 = vld [vmem:[%s195 + $0x9c] sm:%s188]
                %224 = vst [vmem:[%s196 + $0x34] sm:%s188] %v223
                %v225 = vld [vmem:[%s195 + $0xa8] sm:%s188]
                %226 = vst [vmem:[%s196 + $0x38] sm:%s188] %v225
                %v227 = vld [vmem:[%s195 + $0xb4] sm:%s188]
                %228 = vst [vmem:[%s196 + $0x3c] sm:%s188] %v227
              $region41: #{bert_forward.16} parent=35 // loop_footer
                %s194 = sadd.s32 1, %s190
              $region42: #{bert_forward.16} parent=35 // loop_footer_branch
                %189 = sbr.rel target = $region38
              $region43: #{bert_forward.16} parent=35 // loop_exit
                _
            $region36: #{bert_forward.16} parent=27 // pred_fallthru
              _
          $region28: #{bert_forward.16} parent=23 // pred_fallthru
            _
          %281 = vnop
        $region24: #{bert_forward.16} parent=19 // pred_fallthru
          _
        // Predicated region
        $region62: #{bert_forward.16} parent=19 // pred_check
          %p282 = pneg %p104
        $region63: #{bert_forward.16} parent=19 // pred_check_branch
          %284 = sbr.rel (%p282) target = $region65
        $region64: #{bert_forward.16} parent=19 // pred_region
          %p285 = scmp.lt.s32.totalorder %s17, 2
          %s286 = scalar_select %p285, %s17, 2
          %s287 = scalar_lea.vmem %s2, %s286
        $region65: #{bert_forward.16} parent=19 // pred_fallthru
          _
      $region20: #{bert_forward.16} parent=5 // pred_fallthru
        _
      %p288 = scmp.le.s32.totalorder 1, %s9
      %p289 = scmp.lt.s32.totalorder %s9, 4
      %p290 = pnand %p288, %p289
      %p291 = pneg %p290
      // Predicated region
      $region66: #{bert_forward.16} parent=5 // pred_check
        _
      $region67: #{bert_forward.16} parent=5 // pred_check_branch
        %293 = sbr.rel (%p290) target = $region69
      $region68: #{bert_forward.16} parent=5 // pred_region
        %s294 = ssub.s32 %s9, 1
        %s295 = sand.u32 %s71, 1
        %s296 = sand.u32 %s71, 1
        %s297 = smul.addr %s296, 64
        %s298 = scalar_lea.vmem [#allocation3], %s297
        // Predicated region
        $region70: #{bert_forward.16} parent=68 // pred_check
          %p299 = pneg %p84
        $region71: #{bert_forward.16} parent=68 // pred_check_branch
          %301 = sbr.rel (%p299) target = $region73
        $region72: #{bert_forward.16} parent=68 // pred_region
          _
        $region73: #{bert_forward.16} parent=68 // pred_fallthru
          _
        %s302 = smul.u32 2, %s19
        %p303 = scmp.lt.s32.totalorder %s302, 1
        %s304 = scalar_select %p303, %s302, 1
        %p305 = scmp.lt.s32.totalorder %s21, 0
        %s306 = scalar_select %p305, %s21, 0
        %s307 = sadd.s32 %s306, %s304
        %s308 = smul.addr %s307, 4
        %s309 = scalar_lea.vmem %s0, %s308
        %p310 = pneg %p56
        %p311 = pneg %p53
        %s312 = sand.u32 %s71, 1
        %s313 = sand.u32 %s71, 1
        %s314 = smul.addr %s313, 64
        %s315 = scalar_lea.vmem [#allocation3], %s314
        %p316 = pneg %p84
        %p317 = pneg %p81
        %p318 = scmp.lt.s32.totalorder %s20, 2
        %s319 = scalar_select %p318, %s20, 2
        %s320 = scalar_lea.vmem %s2, %s319
        %p321 = pneg %p110
        %p322 = pneg %p107
        %p323 = pneg %p138
        %p324 = pneg %p135
        %s325 = sand.u32 %s125, 1
        %s326 = sand.u32 %s125, 1
        %s327 = smul.addr %s326, 8
        %s328 = scalar_lea.vmem [#allocation4], %s327
        %s329 = smul.u32 2, %s19
        %p330 = scmp.lt.s32.totalorder %s329, 1
        %s331 = scalar_select %p330, %s329, 1
        %p332 = scmp.lt.s32.totalorder %s21, 0
        %s333 = scalar_select %p332, %s21, 0
        %s334 = sadd.s32 %s333, %s331
        %s335 = smul.addr %s334, 4
        %s336 = scalar_lea.vmem %s0, %s335
        %s337 = smul.u32 2, %s19
        %s338 = smul.u32 16, %s21
        %p339 = scmp.lt.s32.totalorder %s20, 2
        %s340 = scalar_select %p339, %s20, 2
        %s341 = scalar_lea.vmem %s2, %s340
        %s342 = smul.u32 2, %s19
        %p344 = scmp.eq.s32.totalorder %s21, 0
        // Predicated region
        $region74: #{bert_forward.16} parent=68 // pred_check
          %p345 = pneg %p344
        $region75: #{bert_forward.16} parent=68 // pred_check_branch
          %347 = sbr.rel (%p345) target = $region77
        $region76: #{bert_forward.16} parent=68 // pred_region
          %348 = vst [vmem:[#allocation2] sm:$0xff] 0.0
          %349 = vst [vmem:[#allocation2 + $0x8] sm:$0xff] 0.0
        $region77: #{bert_forward.16} parent=68 // pred_fallthru
          _
        %v350 = vld [vmem:[#allocation2] sm:$0xff]
        %v351 = vld [vmem:[#allocation2 + $0x8] sm:$0xff]
        %v352 = vld [vmem:[%s336] sm:$0xf]
        %v353 = vld [vmem:[%s336 + $0x4] sm:$0xf]
        %v354 = vld [vmem:[%s298] sm:$0xf]
        %v355 = vld [vmem:[%s298 + $0x4] sm:$0xf]
        %v356 = vld [vmem:[%s298 + $0x8] sm:$0xf]
        %v357 = vld [vmem:[%s298 + $0xc] sm:$0xf]
        %v358 = vld [vmem:[%s298 + $0x10] sm:$0xf]
        %v359 = vld [vmem:[%s298 + $0x14] sm:$0xf]
        %v360 = vld [vmem:[%s298 + $0x18] sm:$0xf]
        %v361 = vld [vmem:[%s298 + $0x1c] sm:$0xf]
        %v362 = vld [vmem:[%s298 + $0x20] sm:$0xf]
        %v363 = vld [vmem:[%s298 + $0x24] sm:$0xf]
        %v364 = vld [vmem:[%s298 + $0x28] sm:$0xf]
        %v365 = vld [vmem:[%s298 + $0x2c] sm:$0xf]
        %v366 = vld [vmem:[%s298 + $0x30] sm:$0xf]
        %v367 = vld [vmem:[%s298 + $0x34] sm:$0xf]
        %v368 = vld [vmem:[%s298 + $0x38] sm:$0xf]
        %v369 = vld [vmem:[%s298 + $0x3c] sm:$0xf]
        %v372 = vunpack.c.l.b16 %v352
        %v373 = vunpack.c.l.b16 %v353
        %v374 = vpack.c.b16 %v373, %v372
        %v392 = vunpack.c.l.b16 %v354
        %v393 = vunpack.c.l.b16 %v355
        %v394 = vunpack.c.l.b16 %v356
        %v395 = vunpack.c.l.b16 %v357
        %v396 = vunpack.c.l.b16 %v358
        %v397 = vunpack.c.l.b16 %v359
        %v398 = vunpack.c.l.b16 %v360
        %v399 = vunpack.c.l.b16 %v361
        %v400 = vunpack.c.l.b16 %v362
        %v401 = vunpack.c.l.b16 %v363
        %v402 = vunpack.c.l.b16 %v364
        %v403 = vunpack.c.l.b16 %v365
        %v404 = vunpack.c.l.b16 %v366
        %v405 = vunpack.c.l.b16 %v367
        %v406 = vunpack.c.l.b16 %v368
        %v407 = vunpack.c.l.b16 %v369
        %v408 = vpack.c.b16 %v393, %v392
        %v409 = vpack.c.b16 %v395, %v394
        %v410 = vpack.c.b16 %v397, %v396
        %v411 = vpack.c.b16 %v399, %v398
        %v412 = vpack.c.b16 %v401, %v400
        %v413 = vpack.c.b16 %v403, %v402
        %v414 = vpack.c.b16 %v405, %v404
        %v415 = vpack.c.b16 %v407, %v406
        %424 = vmatprep.subr.bf16.mxu0 0
        %425 = vmatpush1.bf16.msra.mxu0 %v415
        %426 = vmatprep.subr.bf16.mxu0 0
        %427 = vmatpush1.bf16.msra.mxu0 %v414
        %428 = vmatprep.subr.bf16.mxu0 0
        %429 = vmatpush1.bf16.msra.mxu0 %v413
        %430 = vmatprep.subr.bf16.mxu0 0
        %431 = vmatpush1.bf16.msra.mxu0 %v412
        %432 = vmatprep.subr.bf16.mxu0 0
        %433 = vmatpush1.bf16.msra.mxu0 %v411
        %434 = vmatprep.subr.bf16.mxu0 0
        %435 = vmatpush1.bf16.msra.mxu0 %v410
        %436 = vmatprep.subr.bf16.mxu0 0
        %437 = vmatpush1.bf16.msra.mxu0 %v409
        %438 = vmatprep.subr.bf16.mxu0 0
        %439 = vmatpush1.bf16.msra.mxu0 %v408
        %440 = vmatprep.subr.bf16.mxu0 0
        %441 = vmatpush2.bf16.msra.mxu0 0
        %442 = vmatprep.subr.bf16.mxu0 0
        %443 = vmatpush2.bf16.msra.mxu0 0
        %444 = vmatprep.subr.bf16.mxu0 0
        %445 = vmatpush2.bf16.msra.mxu0 0
        %446 = vmatprep.subr.bf16.mxu0 0
        %447 = vmatpush2.bf16.msra.mxu0 0
        %448 = vmatprep.subr.bf16.mxu0 0
        %449 = vmatpush2.bf16.msra.mxu0 0
        %450 = vmatprep.subr.bf16.mxu0 0
        %451 = vmatpush2.bf16.msra.mxu0 0
        %452 = vmatprep.subr.bf16.mxu0 0
        %453 = vmatpush2.bf16.msra.mxu0 0
        %454 = vmatprep.subr.bf16.mxu0 0
        %455 = vmatpush2.bf16.msra.mxu0 0
        %456 = vmatprep.mubr.bf16.mxu0 0
        %457 = vmatmul.mubr.bf16.gmra.mxu0 %v374
        %v458 = vpop.f32.mrf.mxu0
        %v459 = vadd.f32 0.0, %v458
        %v460 = vpop.f32.mrf.mxu0
        %v461 = vpop.f32.mrf.mxu0
        %v462 = vadd.f32 0.0, %v461
        %v463 = vpop.f32.mrf.mxu0
        %464 = vdwg.mxu0
        %v465 = vadd.f32 %v350, %v459
        %v466 = vadd.f32 %v351, %v462
        %467 = vst [vmem:[#allocation2] sm:$0xff] %v465
        %468 = vst [vmem:[#allocation2 + $0x8] sm:$0xff] %v466
        // Predicated region
        $region78: #{bert_forward.16} parent=68 // pred_check
          %p469 = pneg %p344
        $region79: #{bert_forward.16} parent=68 // pred_check_branch
          %471 = sbr.rel (%p469) target = $region81
        $region80: #{bert_forward.16} parent=68 // pred_region
          %v472 = vld [vmem:[#allocation2] sm:$0xff]
          %v473 = vld [vmem:[#allocation2 + $0x8] sm:$0xff]
          %v474 = vld [vmem:[%s341] sm:$0x1]
          %v476 = vlaneseq
          %v477 = vshrl.u32 %v476, 7
          %v478 = vsub.s32 0, %v477
          %v479 = vrot.slane %v474, %v478
          %v481 = vadd.f32 %v472, %v479
          %v482 = vadd.f32 %v473, %v479
          %v483 = vpack.c.bf16 %v482, %v481
          %v485 = vunpack.c.l.b16 %v483
          %v486 = vunpack.c.h.b16 %v483
          %v487 = vpack.c.b16 %v485, %v485
          %v488 = vpack.c.b16 %v486, %v486
          %491 = vst [vmem:[%s328] sm:$0xf] %v487
          %492 = vst [vmem:[%s328 + $0x4] sm:$0xf] %v488
        $region81: #{bert_forward.16} parent=68 // pred_fallthru
          _
        %s493 = sand.u32 %s125, 1
        %s494 = sand.u32 %s125, 1
        %s495 = smul.addr %s494, 8
        %s496 = scalar_lea.vmem [#allocation4], %s495
        // Predicated region
        $region82: #{bert_forward.16} parent=68 // pred_check
          %p497 = pneg %p135
        $region83: #{bert_forward.16} parent=68 // pred_check_branch
          %499 = sbr.rel (%p497) target = $region85
        $region84: #{bert_forward.16} parent=68 // pred_region
          %s500 = smul.u32 2, %s19
          %s501 = smul.addr %s500, 3
          %s502 = sadd.s32 %s20, %s501
          %s503 = smul.addr %s502, 4
          %s504 = scalar_lea.vmem %s3, %s503
          // Predicated region
          $region86: #{bert_forward.16} parent=84 // pred_check
            _
          $region87: #{bert_forward.16} parent=84 // pred_check_branch
            %506 = sbr.rel (0) target = $region89
          $region88: #{bert_forward.16} parent=84 // pred_region
            // Predicated region
            $region90: #{bert_forward.16} parent=88 // pred_check
              _
            $region91: #{bert_forward.16} parent=88 // pred_check_branch
              %508 = sbr.rel target = $region93
            $region92: #{bert_forward.16} parent=88 // pred_region
              // Predicated region
              $region105: #{bert_forward.16} parent=92 // pred_check
                _
              $region106: #{bert_forward.16} parent=92 // pred_check_branch
                %526 = sbr.rel (0) target = $region108
              $region107: #{bert_forward.16} parent=92 // pred_region
                loop: start=0, step=1, limit=1
                $region109: #{bert_forward.16} parent=107 // loop_pre_header
                  _
                $region110: #{bert_forward.16} parent=107 // loop_header
                  %s528 = sphi 0, %s532
                  %p529 = scmp.ge.s32.totalorder %s528, 1
                  %s533 = sphi %s496, %s496
                  %s534 = sphi %s504, %s504
                $region111: #{bert_forward.16} parent=107 // loop_header_branch
                  %531 = sbr.rel (%p529) target = $region115
                $region112: #{bert_forward.16} parent=107 // loop_body
                  _
                $region113: #{bert_forward.16} parent=107 // loop_footer
                  %s532 = sadd.s32 1, %s528
                $region114: #{bert_forward.16} parent=107 // loop_footer_branch
                  %527 = sbr.rel target = $region110
                $region115: #{bert_forward.16} parent=107 // loop_exit
                  _
                %s536 = ssub.s32 16, 1
                loop: start=0, step=1, limit=1
                $region116: #{bert_forward.16} parent=107 // loop_pre_header
                  _
                $region117: #{bert_forward.16} parent=107 // loop_header
                  %s538 = sphi 0, %s542
                  %p539 = scmp.ge.s32.totalorder %s538, 1
                  %s543 = sphi %s496, %s496
                  %s544 = sphi %s504, %s504
                $region118: #{bert_forward.16} parent=107 // loop_header_branch
                  %541 = sbr.rel (%p539) target = $region122
                $region119: #{bert_forward.16} parent=107 // loop_body
                  %v545 = vld [vmem:[%s543] sm:%s536]
                  %546 = vst [vmem:[%s544] sm:%s536] %v545
                  %v547 = vld [vmem:[%s543 + $0x4] sm:%s536]
                  %548 = vst [vmem:[%s544 + $0xc] sm:%s536] %v547
                $region120: #{bert_forward.16} parent=107 // loop_footer
                  %s542 = sadd.s32 1, %s538
                $region121: #{bert_forward.16} parent=107 // loop_footer_branch
                  %537 = sbr.rel target = $region117
                $region122: #{bert_forward.16} parent=107 // loop_exit
                  _
              $region108: #{bert_forward.16} parent=92 // pred_fallthru
                _
            $region93: #{bert_forward.16} parent=88 // pred_fallthru
              _
            // Predicated region
            $region94: #{bert_forward.16} parent=88 // pred_check
              _
            $region95: #{bert_forward.16} parent=88 // pred_check_branch
              %510 = sbr.rel (0) target = $region97
            $region96: #{bert_forward.16} parent=88 // pred_region
              %s512 = ssub.s32 16, 1
              loop: start=0, step=1, limit=1
              $region98: #{bert_forward.16} parent=96 // loop_pre_header
                _
              $region99: #{bert_forward.16} parent=96 // loop_header
                %s514 = sphi 0, %s518
                %p515 = scmp.ge.s32.totalorder %s514, 1
                %s519 = sphi %s496, %s496
                %s520 = sphi %s504, %s504
              $region100: #{bert_forward.16} parent=96 // loop_header_branch
                %517 = sbr.rel (%p515) target = $region104
              $region101: #{bert_forward.16} parent=96 // loop_body
                %v521 = vld [vmem:[%s519] sm:%s512]
                %522 = vst [vmem:[%s520] sm:%s512] %v521
                %v523 = vld [vmem:[%s519 + $0x4] sm:%s512]
                %524 = vst [vmem:[%s520 + $0xc] sm:%s512] %v523
              $region102: #{bert_forward.16} parent=96 // loop_footer
                %s518 = sadd.s32 1, %s514
              $region103: #{bert_forward.16} parent=96 // loop_footer_branch
                %513 = sbr.rel target = $region99
              $region104: #{bert_forward.16} parent=96 // loop_exit
                _
            $region97: #{bert_forward.16} parent=88 // pred_fallthru
              _
          $region89: #{bert_forward.16} parent=84 // pred_fallthru
            _
          %549 = vnop
        $region85: #{bert_forward.16} parent=68 // pred_fallthru
          _
      $region69: #{bert_forward.16} parent=5 // pred_fallthru
        _
      %p550 = scmp.le.s32.totalorder 2, %s9
      // Predicated region
      $region123: #{bert_forward.16} parent=5 // pred_check
        %p551 = pneg %p550
      $region124: #{bert_forward.16} parent=5 // pred_check_branch
        %553 = sbr.rel (%p551) target = $region126
      $region125: #{bert_forward.16} parent=5 // pred_region
        %s554 = ssub.s32 %s9, 2
        // Predicated region
        $region127: #{bert_forward.16} parent=125 // pred_check
          %p555 = pneg %p141
        $region128: #{bert_forward.16} parent=125 // pred_check_branch
          %557 = sbr.rel (%p555) target = $region130
        $region129: #{bert_forward.16} parent=125 // pred_region
          %s558 = sand.u32 %s126, 1
          %s559 = sand.u32 %s126, 1
          %s560 = smul.addr %s559, 8
          %s561 = scalar_lea.vmem [#allocation4], %s560
        $region130: #{bert_forward.16} parent=125 // pred_fallthru
          _
      $region126: #{bert_forward.16} parent=5 // pred_fallthru
        _
    $region6: #{bert_forward.16} parent=1 // loop_footer
      %s13 = sadd.s32 1, %s9
    $region7: #{bert_forward.16} parent=1 // loop_footer_branch
      %8 = sbr.rel target = $region3
    $region8: #{bert_forward.16} parent=1 // loop_exit
      _

// kernel: bert_forward.17
$region0: #{bert_forward.17}
  #allocation0 [shape = 'u32[]', space=smem, size = 0x4, offset = 0x4, fixed_abs, tag = 'smem constant byte address 0x4 - core index']
  #allocation1 [shape = 'u32[144,128]{1,0:T(1,128)}', space=vmem, size = 0x12000, scoped, tag = 'internal scratch']
  %s0 = inlined_call_operand.vmem [shape: bf16[2,8,128], index: 0, kind: input, shape index: {}]
  %s1 = inlined_call_operand.vmem [shape: bf16[2,8,128], index: 1, kind: input, shape index: {}]
  %s2 = inlined_call_operand.vmem [shape: bf16[2,8,128], index: 2, kind: input, shape index: {}]
  %s3 = inlined_call_operand.vmem [shape: f32[2,1,8], index: 3, kind: input, shape index: {}]
  %s4 = inlined_call_operand.vmem [shape: bf16[2,8,128], index: 4, kind: output, shape index: {}]
  %s5 = sld [smem:[#allocation0]]
  $region49: #{bert_forward.17} parent=0
    _
  %s7 = ssub.s32 1, %s5
  %s8 = scalar_select 0, %s7, %s5
  loop: start=0, step=1, limit=4
  $region2: #{bert_forward.17} parent=0 // loop_pre_header
    _
  $region3: #{bert_forward.17} parent=0 // loop_header
    %s10 = sphi 0, %s14
    %p11 = scmp.ge.s32.totalorder %s10, 4
    %s20 = sphi 0, %s22
    %s23 = sphi 0, %s20
    %s24 = sphi 0, %s23
    %s40 = sphi 0, %s24
    %s46 = sphi 0, %s48
    %s49 = sphi 0, %s46
    %s50 = sphi 0, %s49
    %s66 = sphi 0, %s50
    %s72 = sphi 0, %s74
    %s75 = sphi 0, %s72
    %s76 = sphi 0, %s75
    %s92 = sphi 0, %s76
    %s98 = sphi 0, %s100
    %s101 = sphi 0, %s98
    %s102 = sphi 0, %s101
    %s118 = sphi 0, %s102
    %s124 = sphi 0, %s126
    %s127 = sphi 0, %s124
    %s128 = sphi 0, %s127
    %s144 = sphi 0, %s128
  $region4: #{bert_forward.17} parent=0 // loop_header_branch
    %13 = sbr.rel (%p11) target = $region8
  $region5: #{bert_forward.17} parent=0 // loop_body
    %s15 = ssub.s32 %s10, 1
    %s16 = ssub.s32 %s10, 2
    %s17 = sadd.s32 %s10, 1
    %s18 = ssub.s32 %s10, %s17
    %p19 = scmp.eq.s32.totalorder %s18, 0
    %s21 = sadd.s32 %s20, 1
    %s22 = scalar_select %p19, %s20, %s21
    %p25 = pneg %p19
    %p26 = scmp.eq.s32.totalorder %s10, 1
    %p27 = por %p25, %p26
    %p28 = scmp.ne.s32.totalorder %s20, %s23
    %p29 = scmp.eq.s32.totalorder %s10, 0
    %p30 = por %p28, %p29
    %p31 = scmp.ne.s32.totalorder %s20, %s23
    %p32 = scmp.eq.s32.totalorder %s15, 1
    %p33 = por %p31, %p32
    %p34 = scmp.ne.s32.totalorder %s23, %s24
    %p35 = scmp.eq.s32.totalorder %s15, 0
    %p36 = por %p34, %p35
    %p37 = scmp.ne.s32.totalorder %s23, %s24
    %p38 = scmp.eq.s32.totalorder %s16, 1
    %p39 = por %p37, %p38
    %p41 = scmp.ne.s32.totalorder %s24, %s40
    %p42 = scmp.eq.s32.totalorder %s16, 0
    %p43 = por %p41, %p42
    %s44 = ssub.s32 %s10, %s17
    %p45 = scmp.eq.s32.totalorder %s44, 0
    %s47 = sadd.s32 %s46, 1
    %s48 = scalar_select %p45, %s46, %s47
    %p51 = pneg %p45
    %p52 = scmp.eq.s32.totalorder %s10, 1
    %p53 = por %p51, %p52
    %p54 = scmp.ne.s32.totalorder %s46, %s49
    %p55 = scmp.eq.s32.totalorder %s10, 0
    %p56 = por %p54, %p55
    %p57 = scmp.ne.s32.totalorder %s46, %s49
    %p58 = scmp.eq.s32.totalorder %s15, 1
    %p59 = por %p57, %p58
    %p60 = scmp.ne.s32.totalorder %s49, %s50
    %p61 = scmp.eq.s32.totalorder %s15, 0
    %p62 = por %p60, %p61
    %p63 = scmp.ne.s32.totalorder %s49, %s50
    %p64 = scmp.eq.s32.totalorder %s16, 1
    %p65 = por %p63, %p64
    %p67 = scmp.ne.s32.totalorder %s50, %s66
    %p68 = scmp.eq.s32.totalorder %s16, 0
    %p69 = por %p67, %p68
    %s70 = ssub.s32 %s10, %s17
    %p71 = scmp.eq.s32.totalorder %s70, 0
    %s73 = sadd.s32 %s72, 1
    %s74 = scalar_select %p71, %s72, %s73
    %p77 = pneg %p71
    %p78 = scmp.eq.s32.totalorder %s10, 1
    %p79 = por %p77, %p78
    %p80 = scmp.ne.s32.totalorder %s72, %s75
    %p81 = scmp.eq.s32.totalorder %s10, 0
    %p82 = por %p80, %p81
    %p83 = scmp.ne.s32.totalorder %s72, %s75
    %p84 = scmp.eq.s32.totalorder %s15, 1
    %p85 = por %p83, %p84
    %p86 = scmp.ne.s32.totalorder %s75, %s76
    %p87 = scmp.eq.s32.totalorder %s15, 0
    %p88 = por %p86, %p87
    %p89 = scmp.ne.s32.totalorder %s75, %s76
    %p90 = scmp.eq.s32.totalorder %s16, 1
    %p91 = por %p89, %p90
    %p93 = scmp.ne.s32.totalorder %s76, %s92
    %p94 = scmp.eq.s32.totalorder %s16, 0
    %p95 = por %p93, %p94
    %s96 = ssub.s32 %s10, %s17
    %p97 = scmp.eq.s32.totalorder %s96, 0
    %s99 = sadd.s32 %s98, 1
    %s100 = scalar_select %p97, %s98, %s99
    %p103 = pneg %p97
    %p104 = scmp.eq.s32.totalorder %s10, 1
    %p105 = por %p103, %p104
    %p106 = scmp.ne.s32.totalorder %s98, %s101
    %p107 = scmp.eq.s32.totalorder %s10, 0
    %p108 = por %p106, %p107
    %p109 = scmp.ne.s32.totalorder %s98, %s101
    %p110 = scmp.eq.s32.totalorder %s15, 1
    %p111 = por %p109, %p110
    %p112 = scmp.ne.s32.totalorder %s101, %s102
    %p113 = scmp.eq.s32.totalorder %s15, 0
    %p114 = por %p112, %p113
    %p115 = scmp.ne.s32.totalorder %s101, %s102
    %p116 = scmp.eq.s32.totalorder %s16, 1
    %p117 = por %p115, %p116
    %p119 = scmp.ne.s32.totalorder %s102, %s118
    %p120 = scmp.eq.s32.totalorder %s16, 0
    %p121 = por %p119, %p120
    %s122 = ssub.s32 %s10, %s17
    %p123 = scmp.eq.s32.totalorder %s122, 0
    %s125 = sadd.s32 %s124, 1
    %s126 = scalar_select %p123, %s124, %s125
    %p129 = pneg %p123
    %p130 = scmp.eq.s32.totalorder %s10, 1
    %p131 = por %p129, %p130
    %p132 = scmp.ne.s32.totalorder %s124, %s127
    %p133 = scmp.eq.s32.totalorder %s10, 0
    %p134 = por %p132, %p133
    %p135 = scmp.ne.s32.totalorder %s124, %s127
    %p136 = scmp.eq.s32.totalorder %s15, 1
    %p137 = por %p135, %p136
    %p138 = scmp.ne.s32.totalorder %s127, %s128
    %p139 = scmp.eq.s32.totalorder %s15, 0
    %p140 = por %p138, %p139
    %p141 = scmp.ne.s32.totalorder %s127, %s128
    %p142 = scmp.eq.s32.totalorder %s16, 1
    %p143 = por %p141, %p142
    %p145 = scmp.ne.s32.totalorder %s128, %s144
    %p146 = scmp.eq.s32.totalorder %s16, 0
    %p147 = por %p145, %p146
    %p148 = scmp.le.s32.totalorder 1, %s10
    %p149 = scmp.lt.s32.totalorder %s10, 3
    %p150 = pnand %p148, %p149
    %p151 = pneg %p150
    // Predicated region
    $region9: #{bert_forward.17} parent=5 // pred_check
      _
    $region10: #{bert_forward.17} parent=5 // pred_check_branch
      %153 = sbr.rel (%p150) target = $region12
    $region11: #{bert_forward.17} parent=5 // pred_region
      %s154 = ssub.s32 %s10, 1
    $region12: #{bert_forward.17} parent=5 // pred_fallthru
      _
    %p155 = scmp.lt.s32.totalorder %s10, 2
    // Predicated region
    $region13: #{bert_forward.17} parent=5 // pred_check
      %p156 = pneg %p155
    $region14: #{bert_forward.17} parent=5 // pred_check_branch
      %158 = sbr.rel (%p156) target = $region16
    $region15: #{bert_forward.17} parent=5 // pred_region
      // Predicated region
      $region17: #{bert_forward.17} parent=15 // pred_check
        %p159 = pneg %p30
      $region18: #{bert_forward.17} parent=15 // pred_check_branch
        %161 = sbr.rel (%p159) target = $region20
      $region19: #{bert_forward.17} parent=15 // pred_region
        %p162 = scmp.lt.s32.totalorder %s10, 1
        %s163 = scalar_select %p162, %s10, 1
        %s164 = smul.addr %s163, 4
        %s165 = scalar_lea.vmem %s0, %s164
      $region20: #{bert_forward.17} parent=15 // pred_fallthru
        _
      // Predicated region
      $region21: #{bert_forward.17} parent=15 // pred_check
        %p166 = pneg %p56
      $region22: #{bert_forward.17} parent=15 // pred_check_branch
        %168 = sbr.rel (%p166) target = $region24
      $region23: #{bert_forward.17} parent=15 // pred_region
        %p169 = scmp.lt.s32.totalorder %s10, 1
        %s170 = scalar_select %p169, %s10, 1
        %s171 = smul.addr %s170, 4
        %s172 = scalar_lea.vmem %s1, %s171
      $region24: #{bert_forward.17} parent=15 // pred_fallthru
        _
      // Predicated region
      $region25: #{bert_forward.17} parent=15 // pred_check
        %p173 = pneg %p82
      $region26: #{bert_forward.17} parent=15 // pred_check_branch
        %175 = sbr.rel (%p173) target = $region28
      $region27: #{bert_forward.17} parent=15 // pred_region
        %p176 = scmp.lt.s32.totalorder %s10, 1
        %s177 = scalar_select %p176, %s10, 1
        %s178 = smul.addr %s177, 4
        %s179 = scalar_lea.vmem %s2, %s178
      $region28: #{bert_forward.17} parent=15 // pred_fallthru
        _
      // Predicated region
      $region29: #{bert_forward.17} parent=15 // pred_check
        %p180 = pneg %p108
      $region30: #{bert_forward.17} parent=15 // pred_check_branch
        %182 = sbr.rel (%p180) target = $region32
      $region31: #{bert_forward.17} parent=15 // pred_region
        %p183 = scmp.lt.s32.totalorder %s10, 1
        %s184 = scalar_select %p183, %s10, 1
        %s185 = scalar_lea.vmem %s3, %s184
      $region32: #{bert_forward.17} parent=15 // pred_fallthru
        _
    $region16: #{bert_forward.17} parent=5 // pred_fallthru
      _
    %p186 = scmp.le.s32.totalorder 1, %s10
    %p187 = scmp.lt.s32.totalorder %s10, 3
    %p188 = pnand %p186, %p187
    %p189 = pneg %p188
    // Predicated region
    $region33: #{bert_forward.17} parent=5 // pred_check
      _
    $region34: #{bert_forward.17} parent=5 // pred_check_branch
      %191 = sbr.rel (%p188) target = $region36
    $region35: #{bert_forward.17} parent=5 // pred_region
      %s192 = ssub.s32 %s10, 1
      %p193 = scmp.lt.s32.totalorder %s15, 1
      %s194 = scalar_select %p193, %s15, 1
      %s195 = smul.addr %s194, 4
      %s196 = scalar_lea.vmem %s0, %s195
      %p197 = pneg %p36
      %p198 = pneg %p33
      %p199 = scmp.lt.s32.totalorder %s15, 1
      %s200 = scalar_select %p199, %s15, 1
      %s201 = smul.addr %s200, 4
      %s202 = scalar_lea.vmem %s1, %s201
      %p203 = pneg %p62
      %p204 = pneg %p59
      %p205 = scmp.lt.s32.totalorder %s15, 1
      %s206 = scalar_select %p205, %s15, 1
      %s207 = smul.addr %s206, 4
      %s208 = scalar_lea.vmem %s2, %s207
      %p209 = pneg %p88
      %p210 = pneg %p85
      %p211 = scmp.lt.s32.totalorder %s15, 1
      %s212 = scalar_select %p211, %s15, 1
      %s213 = scalar_lea.vmem %s3, %s212
      %p214 = pneg %p114
      %p215 = pneg %p111
      %p216 = pneg %p140
      %p217 = pneg %p137
      %p218 = scmp.lt.s32.totalorder %s15, 1
      %s219 = scalar_select %p218, %s15, 1
      %s220 = smul.addr %s219, 4
      %s221 = scalar_lea.vmem %s4, %s220
      %p222 = scmp.lt.s32.totalorder %s15, 1
      %s223 = scalar_select %p222, %s15, 1
      %s224 = smul.addr %s223, 4
      %s225 = scalar_lea.vmem %s0, %s224
      %p226 = scmp.lt.s32.totalorder %s15, 1
      %s227 = scalar_select %p226, %s15, 1
      %s228 = smul.addr %s227, 4
      %s229 = scalar_lea.vmem %s1, %s228
      %p230 = scmp.lt.s32.totalorder %s15, 1
      %s231 = scalar_select %p230, %s15, 1
      %s232 = smul.addr %s231, 4
      %s233 = scalar_lea.vmem %s2, %s232
      %p234 = scmp.lt.s32.totalorder %s15, 1
      %s235 = scalar_select %p234, %s15, 1
      %s236 = scalar_lea.vmem %s3, %s235
      %p237 = scmp.lt.s32.totalorder %s15, 1
      %s238 = scalar_select %p237, %s15, 1
      %s239 = smul.addr %s238, 4
      %s240 = scalar_lea.vmem %s4, %s239
      %v242 = vld [vmem:[%s225] sm:$0xf]
      %v243 = vld [vmem:[%s229] sm:$0xf]
      %v244 = vld [vmem:[%s233] sm:$0xf]
      %v245 = vld [vmem:[%s236] sm:$0x1]
      %vm246 = vcmask 261120
      %v248 = vsel %vm246, %v242, 0
      %v251 = vsel %vm246, %v243, 0
      %253 = vmatprep.subr.bf16.mxu0 0
      %254 = vmatpush1.bf16.xpose.msra.mxu0 0
      %255 = vmatprep.subr.bf16.mxu0 0
      %256 = vmatpush1.bf16.xpose.msra.mxu0 0
      %257 = vmatprep.subr.bf16.mxu0 0
      %258 = vmatpush1.bf16.xpose.msra.mxu0 0
      %259 = vmatprep.subr.bf16.mxu0 0
      %260 = vmatpush1.bf16.xpose.msra.mxu0 0
      %261 = vmatprep.subr.bf16.mxu0 0
      %262 = vmatpush1.bf16.xpose.msra.mxu0 0
      %263 = vmatprep.subr.bf16.mxu0 0
      %264 = vmatpush1.bf16.xpose.msra.mxu0 0
      %265 = vmatprep.subr.bf16.mxu0 0
      %266 = vmatpush1.bf16.xpose.msra.mxu0 0
      %267 = vmatprep.subr.bf16.mxu0 0
      %268 = vmatpush1.bf16.xpose.msra.mxu0 %v251
      %269 = vmatprep.subr.bf16.mxu0 0
      %270 = vmatpush2.bf16.xpose.msra.mxu0 0
      %271 = vmatprep.subr.bf16.mxu0 0
      %272 = vmatpush2.bf16.xpose.msra.mxu0 0
      %273 = vmatprep.subr.bf16.mxu0 0
      %274 = vmatpush2.bf16.xpose.msra.mxu0 0
      %275 = vmatprep.subr.bf16.mxu0 0
      %276 = vmatpush2.bf16.xpose.msra.mxu0 0
      %277 = vmatprep.subr.bf16.mxu0 0
      %278 = vmatpush2.bf16.xpose.msra.mxu0 0
      %279 = vmatprep.subr.bf16.mxu0 0
      %280 = vmatpush2.bf16.xpose.msra.mxu0 0
      %281 = vmatprep.subr.bf16.mxu0 0
      %282 = vmatpush2.bf16.xpose.msra.mxu0 0
      %283 = vmatprep.subr.bf16.mxu0 0
      %284 = vmatpush2.bf16.xpose.msra.mxu0 0
      %285 = vmatprep.mubr.bf16.mxu0 0
      %286 = vmatmul.mubr.bf16.gmra.mxu0 %v248
      %v287 = vpop.f32.mrf.mxu0
      %v288 = vadd.f32 0.0, %v287
      %v289 = vpop.f32.mrf.mxu0
      %v290 = vpop.f32.mrf.mxu0
      %v291 = vpop.f32.mrf.mxu0
      %292 = vdwg.mxu0
      %v293 = vmul.f32 %v288, 0.17677669
      %v295 = vlaneseq
      %v296 = vshrl.u32 %v295, 7
      %v297 = vsub.s32 0, %v296
      %v298 = vrot.slane %v245, %v297
      %v300 = vadd.f32 %v293, %v298
      %vm301 = vcmask 64512
      %v302 = vsel %vm301, %v300, -inf
      %303 = vmax.xlane.f32.xlu0 %v302
      %v304 = vpop.xlane.xlu0 %303
      %v305 = vsub.f32 %v300, %v304
      %v306 = vmul.f32 %v305, 1.442695
      %v307 = vpow.pop %v306
      %v308 = vsel %vm301, %v307, 0.0
      %309 = vadd.xlane.f32.xlu0 %v308
      %v310 = vpop.xlane.xlu0 %309
      %v311 = vrcp.pop %v310
      %v312 = vmul.f32 %v307, %v311
      %v313 = vpack.c.bf16 %v312, %v312
      %v315 = vsel %vm301, %v313, 0
      %vm317 = vcmask 1043456
      %v319 = vsel %vm317, %v244, 0
      %321 = vmatprep.subr.bf16.mxu0 0
      %322 = vmatpush1.bf16.msra.mxu0 0
      %323 = vmatprep.subr.bf16.mxu0 0
      %324 = vmatpush1.bf16.msra.mxu0 0
      %325 = vmatprep.subr.bf16.mxu0 0
      %326 = vmatpush1.bf16.msra.mxu0 0
      %327 = vmatprep.subr.bf16.mxu0 0
      %328 = vmatpush1.bf16.msra.mxu0 0
      %329 = vmatprep.subr.bf16.mxu0 0
      %330 = vmatpush1.bf16.msra.mxu0 0
      %331 = vmatprep.subr.bf16.mxu0 0
      %332 = vmatpush1.bf16.msra.mxu0 0
      %333 = vmatprep.subr.bf16.mxu0 0
      %334 = vmatpush1.bf16.msra.mxu0 0
      %335 = vmatprep.subr.bf16.mxu0 0
      %336 = vmatpush1.bf16.msra.mxu0 %v319
      %337 = vmatprep.subr.bf16.mxu0 0
      %338 = vmatpush2.bf16.msra.mxu0 0
      %339 = vmatprep.subr.bf16.mxu0 0
      %340 = vmatpush2.bf16.msra.mxu0 0
      %341 = vmatprep.subr.bf16.mxu0 0
      %342 = vmatpush2.bf16.msra.mxu0 0
      %343 = vmatprep.subr.bf16.mxu0 0
      %344 = vmatpush2.bf16.msra.mxu0 0
      %345 = vmatprep.subr.bf16.mxu0 0
      %346 = vmatpush2.bf16.msra.mxu0 0
      %347 = vmatprep.subr.bf16.mxu0 0
      %348 = vmatpush2.bf16.msra.mxu0 0
      %349 = vmatprep.subr.bf16.mxu0 0
      %350 = vmatpush2.bf16.msra.mxu0 0
      %351 = vmatprep.subr.bf16.mxu0 0
      %352 = vmatpush2.bf16.msra.mxu0 0
      %353 = vmatprep.mubr.bf16.mxu0 0
      %354 = vmatmul.mubr.bf16.gmra.mxu0 %v315
      %v355 = vpop.f32.mrf.mxu0
      %v356 = vadd.f32 0.0, %v355
      %v357 = vpop.f32.mrf.mxu0
      %v358 = vpop.f32.mrf.mxu0
      %v359 = vpop.f32.mrf.mxu0
      %360 = vdwg.mxu0
      %v362 = vunpack.c.l.b16 %v242
      %v363 = vpack.c.b16 %v362, %v362
      %364 = vrot.lane.b32.xlu0 %v363, 96
      %v365 = vpop.permute.xlu0 %364
      %v367 = vunpack.c.l.b16 %v243
      %v368 = vpack.c.b16 %v367, %v367
      %369 = vrot.lane.b32.xlu0 %v368, 96
      %v370 = vpop.permute.xlu0 %369
      %v372 = vsel %vm246, %v365, 0
      %v375 = vsel %vm246, %v370, 0
      %377 = vmatprep.subr.bf16.mxu0 0
      %378 = vmatpush1.bf16.xpose.msra.mxu0 0
      %379 = vmatprep.subr.bf16.mxu0 0
      %380 = vmatpush1.bf16.xpose.msra.mxu0 0
      %381 = vmatprep.subr.bf16.mxu0 0
      %382 = vmatpush1.bf16.xpose.msra.mxu0 0
      %383 = vmatprep.subr.bf16.mxu0 0
      %384 = vmatpush1.bf16.xpose.msra.mxu0 0
      %385 = vmatprep.subr.bf16.mxu0 0
      %386 = vmatpush1.bf16.xpose.msra.mxu0 0
      %387 = vmatprep.subr.bf16.mxu0 0
      %388 = vmatpush1.bf16.xpose.msra.mxu0 0
      %389 = vmatprep.subr.bf16.mxu0 0
      %390 = vmatpush1.bf16.xpose.msra.mxu0 0
      %391 = vmatprep.subr.bf16.mxu0 0
      %392 = vmatpush1.bf16.xpose.msra.mxu0 %v375
      %393 = vmatprep.subr.bf16.mxu0 0
      %394 = vmatpush2.bf16.xpose.msra.mxu0 0
      %395 = vmatprep.subr.bf16.mxu0 0
      %396 = vmatpush2.bf16.xpose.msra.mxu0 0
      %397 = vmatprep.subr.bf16.mxu0 0
      %398 = vmatpush2.bf16.xpose.msra.mxu0 0
      %399 = vmatprep.subr.bf16.mxu0 0
      %400 = vmatpush2.bf16.xpose.msra.mxu0 0
      %401 = vmatprep.subr.bf16.mxu0 0
      %402 = vmatpush2.bf16.xpose.msra.mxu0 0
      %403 = vmatprep.subr.bf16.mxu0 0
      %404 = vmatpush2.bf16.xpose.msra.mxu0 0
      %405 = vmatprep.subr.bf16.mxu0 0
      %406 = vmatpush2.bf16.xpose.msra.mxu0 0
      %407 = vmatprep.subr.bf16.mxu0 0
      %408 = vmatpush2.bf16.xpose.msra.mxu0 0
      %409 = vmatprep.mubr.bf16.mxu0 0
      %410 = vmatmul.mubr.bf16.gmra.mxu0 %v372
      %v411 = vpop.f32.mrf.mxu0
      %v412 = vadd.f32 0.0, %v411
      %v413 = vpop.f32.mrf.mxu0
      %v414 = vpop.f32.mrf.mxu0
      %v415 = vpop.f32.mrf.mxu0
      %416 = vdwg.mxu0
      %v417 = vmul.f32 %v412, 0.17677669
      %v418 = vadd.f32 %v417, %v298
      %v419 = vsel %vm301, %v418, -inf
      %420 = vmax.xlane.f32.xlu0 %v419
      %v421 = vpop.xlane.xlu0 %420
      %v422 = vsub.f32 %v418, %v421
      %v423 = vmul.f32 %v422, 1.442695
      %v424 = vpow.pop %v423
      %v425 = vsel %vm301, %v424, 0.0
      %426 = vadd.xlane.f32.xlu0 %v425
      %v427 = vpop.xlane.xlu0 %426
      %v428 = vrcp.pop %v427
      %v429 = vmul.f32 %v424, %v428
      %v430 = vpack.c.bf16 %v429, %v429
      %v432 = vunpack.c.l.b16 %v244
      %v433 = vpack.c.b16 %v432, %v432
      %434 = vrot.lane.b32.xlu0 %v433, 96
      %v435 = vpop.permute.xlu0 %434
      %v437 = vsel %vm301, %v430, 0
      %v440 = vsel %vm317, %v435, 0
      %442 = vmatprep.subr.bf16.mxu0 0
      %443 = vmatpush1.bf16.msra.mxu0 0
      %444 = vmatprep.subr.bf16.mxu0 0
      %445 = vmatpush1.bf16.msra.mxu0 0
      %446 = vmatprep.subr.bf16.mxu0 0
      %447 = vmatpush1.bf16.msra.mxu0 0
      %448 = vmatprep.subr.bf16.mxu0 0
      %449 = vmatpush1.bf16.msra.mxu0 0
      %450 = vmatprep.subr.bf16.mxu0 0
      %451 = vmatpush1.bf16.msra.mxu0 0
      %452 = vmatprep.subr.bf16.mxu0 0
      %453 = vmatpush1.bf16.msra.mxu0 0
      %454 = vmatprep.subr.bf16.mxu0 0
      %455 = vmatpush1.bf16.msra.mxu0 0
      %456 = vmatprep.subr.bf16.mxu0 0
      %457 = vmatpush1.bf16.msra.mxu0 %v440
      %458 = vmatprep.subr.bf16.mxu0 0
      %459 = vmatpush2.bf16.msra.mxu0 0
      %460 = vmatprep.subr.bf16.mxu0 0
      %461 = vmatpush2.bf16.msra.mxu0 0
      %462 = vmatprep.subr.bf16.mxu0 0
      %463 = vmatpush2.bf16.msra.mxu0 0
      %464 = vmatprep.subr.bf16.mxu0 0
      %465 = vmatpush2.bf16.msra.mxu0 0
      %466 = vmatprep.subr.bf16.mxu0 0
      %467 = vmatpush2.bf16.msra.mxu0 0
      %468 = vmatprep.subr.bf16.mxu0 0
      %469 = vmatpush2.bf16.msra.mxu0 0
      %470 = vmatprep.subr.bf16.mxu0 0
      %471 = vmatpush2.bf16.msra.mxu0 0
      %472 = vmatprep.subr.bf16.mxu0 0
      %473 = vmatpush2.bf16.msra.mxu0 0
      %474 = vmatprep.mubr.bf16.mxu0 0
      %475 = vmatmul.mubr.bf16.gmra.mxu0 %v437
      %v476 = vpop.f32.mrf.mxu0
      %v477 = vadd.f32 0.0, %v476
      %v478 = vpop.f32.mrf.mxu0
      %v479 = vpop.f32.mrf.mxu0
      %v480 = vpop.f32.mrf.mxu0
      %481 = vdwg.mxu0
      %482 = vrot.lane.b32.xlu0 %v363, 64
      %v483 = vpop.permute.xlu0 %482
      %484 = vrot.lane.b32.xlu0 %v368, 64
      %v485 = vpop.permute.xlu0 %484
      %v487 = vsel %vm246, %v483, 0
      %v490 = vsel %vm246, %v485, 0
      %492 = vmatprep.subr.bf16.mxu0 0
      %493 = vmatpush1.bf16.xpose.msra.mxu0 0
      %494 = vmatprep.subr.bf16.mxu0 0
      %495 = vmatpush1.bf16.xpose.msra.mxu0 0
      %496 = vmatprep.subr.bf16.mxu0 0
      %497 = vmatpush1.bf16.xpose.msra.mxu0 0
      %498 = vmatprep.subr.bf16.mxu0 0
      %499 = vmatpush1.bf16.xpose.msra.mxu0 0
      %500 = vmatprep.subr.bf16.mxu0 0
      %501 = vmatpush1.bf16.xpose.msra.mxu0 0
      %502 = vmatprep.subr.bf16.mxu0 0
      %503 = vmatpush1.bf16.xpose.msra.mxu0 0
      %504 = vmatprep.subr.bf16.mxu0 0
      %505 = vmatpush1.bf16.xpose.msra.mxu0 0
      %506 = vmatprep.subr.bf16.mxu0 0
      %507 = vmatpush1.bf16.xpose.msra.mxu0 %v490
      %508 = vmatprep.subr.bf16.mxu0 0
      %509 = vmatpush2.bf16.xpose.msra.mxu0 0
      %510 = vmatprep.subr.bf16.mxu0 0
      %511 = vmatpush2.bf16.xpose.msra.mxu0 0
      %512 = vmatprep.subr.bf16.mxu0 0
      %513 = vmatpush2.bf16.xpose.msra.mxu0 0
      %514 = vmatprep.subr.bf16.mxu0 0
      %515 = vmatpush2.bf16.xpose.msra.mxu0 0
      %516 = vmatprep.subr.bf16.mxu0 0
      %517 = vmatpush2.bf16.xpose.msra.mxu0 0
      %518 = vmatprep.subr.bf16.mxu0 0
      %519 = vmatpush2.bf16.xpose.msra.mxu0 0
      %520 = vmatprep.subr.bf16.mxu0 0
      %521 = vmatpush2.bf16.xpose.msra.mxu0 0
      %522 = vmatprep.subr.bf16.mxu0 0
      %523 = vmatpush2.bf16.xpose.msra.mxu0 0
      %524 = vmatprep.mubr.bf16.mxu0 0
      %525 = vmatmul.mubr.bf16.gmra.mxu0 %v487
      %v526 = vpop.f32.mrf.mxu0
      %v527 = vadd.f32 0.0, %v526
      %v528 = vpop.f32.mrf.mxu0
      %v529 = vpop.f32.mrf.mxu0
      %v530 = vpop.f32.mrf.mxu0
      %531 = vdwg.mxu0
      %v532 = vmul.f32 %v527, 0.17677669
      %v533 = vadd.f32 %v532, %v298
      %v534 = vsel %vm301, %v533, -inf
      %535 = vmax.xlane.f32.xlu0 %v534
      %v536 = vpop.xlane.xlu0 %535
      %v537 = vsub.f32 %v533, %v536
      %v538 = vmul.f32 %v537, 1.442695
      %v539 = vpow.pop %v538
      %v540 = vsel %vm301, %v539, 0.0
      %541 = vadd.xlane.f32.xlu0 %v540
      %v542 = vpop.xlane.xlu0 %541
      %v543 = vrcp.pop %v542
      %v544 = vmul.f32 %v539, %v543
      %v545 = vpack.c.bf16 %v544, %v544
      %546 = vrot.lane.b32.xlu0 %v433, 64
      %v547 = vpop.permute.xlu0 %546
      %v549 = vsel %vm301, %v545, 0
      %v552 = vsel %vm317, %v547, 0
      %554 = vmatprep.subr.bf16.mxu0 0
      %555 = vmatpush1.bf16.msra.mxu0 0
      %556 = vmatprep.subr.bf16.mxu0 0
      %557 = vmatpush1.bf16.msra.mxu0 0
      %558 = vmatprep.subr.bf16.mxu0 0
      %559 = vmatpush1.bf16.msra.mxu0 0
      %560 = vmatprep.subr.bf16.mxu0 0
      %561 = vmatpush1.bf16.msra.mxu0 0
      %562 = vmatprep.subr.bf16.mxu0 0
      %563 = vmatpush1.bf16.msra.mxu0 0
      %564 = vmatprep.subr.bf16.mxu0 0
      %565 = vmatpush1.bf16.msra.mxu0 0
      %566 = vmatprep.subr.bf16.mxu0 0
      %567 = vmatpush1.bf16.msra.mxu0 0
      %568 = vmatprep.subr.bf16.mxu0 0
      %569 = vmatpush1.bf16.msra.mxu0 %v552
      %570 = vmatprep.subr.bf16.mxu0 0
      %571 = vmatpush2.bf16.msra.mxu0 0
      %572 = vmatprep.subr.bf16.mxu0 0
      %573 = vmatpush2.bf16.msra.mxu0 0
      %574 = vmatprep.subr.bf16.mxu0 0
      %575 = vmatpush2.bf16.msra.mxu0 0
      %576 = vmatprep.subr.bf16.mxu0 0
      %577 = vmatpush2.bf16.msra.mxu0 0
      %578 = vmatprep.subr.bf16.mxu0 0
      %579 = vmatpush2.bf16.msra.mxu0 0
      %580 = vmatprep.subr.bf16.mxu0 0
      %581 = vmatpush2.bf16.msra.mxu0 0
      %582 = vmatprep.subr.bf16.mxu0 0
      %583 = vmatpush2.bf16.msra.mxu0 0
      %584 = vmatprep.subr.bf16.mxu0 0
      %585 = vmatpush2.bf16.msra.mxu0 0
      %586 = vmatprep.mubr.bf16.mxu0 0
      %587 = vmatmul.mubr.bf16.gmra.mxu0 %v549
      %v588 = vpop.f32.mrf.mxu0
      %v589 = vadd.f32 0.0, %v588
      %v590 = vpop.f32.mrf.mxu0
      %v591 = vpop.f32.mrf.mxu0
      %v592 = vpop.f32.mrf.mxu0
      %593 = vdwg.mxu0
      %594 = vrot.lane.b32.xlu0 %v363, 32
      %v595 = vpop.permute.xlu0 %594
      %596 = vrot.lane.b32.xlu0 %v368, 32
      %v597 = vpop.permute.xlu0 %596
      %v599 = vsel %vm246, %v595, 0
      %v602 = vsel %vm246, %v597, 0
      %604 = vmatprep.subr.bf16.mxu0 0
      %605 = vmatpush1.bf16.xpose.msra.mxu0 0
      %606 = vmatprep.subr.bf16.mxu0 0
      %607 = vmatpush1.bf16.xpose.msra.mxu0 0
      %608 = vmatprep.subr.bf16.mxu0 0
      %609 = vmatpush1.bf16.xpose.msra.mxu0 0
      %610 = vmatprep.subr.bf16.mxu0 0
      %611 = vmatpush1.bf16.xpose.msra.mxu0 0
      %612 = vmatprep.subr.bf16.mxu0 0
      %613 = vmatpush1.bf16.xpose.msra.mxu0 0
      %614 = vmatprep.subr.bf16.mxu0 0
      %615 = vmatpush1.bf16.xpose.msra.mxu0 0
      %616 = vmatprep.subr.bf16.mxu0 0
      %617 = vmatpush1.bf16.xpose.msra.mxu0 0
      %618 = vmatprep.subr.bf16.mxu0 0
      %619 = vmatpush1.bf16.xpose.msra.mxu0 %v602
      %620 = vmatprep.subr.bf16.mxu0 0
      %621 = vmatpush2.bf16.xpose.msra.mxu0 0
      %622 = vmatprep.subr.bf16.mxu0 0
      %623 = vmatpush2.bf16.xpose.msra.mxu0 0
      %624 = vmatprep.subr.bf16.mxu0 0
      %625 = vmatpush2.bf16.xpose.msra.mxu0 0
      %626 = vmatprep.subr.bf16.mxu0 0
      %627 = vmatpush2.bf16.xpose.msra.mxu0 0
      %628 = vmatprep.subr.bf16.mxu0 0
      %629 = vmatpush2.bf16.xpose.msra.mxu0 0
      %630 = vmatprep.subr.bf16.mxu0 0
      %631 = vmatpush2.bf16.xpose.msra.mxu0 0
      %632 = vmatprep.subr.bf16.mxu0 0
      %633 = vmatpush2.bf16.xpose.msra.mxu0 0
      %634 = vmatprep.subr.bf16.mxu0 0
      %635 = vmatpush2.bf16.xpose.msra.mxu0 0
      %636 = vmatprep.mubr.bf16.mxu0 0
      %637 = vmatmul.mubr.bf16.gmra.mxu0 %v599
      %v638 = vpop.f32.mrf.mxu0
      %v639 = vadd.f32 0.0, %v638
      %v640 = vpop.f32.mrf.mxu0
      %v641 = vpop.f32.mrf.mxu0
      %v642 = vpop.f32.mrf.mxu0
      %643 = vdwg.mxu0
      %v644 = vmul.f32 %v639, 0.17677669
      %v645 = vadd.f32 %v644, %v298
      %v646 = vsel %vm301, %v645, -inf
      %647 = vmax.xlane.f32.xlu0 %v646
      %v648 = vpop.xlane.xlu0 %647
      %v649 = vsub.f32 %v645, %v648
      %v650 = vmul.f32 %v649, 1.442695
      %v651 = vpow.pop %v650
      %v652 = vsel %vm301, %v651, 0.0
      %653 = vadd.xlane.f32.xlu0 %v652
      %v654 = vpop.xlane.xlu0 %653
      %v655 = vrcp.pop %v654
      %v656 = vmul.f32 %v651, %v655
      %v657 = vpack.c.bf16 %v656, %v656
      %658 = vrot.lane.b32.xlu0 %v433, 32
      %v659 = vpop.permute.xlu0 %658
      %v661 = vsel %vm301, %v657, 0
      %v664 = vsel %vm317, %v659, 0
      %666 = vmatprep.subr.bf16.mxu0 0
      %667 = vmatpush1.bf16.msra.mxu0 0
      %668 = vmatprep.subr.bf16.mxu0 0
      %669 = vmatpush1.bf16.msra.mxu0 0
      %670 = vmatprep.subr.bf16.mxu0 0
      %671 = vmatpush1.bf16.msra.mxu0 0
      %672 = vmatprep.subr.bf16.mxu0 0
      %673 = vmatpush1.bf16.msra.mxu0 0
      %674 = vmatprep.subr.bf16.mxu0 0
      %675 = vmatpush1.bf16.msra.mxu0 0
      %676 = vmatprep.subr.bf16.mxu0 0
      %677 = vmatpush1.bf16.msra.mxu0 0
      %678 = vmatprep.subr.bf16.mxu0 0
      %679 = vmatpush1.bf16.msra.mxu0 0
      %680 = vmatprep.subr.bf16.mxu0 0
      %681 = vmatpush1.bf16.msra.mxu0 %v664
      %682 = vmatprep.subr.bf16.mxu0 0
      %683 = vmatpush2.bf16.msra.mxu0 0
      %684 = vmatprep.subr.bf16.mxu0 0
      %685 = vmatpush2.bf16.msra.mxu0 0
      %686 = vmatprep.subr.bf16.mxu0 0
      %687 = vmatpush2.bf16.msra.mxu0 0
      %688 = vmatprep.subr.bf16.mxu0 0
      %689 = vmatpush2.bf16.msra.mxu0 0
      %690 = vmatprep.subr.bf16.mxu0 0
      %691 = vmatpush2.bf16.msra.mxu0 0
      %692 = vmatprep.subr.bf16.mxu0 0
      %693 = vmatpush2.bf16.msra.mxu0 0
      %694 = vmatprep.subr.bf16.mxu0 0
      %695 = vmatpush2.bf16.msra.mxu0 0
      %696 = vmatprep.subr.bf16.mxu0 0
      %697 = vmatpush2.bf16.msra.mxu0 0
      %698 = vmatprep.mubr.bf16.mxu0 0
      %699 = vmatmul.mubr.bf16.gmra.mxu0 %v661
      %v700 = vpop.f32.mrf.mxu0
      %v701 = vadd.f32 0.0, %v700
      %v702 = vpop.f32.mrf.mxu0
      %v703 = vpop.f32.mrf.mxu0
      %v704 = vpop.f32.mrf.mxu0
      %705 = vdwg.mxu0
      %707 = vrot.lane.b32.xlu0 %v477, 32
      %v708 = vpop.permute.xlu0 %707
      %711 = vrot.lane.b32.xlu0 %v589, 64
      %v712 = vpop.permute.xlu0 %711
      %715 = vrot.lane.b32.xlu0 %v701, 96
      %v716 = vpop.permute.xlu0 %715
      %v718 = vsel %vm246, %v356, %v708
      %vm719 = vcmask 523264
      %v720 = vsel %vm719, %v718, %v712
      %vm721 = vcmask 785408
      %v722 = vsel %vm721, %v720, %v716
      %v723 = vpack.c.bf16 %v722, %v722
      %724 = vst [vmem:[%s240] sm:$0xf] %v723
      %p725 = scmp.lt.s32.totalorder %s15, 1
      %s726 = scalar_select %p725, %s15, 1
      %s727 = smul.addr %s726, 4
      %s728 = scalar_lea.vmem %s4, %s727
      // Predicated region
      $region37: #{bert_forward.17} parent=35 // pred_check
        %p729 = pneg %p137
      $region38: #{bert_forward.17} parent=35 // pred_check_branch
        %731 = sbr.rel (%p729) target = $region40
      $region39: #{bert_forward.17} parent=35 // pred_region
        _
      $region40: #{bert_forward.17} parent=35 // pred_fallthru
        _
    $region36: #{bert_forward.17} parent=5 // pred_fallthru
      _
    %p732 = scmp.le.s32.totalorder 2, %s10
    // Predicated region
    $region41: #{bert_forward.17} parent=5 // pred_check
      %p733 = pneg %p732
    $region42: #{bert_forward.17} parent=5 // pred_check_branch
      %735 = sbr.rel (%p733) target = $region44
    $region43: #{bert_forward.17} parent=5 // pred_region
      %s736 = ssub.s32 %s10, 2
      // Predicated region
      $region45: #{bert_forward.17} parent=43 // pred_check
        %p737 = pneg %p143
      $region46: #{bert_forward.17} parent=43 // pred_check_branch
        %739 = sbr.rel (%p737) target = $region48
      $region47: #{bert_forward.17} parent=43 // pred_region
        %p740 = scmp.lt.s32.totalorder %s16, 1
        %s741 = scalar_select %p740, %s16, 1
        %s742 = smul.addr %s741, 4
        %s743 = scalar_lea.vmem %s4, %s742
      $region48: #{bert_forward.17} parent=43 // pred_fallthru
        _
    $region44: #{bert_forward.17} parent=5 // pred_fallthru
      _
  $region6: #{bert_forward.17} parent=0 // loop_footer
    %s14 = sadd.s32 1, %s10
  $region7: #{bert_forward.17} parent=0 // loop_footer_branch
    %9 = sbr.rel target = $region3
  $region8: #{bert_forward.17} parent=0 // loop_exit
    _

// kernel: bert_forward.19
$region0: #{bert_forward.19}
  #allocation0 [shape = 'u32[]', space=smem, size = 0x4, offset = 0x4, fixed_abs, tag = 'smem constant byte address 0x4 - core index']
  #allocation1 [shape = 'u32[144,128]{1,0:T(1,128)}', space=vmem, size = 0x12000, scoped, tag = 'internal scratch']
  %s0 = inlined_call_operand.vmem [shape: bf16[16,128], index: 0, kind: input, shape index: {}]
  %s1 = inlined_call_operand.vmem [shape: bf16[16,128], index: 1, kind: input, shape index: {}]
  %s2 = inlined_call_operand.vmem [shape: f32[1,128], index: 2, kind: input, shape index: {}]
  %s3 = inlined_call_operand.vmem [shape: f32[1,128], index: 3, kind: input, shape index: {}]
  %s4 = inlined_call_operand.vmem [shape: bf16[16,128], index: 4, kind: output, shape index: {}]
  %s5 = sld [smem:[#allocation0]]
  $region26: #{bert_forward.19} parent=0
    _
  %s7 = ssub.s32 1, %s5
  %s8 = scalar_select 0, %s7, %s5
  // Predicated region
  $region2: #{bert_forward.19} parent=0 // pred_check
    _
  $region3: #{bert_forward.19} parent=0 // pred_check_branch
    %10 = sbr.rel (0) target = $region5
  $region4: #{bert_forward.19} parent=0 // pred_region
    _
  $region5: #{bert_forward.19} parent=0 // pred_fallthru
    _
  // Predicated region
  $region6: #{bert_forward.19} parent=0 // pred_check
    _
  $region7: #{bert_forward.19} parent=0 // pred_check_branch
    %12 = sbr.rel (0) target = $region9
  $region8: #{bert_forward.19} parent=0 // pred_region
    _
  $region9: #{bert_forward.19} parent=0 // pred_fallthru
    _
  // Predicated region
  $region10: #{bert_forward.19} parent=0 // pred_check
    _
  $region11: #{bert_forward.19} parent=0 // pred_check_branch
    %14 = sbr.rel (0) target = $region13
  $region12: #{bert_forward.19} parent=0 // pred_region
    _
  $region13: #{bert_forward.19} parent=0 // pred_fallthru
    _
  // Predicated region
  $region14: #{bert_forward.19} parent=0 // pred_check
    _
  $region15: #{bert_forward.19} parent=0 // pred_check_branch
    %16 = sbr.rel (0) target = $region17
  $region16: #{bert_forward.19} parent=0 // pred_region
    _
  $region17: #{bert_forward.19} parent=0 // pred_fallthru
    _
  %v17 = vld [vmem:[%s0] sm:$0xf]
  %v18 = vld [vmem:[%s0 + $0x4] sm:$0xf]
  %v19 = vunpack.c.l.bf16 %v17
  %v20 = vunpack.c.l.bf16 %v18
  %v21 = vld [vmem:[%s1] sm:$0xf]
  %v22 = vld [vmem:[%s1 + $0x4] sm:$0xf]
  %v23 = vunpack.c.l.bf16 %v21
  %v24 = vunpack.c.l.bf16 %v22
  %v25 = vadd.f32 %v19, %v23
  %v26 = vadd.f32 %v20, %v24
  %27 = vadd.xlane.f32.xlu0 %v25
  %v28 = vpop.xlane.xlu0 %27
  %29 = vadd.xlane.f32.xlu0 %v26
  %v30 = vpop.xlane.xlu0 %29
  %v31 = vrcp.pop 128.0
  %v32 = vmul.f32 %v28, %v31
  %v33 = vmul.f32 %v30, %v31
  %v34 = vsub.f32 %v25, %v32
  %v35 = vsub.f32 %v26, %v33
  %v36 = vmul.f32 %v34, %v34
  %v37 = vmul.f32 %v35, %v35
  %38 = vadd.xlane.f32.xlu0 %v36
  %v39 = vpop.xlane.xlu0 %38
  %40 = vadd.xlane.f32.xlu0 %v37
  %v41 = vpop.xlane.xlu0 %40
  %v42 = vmul.f32 %v39, %v31
  %v43 = vmul.f32 %v41, %v31
  %v44 = vadd.f32 %v42, 1e-12
  %v45 = vadd.f32 %v43, 1e-12
  %v46 = vrsqrt.pop %v44
  %v47 = vrsqrt.pop %v45
  %v48 = vmul.f32 %v34, %v46
  %v49 = vmul.f32 %v35, %v47
  %v50 = vld [vmem:[%s2] sm:$0x1]
  %v52 = vlaneseq
  %v53 = vshrl.u32 %v52, 7
  %v54 = vsub.s32 0, %v53
  %v55 = vrot.slane %v50, %v54
  %v57 = vmul.f32 %v48, %v55
  %v58 = vmul.f32 %v49, %v55
  %v59 = vld [vmem:[%s3] sm:$0x1]
  %v61 = vlaneseq
  %v62 = vshrl.u32 %v61, 7
  %v63 = vsub.s32 0, %v62
  %v64 = vrot.slane %v59, %v63
  %v66 = vadd.f32 %v57, %v64
  %v67 = vadd.f32 %v58, %v64
  %v68 = vpack.c.bf16 %v67, %v66
  %v70 = vunpack.c.l.b16 %v68
  %v71 = vunpack.c.h.b16 %v68
  %v72 = vpack.c.b16 %v70, %v70
  %v73 = vpack.c.b16 %v71, %v71
  %76 = vst [vmem:[%s4] sm:$0xf] %v72
  %77 = vst [vmem:[%s4 + $0x4] sm:$0xf] %v73
  // Predicated region
  $region18: #{bert_forward.19} parent=0 // pred_check
    _
  $region19: #{bert_forward.19} parent=0 // pred_check_branch
    %79 = sbr.rel (0) target = $region21
  $region20: #{bert_forward.19} parent=0 // pred_region
    _
  $region21: #{bert_forward.19} parent=0 // pred_fallthru
    _
  // Predicated region
  $region22: #{bert_forward.19} parent=0 // pred_check
    _
  $region23: #{bert_forward.19} parent=0 // pred_check_branch
    %81 = sbr.rel (0) target = $region25
  $region24: #{bert_forward.19} parent=0 // pred_region
    _
  $region25: #{bert_forward.19} parent=0 // pred_fallthru
    _

// kernel: bert_forward.20
$region0: #{bert_forward.20}
  #allocation0 [shape = 'u32[]', space=smem, size = 0x4, offset = 0x4, fixed_abs, tag = 'smem constant byte address 0x4 - core index']
  #allocation1 [shape = 'u32[144,128]{1,0:T(1,128)}', space=vmem, size = 0x12000, scoped, tag = 'internal scratch']
  #allocation2 [shape = 'f32[16,256]{1,0:T(8,128)}', space=vmem, size = 0x4000, scoped, tag = 'scratch operand']
  %s0 = inlined_call_operand.vmem [shape: bf16[16,128], index: 0, kind: input, shape index: {}]
  %s1 = inlined_call_operand.vmem [shape: bf16[128,512], index: 1, kind: input, shape index: {}]
  %s2 = inlined_call_operand.vmem [shape: f32[1,512], index: 2, kind: input, shape index: {}]
  %s3 = inlined_call_operand.vmem [shape: bf16[16,512], index: 3, kind: output, shape index: {}]
  %s4 = sld [smem:[#allocation0]]
  $region125: #{bert_forward.20} parent=0
    _
  %s6 = ssub.s32 1, %s4
  %s7 = scalar_select 0, %s6, %s4
  $region1: #{bert_forward.20} parent=0
    #allocation3 [shape = 'u8[131072]{0}', space=vmem, size = 0x20000, scoped, tag = 'input window, operand 1']
    #allocation4 [shape = 'u8[16384]{0}', space=vmem, size = 0x4000, scoped, tag = 'output window, operand 0']
    loop: start=0, step=1, limit=4
    $region2: #{bert_forward.20} parent=1 // loop_pre_header
      _
    $region3: #{bert_forward.20} parent=1 // loop_header
      %s9 = sphi 0, %s13
      %p10 = scmp.ge.s32.totalorder %s9, 4
      %s16 = sphi 0, %s35
      %s17 = sphi 0, %s31
      %s18 = sphi 0, %s27
      %s19 = sphi 0, %s16
      %s20 = sphi 0, %s17
      %s21 = sphi 0, %s18
      %s22 = sphi 0, %s19
      %s23 = sphi 0, %s20
      %s24 = sphi 0, %s21
      %s40 = sphi 0, %s42
      %s43 = sphi 0, %s40
      %s44 = sphi 0, %s43
      %s60 = sphi 0, %s44
      %s68 = sphi 0, %s70
      %s71 = sphi 0, %s68
      %s72 = sphi 0, %s71
      %s88 = sphi 0, %s72
      %s94 = sphi 0, %s96
      %s97 = sphi 0, %s94
      %s98 = sphi 0, %s97
      %s114 = sphi 0, %s98
      %s122 = sphi 0, %s124
      %s125 = sphi 0, %s122
      %s126 = sphi 0, %s125
      %s142 = sphi 0, %s126
    $region4: #{bert_forward.20} parent=1 // loop_header_branch
      %12 = sbr.rel (%p10) target = $region8
    $region5: #{bert_forward.20} parent=1 // loop_body
      %s14 = ssub.s32 %s9, 1
      %s15 = ssub.s32 %s9, 2
      %s25 = sadd.s32 1, %s18
      %p26 = scmp.ge.s32.totalorder %s25, 1
      %s27 = scalar_select %p26, 0, %s25
      %s28 = sadd.s32 1, %s17
      %s29 = scalar_select %p26, %s28, %s17
      %p30 = scmp.ge.s32.totalorder %s29, 2
      %s31 = scalar_select %p30, 0, %s29
      %s32 = sadd.s32 1, %s16
      %s33 = scalar_select %p30, %s32, %s16
      %p34 = scmp.ge.s32.totalorder %s33, 1
      %s35 = scalar_select %p34, 0, %s33
      %s36 = ssub.s32 %s16, %s35
      %s37 = ssub.s32 %s18, %s27
      %s38 = sor.u32 %s36, %s37
      %p39 = scmp.eq.s32.totalorder %s38, 0
      %s41 = sadd.s32 %s40, 1
      %s42 = scalar_select %p39, %s40, %s41
      %p45 = pneg %p39
      %p46 = scmp.eq.s32.totalorder %s9, 1
      %p47 = por %p45, %p46
      %p48 = scmp.ne.s32.totalorder %s40, %s43
      %p49 = scmp.eq.s32.totalorder %s9, 0
      %p50 = por %p48, %p49
      %p51 = scmp.ne.s32.totalorder %s40, %s43
      %p52 = scmp.eq.s32.totalorder %s14, 1
      %p53 = por %p51, %p52
      %p54 = scmp.ne.s32.totalorder %s43, %s44
      %p55 = scmp.eq.s32.totalorder %s14, 0
      %p56 = por %p54, %p55
      %p57 = scmp.ne.s32.totalorder %s43, %s44
      %p58 = scmp.eq.s32.totalorder %s15, 1
      %p59 = por %p57, %p58
      %p61 = scmp.ne.s32.totalorder %s44, %s60
      %p62 = scmp.eq.s32.totalorder %s15, 0
      %p63 = por %p61, %p62
      %s64 = ssub.s32 %s18, %s27
      %s65 = ssub.s32 %s17, %s31
      %s66 = sor.u32 %s64, %s65
      %p67 = scmp.eq.s32.totalorder %s66, 0
      %s69 = sadd.s32 %s68, 1
      %s70 = scalar_select %p67, %s68, %s69
      %p73 = pneg %p67
      %p74 = scmp.eq.s32.totalorder %s9, 1
      %p75 = por %p73, %p74
      %p76 = scmp.ne.s32.totalorder %s68, %s71
      %p77 = scmp.eq.s32.totalorder %s9, 0
      %p78 = por %p76, %p77
      %p79 = scmp.ne.s32.totalorder %s68, %s71
      %p80 = scmp.eq.s32.totalorder %s14, 1
      %p81 = por %p79, %p80
      %p82 = scmp.ne.s32.totalorder %s71, %s72
      %p83 = scmp.eq.s32.totalorder %s14, 0
      %p84 = por %p82, %p83
      %p85 = scmp.ne.s32.totalorder %s71, %s72
      %p86 = scmp.eq.s32.totalorder %s15, 1
      %p87 = por %p85, %p86
      %p89 = scmp.ne.s32.totalorder %s72, %s88
      %p90 = scmp.eq.s32.totalorder %s15, 0
      %p91 = por %p89, %p90
      %s92 = ssub.s32 %s17, %s31
      %p93 = scmp.eq.s32.totalorder %s92, 0
      %s95 = sadd.s32 %s94, 1
      %s96 = scalar_select %p93, %s94, %s95
      %p99 = pneg %p93
      %p100 = scmp.eq.s32.totalorder %s9, 1
      %p101 = por %p99, %p100
      %p102 = scmp.ne.s32.totalorder %s94, %s97
      %p103 = scmp.eq.s32.totalorder %s9, 0
      %p104 = por %p102, %p103
      %p105 = scmp.ne.s32.totalorder %s94, %s97
      %p106 = scmp.eq.s32.totalorder %s14, 1
      %p107 = por %p105, %p106
      %p108 = scmp.ne.s32.totalorder %s97, %s98
      %p109 = scmp.eq.s32.totalorder %s14, 0
      %p110 = por %p108, %p109
      %p111 = scmp.ne.s32.totalorder %s97, %s98
      %p112 = scmp.eq.s32.totalorder %s15, 1
      %p113 = por %p111, %p112
      %p115 = scmp.ne.s32.totalorder %s98, %s114
      %p116 = scmp.eq.s32.totalorder %s15, 0
      %p117 = por %p115, %p116
      %s118 = ssub.s32 %s16, %s35
      %s119 = ssub.s32 %s17, %s31
      %s120 = sor.u32 %s118, %s119
      %p121 = scmp.eq.s32.totalorder %s120, 0
      %s123 = sadd.s32 %s122, 1
      %s124 = scalar_select %p121, %s122, %s123
      %p127 = pneg %p121
      %p128 = scmp.eq.s32.totalorder %s9, 1
      %p129 = por %p127, %p128
      %p130 = scmp.ne.s32.totalorder %s122, %s125
      %p131 = scmp.eq.s32.totalorder %s9, 0
      %p132 = por %p130, %p131
      %p133 = scmp.ne.s32.totalorder %s122, %s125
      %p134 = scmp.eq.s32.totalorder %s14, 1
      %p135 = por %p133, %p134
      %p136 = scmp.ne.s32.totalorder %s125, %s126
      %p137 = scmp.eq.s32.totalorder %s14, 0
      %p138 = por %p136, %p137
      %p139 = scmp.ne.s32.totalorder %s125, %s126
      %p140 = scmp.eq.s32.totalorder %s15, 1
      %p141 = por %p139, %p140
      %p143 = scmp.ne.s32.totalorder %s126, %s142
      %p144 = scmp.eq.s32.totalorder %s15, 0
      %p145 = por %p143, %p144
      %p146 = scmp.le.s32.totalorder 1, %s9
      %p147 = scmp.lt.s32.totalorder %s9, 3
      %p148 = pnand %p146, %p147
      %p149 = pneg %p148
      // Predicated region
      $region9: #{bert_forward.20} parent=5 // pred_check
        _
      $region10: #{bert_forward.20} parent=5 // pred_check_branch
        %151 = sbr.rel (%p148) target = $region12
      $region11: #{bert_forward.20} parent=5 // pred_region
        %s152 = ssub.s32 %s9, 1
        // Predicated region
        $region13: #{bert_forward.20} parent=11 // pred_check
          %p153 = pneg %p56
        $region14: #{bert_forward.20} parent=11 // pred_check_branch
          %155 = sbr.rel (%p153) target = $region16
        $region15: #{bert_forward.20} parent=11 // pred_region
          %s156 = smul.u32 2, %s19
          %p157 = scmp.lt.s32.totalorder %s156, 1
          %s158 = scalar_select %p157, %s156, 1
          %p159 = scmp.lt.s32.totalorder %s21, 0
          %s160 = scalar_select %p159, %s21, 0
          %s161 = sadd.s32 %s160, %s158
          %s162 = smul.addr %s161, 4
          %s163 = scalar_lea.vmem %s0, %s162
          %s164 = smul.u32 2, %s19
        $region16: #{bert_forward.20} parent=11 // pred_fallthru
          _
      $region12: #{bert_forward.20} parent=5 // pred_fallthru
        _
      %p165 = scmp.lt.s32.totalorder %s9, 2
      // Predicated region
      $region17: #{bert_forward.20} parent=5 // pred_check
        %p166 = pneg %p165
      $region18: #{bert_forward.20} parent=5 // pred_check_branch
        %168 = sbr.rel (%p166) target = $region20
      $region19: #{bert_forward.20} parent=5 // pred_region
        // Predicated region
        $region21: #{bert_forward.20} parent=19 // pred_check
          %p169 = pneg %p78
        $region22: #{bert_forward.20} parent=19 // pred_check_branch
          %171 = sbr.rel (%p169) target = $region24
        $region23: #{bert_forward.20} parent=19 // pred_region
          %s172 = sand.u32 %s68, 1
          %s173 = sand.u32 %s68, 1
          %s174 = smul.addr %s173, 128
          %s175 = scalar_lea.vmem [#allocation3], %s174
          %s176 = smul.u32 16, %s18
          %s177 = smul.u32 2, %s17
          %s178 = smul.addr %s176, 4
          %s179 = sadd.s32 %s177, %s178
          %s180 = smul.addr %s179, 4
          %s181 = scalar_lea.vmem %s1, %s180
          // Predicated region
          $region25: #{bert_forward.20} parent=23 // pred_check
            _
          $region26: #{bert_forward.20} parent=23 // pred_check_branch
            %183 = sbr.rel (0) target = $region28
          $region27: #{bert_forward.20} parent=23 // pred_region
            // Predicated region
            $region29: #{bert_forward.20} parent=27 // pred_check
              _
            $region30: #{bert_forward.20} parent=27 // pred_check_branch
              %185 = sbr.rel (0) target = $region32
            $region31: #{bert_forward.20} parent=27 // pred_region
              // Predicated region
              $region44: #{bert_forward.20} parent=31 // pred_check
                _
              $region45: #{bert_forward.20} parent=31 // pred_check_branch
                %231 = sbr.rel (0) target = $region47
              $region46: #{bert_forward.20} parent=31 // pred_region
                loop: start=0, step=1, limit=1
                $region48: #{bert_forward.20} parent=46 // loop_pre_header
                  _
                $region49: #{bert_forward.20} parent=46 // loop_header
                  %s233 = sphi 0, %s237
                  %p234 = scmp.ge.s32.totalorder %s233, 1
                  %s238 = sphi %s181, %s181
                  %s239 = sphi %s175, %s175
                $region50: #{bert_forward.20} parent=46 // loop_header_branch
                  %236 = sbr.rel (%p234) target = $region54
                $region51: #{bert_forward.20} parent=46 // loop_body
                  %v240 = vld [vmem:[%s238] sm:$0xff]
                  %241 = vst [vmem:[%s239] sm:$0xff] %v240
                  %v242 = vld [vmem:[%s238 + $0x10] sm:$0xff]
                  %243 = vst [vmem:[%s239 + $0x8] sm:$0xff] %v242
                  %v244 = vld [vmem:[%s238 + $0x20] sm:$0xff]
                  %245 = vst [vmem:[%s239 + $0x10] sm:$0xff] %v244
                  %v246 = vld [vmem:[%s238 + $0x30] sm:$0xff]
                  %247 = vst [vmem:[%s239 + $0x18] sm:$0xff] %v246
                  %v248 = vld [vmem:[%s238 + $0x40] sm:$0xff]
                  %249 = vst [vmem:[%s239 + $0x20] sm:$0xff] %v248
                  %v250 = vld [vmem:[%s238 + $0x50] sm:$0xff]
                  %251 = vst [vmem:[%s239 + $0x28] sm:$0xff] %v250
                  %v252 = vld [vmem:[%s238 + $0x60] sm:$0xff]
                  %253 = vst [vmem:[%s239 + $0x30] sm:$0xff] %v252
                  %v254 = vld [vmem:[%s238 + $0x70] sm:$0xff]
                  %255 = vst [vmem:[%s239 + $0x38] sm:$0xff] %v254
                  %v256 = vld [vmem:[%s238 + $0x80] sm:$0xff]
                  %257 = vst [vmem:[%s239 + $0x40] sm:$0xff] %v256
                  %v258 = vld [vmem:[%s238 + $0x90] sm:$0xff]
                  %259 = vst [vmem:[%s239 + $0x48] sm:$0xff] %v258
                  %v260 = vld [vmem:[%s238 + $0xa0] sm:$0xff]
                  %261 = vst [vmem:[%s239 + $0x50] sm:$0xff] %v260
                  %v262 = vld [vmem:[%s238 + $0xb0] sm:$0xff]
                  %263 = vst [vmem:[%s239 + $0x58] sm:$0xff] %v262
                  %v264 = vld [vmem:[%s238 + $0xc0] sm:$0xff]
                  %265 = vst [vmem:[%s239 + $0x60] sm:$0xff] %v264
                  %v266 = vld [vmem:[%s238 + $0xd0] sm:$0xff]
                  %267 = vst [vmem:[%s239 + $0x68] sm:$0xff] %v266
                  %v268 = vld [vmem:[%s238 + $0xe0] sm:$0xff]
                  %269 = vst [vmem:[%s239 + $0x70] sm:$0xff] %v268
                  %v270 = vld [vmem:[%s238 + $0xf0] sm:$0xff]
                  %271 = vst [vmem:[%s239 + $0x78] sm:$0xff] %v270
                $region52: #{bert_forward.20} parent=46 // loop_footer
                  %s237 = sadd.s32 1, %s233
                $region53: #{bert_forward.20} parent=46 // loop_footer_branch
                  %232 = sbr.rel target = $region49
                $region54: #{bert_forward.20} parent=46 // loop_exit
                  _
              $region47: #{bert_forward.20} parent=31 // pred_fallthru
                _
              // Predicated region
              $region55: #{bert_forward.20} parent=31 // pred_check
                _
              $region56: #{bert_forward.20} parent=31 // pred_check_branch
                %273 = sbr.rel target = $region58
              $region57: #{bert_forward.20} parent=31 // pred_region
                _
              $region58: #{bert_forward.20} parent=31 // pred_fallthru
                _
            $region32: #{bert_forward.20} parent=27 // pred_fallthru
              _
            // Predicated region
            $region33: #{bert_forward.20} parent=27 // pred_check
              _
            $region34: #{bert_forward.20} parent=27 // pred_check_branch
              %187 = sbr.rel target = $region36
            $region35: #{bert_forward.20} parent=27 // pred_region
              %s189 = ssub.s32 256, 1
              loop: start=0, step=1, limit=1
              $region37: #{bert_forward.20} parent=35 // loop_pre_header
                _
              $region38: #{bert_forward.20} parent=35 // loop_header
                %s191 = sphi 0, %s195
                %p192 = scmp.ge.s32.totalorder %s191, 1
                %s196 = sphi %s181, %s181
                %s197 = sphi %s175, %s175
              $region39: #{bert_forward.20} parent=35 // loop_header_branch
                %194 = sbr.rel (%p192) target = $region43
              $region40: #{bert_forward.20} parent=35 // loop_body
                %v198 = vld [vmem:[%s196] sm:%s189]
                %199 = vst [vmem:[%s197] sm:%s189] %v198
                %v200 = vld [vmem:[%s196 + $0x10] sm:%s189]
                %201 = vst [vmem:[%s197 + $0x8] sm:%s189] %v200
                %v202 = vld [vmem:[%s196 + $0x20] sm:%s189]
                %203 = vst [vmem:[%s197 + $0x10] sm:%s189] %v202
                %v204 = vld [vmem:[%s196 + $0x30] sm:%s189]
                %205 = vst [vmem:[%s197 + $0x18] sm:%s189] %v204
                %v206 = vld [vmem:[%s196 + $0x40] sm:%s189]
                %207 = vst [vmem:[%s197 + $0x20] sm:%s189] %v206
                %v208 = vld [vmem:[%s196 + $0x50] sm:%s189]
                %209 = vst [vmem:[%s197 + $0x28] sm:%s189] %v208
                %v210 = vld [vmem:[%s196 + $0x60] sm:%s189]
                %211 = vst [vmem:[%s197 + $0x30] sm:%s189] %v210
                %v212 = vld [vmem:[%s196 + $0x70] sm:%s189]
                %213 = vst [vmem:[%s197 + $0x38] sm:%s189] %v212
                %v214 = vld [vmem:[%s196 + $0x80] sm:%s189]
                %215 = vst [vmem:[%s197 + $0x40] sm:%s189] %v214
                %v216 = vld [vmem:[%s196 + $0x90] sm:%s189]
                %217 = vst [vmem:[%s197 + $0x48] sm:%s189] %v216
                %v218 = vld [vmem:[%s196 + $0xa0] sm:%s189]
                %219 = vst [vmem:[%s197 + $0x50] sm:%s189] %v218
                %v220 = vld [vmem:[%s196 + $0xb0] sm:%s189]
                %221 = vst [vmem:[%s197 + $0x58] sm:%s189] %v220
                %v222 = vld [vmem:[%s196 + $0xc0] sm:%s189]
                %223 = vst [vmem:[%s197 + $0x60] sm:%s189] %v222
                %v224 = vld [vmem:[%s196 + $0xd0] sm:%s189]
                %225 = vst [vmem:[%s197 + $0x68] sm:%s189] %v224
                %v226 = vld [vmem:[%s196 + $0xe0] sm:%s189]
                %227 = vst [vmem:[%s197 + $0x70] sm:%s189] %v226
                %v228 = vld [vmem:[%s196 + $0xf0] sm:%s189]
                %229 = vst [vmem:[%s197 + $0x78] sm:%s189] %v228
              $region41: #{bert_forward.20} parent=35 // loop_footer
                %s195 = sadd.s32 1, %s191
              $region42: #{bert_forward.20} parent=35 // loop_footer_branch
                %190 = sbr.rel target = $region38
              $region43: #{bert_forward.20} parent=35 // loop_exit
                _
            $region36: #{bert_forward.20} parent=27 // pred_fallthru
              _
          $region28: #{bert_forward.20} parent=23 // pred_fallthru
            _
          %274 = vnop
        $region24: #{bert_forward.20} parent=19 // pred_fallthru
          _
        // Predicated region
        $region59: #{bert_forward.20} parent=19 // pred_check
          %p275 = pneg %p104
        $region60: #{bert_forward.20} parent=19 // pred_check_branch
          %277 = sbr.rel (%p275) target = $region62
        $region61: #{bert_forward.20} parent=19 // pred_region
          %s278 = smul.u32 2, %s17
          %p279 = scmp.lt.s32.totalorder %s278, 3
          %s280 = scalar_select %p279, %s278, 3
          %s281 = scalar_lea.vmem %s2, %s280
          %s282 = smul.u32 2, %s17
        $region62: #{bert_forward.20} parent=19 // pred_fallthru
          _
      $region20: #{bert_forward.20} parent=5 // pred_fallthru
        _
      %p283 = scmp.le.s32.totalorder 1, %s9
      %p284 = scmp.lt.s32.totalorder %s9, 3
      %p285 = pnand %p283, %p284
      %p286 = pneg %p285
      // Predicated region
      $region63: #{bert_forward.20} parent=5 // pred_check
        _
      $region64: #{bert_forward.20} parent=5 // pred_check_branch
        %288 = sbr.rel (%p285) target = $region66
      $region65: #{bert_forward.20} parent=5 // pred_region
        %s289 = ssub.s32 %s9, 1
        %s290 = sand.u32 %s71, 1
        %s291 = sand.u32 %s71, 1
        %s292 = smul.addr %s291, 128
        %s293 = scalar_lea.vmem [#allocation3], %s292
        // Predicated region
        $region67: #{bert_forward.20} parent=65 // pred_check
          %p294 = pneg %p84
        $region68: #{bert_forward.20} parent=65 // pred_check_branch
          %296 = sbr.rel (%p294) target = $region70
        $region69: #{bert_forward.20} parent=65 // pred_region
          _
        $region70: #{bert_forward.20} parent=65 // pred_fallthru
          _
        %s297 = smul.u32 2, %s19
        %p298 = scmp.lt.s32.totalorder %s297, 1
        %s299 = scalar_select %p298, %s297, 1
        %p300 = scmp.lt.s32.totalorder %s21, 0
        %s301 = scalar_select %p300, %s21, 0
        %s302 = sadd.s32 %s301, %s299
        %s303 = smul.addr %s302, 4
        %s304 = scalar_lea.vmem %s0, %s303
        %p305 = pneg %p56
        %p306 = pneg %p53
        %s307 = sand.u32 %s71, 1
        %s308 = sand.u32 %s71, 1
        %s309 = smul.addr %s308, 128
        %s310 = scalar_lea.vmem [#allocation3], %s309
        %p311 = pneg %p84
        %p312 = pneg %p81
        %s313 = smul.u32 2, %s20
        %p314 = scmp.lt.s32.totalorder %s313, 3
        %s315 = scalar_select %p314, %s313, 3
        %s316 = scalar_lea.vmem %s2, %s315
        %p317 = pneg %p110
        %p318 = pneg %p107
        %p319 = pneg %p138
        %p320 = pneg %p135
        %s321 = sand.u32 %s125, 1
        %s322 = sand.u32 %s125, 1
        %s323 = smul.addr %s322, 16
        %s324 = scalar_lea.vmem [#allocation4], %s323
        %s325 = smul.u32 2, %s19
        %p326 = scmp.lt.s32.totalorder %s325, 1
        %s327 = scalar_select %p326, %s325, 1
        %p328 = scmp.lt.s32.totalorder %s21, 0
        %s329 = scalar_select %p328, %s21, 0
        %s330 = sadd.s32 %s329, %s327
        %s331 = smul.addr %s330, 4
        %s332 = scalar_lea.vmem %s0, %s331
        %s333 = smul.u32 2, %s19
        %s334 = smul.u32 16, %s21
        %s335 = smul.u32 2, %s20
        %s336 = smul.u32 2, %s20
        %p337 = scmp.lt.s32.totalorder %s336, 3
        %s338 = scalar_select %p337, %s336, 3
        %s339 = scalar_lea.vmem %s2, %s338
        %s340 = smul.u32 2, %s20
        %s341 = smul.u32 2, %s19
        %s342 = smul.u32 2, %s20
        %p344 = scmp.eq.s32.totalorder %s21, 0
        // Predicated region
        $region71: #{bert_forward.20} parent=65 // pred_check
          %p345 = pneg %p344
        $region72: #{bert_forward.20} parent=65 // pred_check_branch
          %347 = sbr.rel (%p345) target = $region74
        $region73: #{bert_forward.20} parent=65 // pred_region
          %348 = vst [vmem:[#allocation2] sm:$0xff] 0.0
          %349 = vst [vmem:[#allocation2 + $0x8] sm:$0xff] 0.0
          %350 = vst [vmem:[#allocation2 + $0x10] sm:$0xff] 0.0
          %351 = vst [vmem:[#allocation2 + $0x18] sm:$0xff] 0.0
        $region74: #{bert_forward.20} parent=65 // pred_fallthru
          _
        %v352 = vld [vmem:[#allocation2] sm:$0xff]
        %v353 = vld [vmem:[#allocation2 + $0x8] sm:$0xff]
        %v354 = vld [vmem:[#allocation2 + $0x10] sm:$0xff]
        %v355 = vld [vmem:[#allocation2 + $0x18] sm:$0xff]
        %v356 = vld [vmem:[%s332] sm:$0xf]
        %v357 = vld [vmem:[%s332 + $0x4] sm:$0xf]
        %v358 = vld [vmem:[%s293] sm:$0xff]
        %v359 = vld [vmem:[%s293 + $0x8] sm:$0xff]
        %v360 = vld [vmem:[%s293 + $0x10] sm:$0xff]
        %v361 = vld [vmem:[%s293 + $0x18] sm:$0xff]
        %v362 = vld [vmem:[%s293 + $0x20] sm:$0xff]
        %v363 = vld [vmem:[%s293 + $0x28] sm:$0xff]
        %v364 = vld [vmem:[%s293 + $0x30] sm:$0xff]
        %v365 = vld [vmem:[%s293 + $0x38] sm:$0xff]
        %v366 = vld [vmem:[%s293 + $0x40] sm:$0xff]
        %v367 = vld [vmem:[%s293 + $0x48] sm:$0xff]
        %v368 = vld [vmem:[%s293 + $0x50] sm:$0xff]
        %v369 = vld [vmem:[%s293 + $0x58] sm:$0xff]
        %v370 = vld [vmem:[%s293 + $0x60] sm:$0xff]
        %v371 = vld [vmem:[%s293 + $0x68] sm:$0xff]
        %v372 = vld [vmem:[%s293 + $0x70] sm:$0xff]
        %v373 = vld [vmem:[%s293 + $0x78] sm:$0xff]
        %v376 = vunpack.c.l.b16 %v356
        %v377 = vunpack.c.l.b16 %v357
        %v378 = vpack.c.b16 %v377, %v376
        %v396 = vunpack.c.l.b16 %v358
        %v397 = vunpack.c.h.b16 %v358
        %v398 = vunpack.c.l.b16 %v359
        %v399 = vunpack.c.h.b16 %v359
        %v400 = vunpack.c.l.b16 %v360
        %v401 = vunpack.c.h.b16 %v360
        %v402 = vunpack.c.l.b16 %v361
        %v403 = vunpack.c.h.b16 %v361
        %v404 = vunpack.c.l.b16 %v362
        %v405 = vunpack.c.h.b16 %v362
        %v406 = vunpack.c.l.b16 %v363
        %v407 = vunpack.c.h.b16 %v363
        %v408 = vunpack.c.l.b16 %v364
        %v409 = vunpack.c.h.b16 %v364
        %v410 = vunpack.c.l.b16 %v365
        %v411 = vunpack.c.h.b16 %v365
        %v412 = vunpack.c.l.b16 %v366
        %v413 = vunpack.c.h.b16 %v366
        %v414 = vunpack.c.l.b16 %v367
        %v415 = vunpack.c.h.b16 %v367
        %v416 = vunpack.c.l.b16 %v368
        %v417 = vunpack.c.h.b16 %v368
        %v418 = vunpack.c.l.b16 %v369
        %v419 = vunpack.c.h.b16 %v369
        %v420 = vunpack.c.l.b16 %v370
        %v421 = vunpack.c.h.b16 %v370
        %v422 = vunpack.c.l.b16 %v371
        %v423 = vunpack.c.h.b16 %v371
        %v424 = vunpack.c.l.b16 %v372
        %v425 = vunpack.c.h.b16 %v372
        %v426 = vunpack.c.l.b16 %v373
        %v427 = vunpack.c.h.b16 %v373
        %v428 = vpack.c.b16 %v398, %v396
        %v429 = vpack.c.b16 %v399, %v397
        %v430 = vpack.c.b16 %v402, %v400
        %v431 = vpack.c.b16 %v403, %v401
        %v432 = vpack.c.b16 %v406, %v404
        %v433 = vpack.c.b16 %v407, %v405
        %v434 = vpack.c.b16 %v410, %v408
        %v435 = vpack.c.b16 %v411, %v409
        %v436 = vpack.c.b16 %v414, %v412
        %v437 = vpack.c.b16 %v415, %v413
        %v438 = vpack.c.b16 %v418, %v416
        %v439 = vpack.c.b16 %v419, %v417
        %v440 = vpack.c.b16 %v422, %v420
        %v441 = vpack.c.b16 %v423, %v421
        %v442 = vpack.c.b16 %v426, %v424
        %v443 = vpack.c.b16 %v427, %v425
        %460 = vmatprep.subr.bf16.mxu0 %v443
        %461 = vmatpush1.bf16.msra.mxu0 %v442
        %462 = vmatprep.subr.bf16.mxu0 %v441
        %463 = vmatpush1.bf16.msra.mxu0 %v440
        %464 = vmatprep.subr.bf16.mxu0 %v439
        %465 = vmatpush1.bf16.msra.mxu0 %v438
        %466 = vmatprep.subr.bf16.mxu0 %v437
        %467 = vmatpush1.bf16.msra.mxu0 %v436
        %468 = vmatprep.subr.bf16.mxu0 %v435
        %469 = vmatpush1.bf16.msra.mxu0 %v434
        %470 = vmatprep.subr.bf16.mxu0 %v433
        %471 = vmatpush1.bf16.msra.mxu0 %v432
        %472 = vmatprep.subr.bf16.mxu0 %v431
        %473 = vmatpush1.bf16.msra.mxu0 %v430
        %474 = vmatprep.subr.bf16.mxu0 %v429
        %475 = vmatpush1.bf16.msra.mxu0 %v428
        %476 = vmatprep.subr.bf16.mxu0 0
        %477 = vmatpush2.bf16.msra.mxu0 0
        %478 = vmatprep.subr.bf16.mxu0 0
        %479 = vmatpush2.bf16.msra.mxu0 0
        %480 = vmatprep.subr.bf16.mxu0 0
        %481 = vmatpush2.bf16.msra.mxu0 0
        %482 = vmatprep.subr.bf16.mxu0 0
        %483 = vmatpush2.bf16.msra.mxu0 0
        %484 = vmatprep.subr.bf16.mxu0 0
        %485 = vmatpush2.bf16.msra.mxu0 0
        %486 = vmatprep.subr.bf16.mxu0 0
        %487 = vmatpush2.bf16.msra.mxu0 0
        %488 = vmatprep.subr.bf16.mxu0 0
        %489 = vmatpush2.bf16.msra.mxu0 0
        %490 = vmatprep.subr.bf16.mxu0 0
        %491 = vmatpush2.bf16.msra.mxu0 0
        %492 = vmatprep.mubr.bf16.mxu0 0
        %493 = vmatmul.mubr.bf16.gmra.mxu0 %v378
        %v494 = vpop.f32.mrf.mxu0
        %v495 = vadd.f32 0.0, %v494
        %v496 = vpop.f32.mrf.mxu0
        %v497 = vadd.f32 0.0, %v496
        %v498 = vpop.f32.mrf.mxu0
        %v499 = vadd.f32 0.0, %v498
        %v500 = vpop.f32.mrf.mxu0
        %v501 = vadd.f32 0.0, %v500
        %502 = vdwg.mxu0
        %v503 = vadd.f32 %v352, %v495
        %v504 = vadd.f32 %v353, %v497
        %v505 = vadd.f32 %v354, %v499
        %v506 = vadd.f32 %v355, %v501
        %507 = vst [vmem:[#allocation2] sm:$0xff] %v503
        %508 = vst [vmem:[#allocation2 + $0x8] sm:$0xff] %v504
        %509 = vst [vmem:[#allocation2 + $0x10] sm:$0xff] %v505
        %510 = vst [vmem:[#allocation2 + $0x18] sm:$0xff] %v506
        // Predicated region
        $region75: #{bert_forward.20} parent=65 // pred_check
          %p511 = pneg %p344
        $region76: #{bert_forward.20} parent=65 // pred_check_branch
          %513 = sbr.rel (%p511) target = $region78
        $region77: #{bert_forward.20} parent=65 // pred_region
          %v514 = vld [vmem:[#allocation2] sm:$0xff]
          %v515 = vld [vmem:[#allocation2 + $0x8] sm:$0xff]
          %v516 = vld [vmem:[#allocation2 + $0x10] sm:$0xff]
          %v517 = vld [vmem:[#allocation2 + $0x18] sm:$0xff]
          %v518 = vld [vmem:[%s339] sm:$0x3]
          %v520 = vlaneseq
          %v521 = vshrl.u32 %v520, 7
          %v522 = vsub.s32 0, %v521
          %v523 = vrot.slane %v518, %v522
          %v524 = vlaneseq
          %v525 = vshrl.u32 %v524, 7
          %v526 = vsub.s32 1, %v525
          %v527 = vrot.slane %v518, %v526
          %v530 = vadd.f32 %v514, %v523
          %v531 = vadd.f32 %v515, %v527
          %v532 = vadd.f32 %v516, %v523
          %v533 = vadd.f32 %v517, %v527
          %v534 = vmul.f32 %v530, 0.5
          %v535 = vmul.f32 %v531, 0.5
          %v536 = vmul.f32 %v532, 0.5
          %v537 = vmul.f32 %v533, 0.5
          %v538 = vmul.f32 %v530, 0.70710677
          %v539 = vmul.f32 %v531, 0.70710677
          %v540 = vmul.f32 %v532, 0.70710677
          %v541 = vmul.f32 %v533, 0.70710677
          %v542 = verf.f32.pop %v538
          %v543 = verf.f32.pop %v539
          %v544 = verf.f32.pop %v540
          %v545 = verf.f32.pop %v541
          %v546 = vadd.f32 %v542, 1.0
          %v547 = vadd.f32 %v543, 1.0
          %v548 = vadd.f32 %v544, 1.0
          %v549 = vadd.f32 %v545, 1.0
          %v550 = vmul.f32 %v534, %v546
          %v551 = vmul.f32 %v535, %v547
          %v552 = vmul.f32 %v536, %v548
          %v553 = vmul.f32 %v537, %v549
          %v554 = vpack.c.bf16 %v552, %v550
          %v555 = vpack.c.bf16 %v553, %v551
          %v558 = vunpack.c.l.b16 %v554
          %v559 = vunpack.c.l.b16 %v555
          %v560 = vunpack.c.h.b16 %v554
          %v561 = vunpack.c.h.b16 %v555
          %v562 = vpack.c.b16 %v559, %v558
          %v563 = vpack.c.b16 %v561, %v560
          %566 = vst [vmem:[%s324] sm:$0xff] %v562
          %567 = vst [vmem:[%s324 + $0x8] sm:$0xff] %v563
        $region78: #{bert_forward.20} parent=65 // pred_fallthru
          _
        %s568 = sand.u32 %s125, 1
        %s569 = sand.u32 %s125, 1
        %s570 = smul.addr %s569, 16
        %s571 = scalar_lea.vmem [#allocation4], %s570
        // Predicated region
        $region79: #{bert_forward.20} parent=65 // pred_check
          %p572 = pneg %p135
        $region80: #{bert_forward.20} parent=65 // pred_check_branch
          %574 = sbr.rel (%p572) target = $region82
        $region81: #{bert_forward.20} parent=65 // pred_region
          %s575 = smul.u32 2, %s19
          %s576 = smul.u32 2, %s20
          %s577 = smul.addr %s575, 4
          %s578 = sadd.s32 %s576, %s577
          %s579 = smul.addr %s578, 4
          %s580 = scalar_lea.vmem %s3, %s579
          // Predicated region
          $region83: #{bert_forward.20} parent=81 // pred_check
            _
          $region84: #{bert_forward.20} parent=81 // pred_check_branch
            %582 = sbr.rel (0) target = $region86
          $region85: #{bert_forward.20} parent=81 // pred_region
            // Predicated region
            $region87: #{bert_forward.20} parent=85 // pred_check
              _
            $region88: #{bert_forward.20} parent=85 // pred_check_branch
              %584 = sbr.rel (0) target = $region90
            $region89: #{bert_forward.20} parent=85 // pred_region
              // Predicated region
              $region102: #{bert_forward.20} parent=89 // pred_check
                _
              $region103: #{bert_forward.20} parent=89 // pred_check_branch
                %602 = sbr.rel (0) target = $region105
              $region104: #{bert_forward.20} parent=89 // pred_region
                loop: start=0, step=1, limit=1
                $region106: #{bert_forward.20} parent=104 // loop_pre_header
                  _
                $region107: #{bert_forward.20} parent=104 // loop_header
                  %s604 = sphi 0, %s608
                  %p605 = scmp.ge.s32.totalorder %s604, 1
                  %s609 = sphi %s571, %s571
                  %s610 = sphi %s580, %s580
                $region108: #{bert_forward.20} parent=104 // loop_header_branch
                  %607 = sbr.rel (%p605) target = $region112
                $region109: #{bert_forward.20} parent=104 // loop_body
                  %v611 = vld [vmem:[%s609] sm:$0xff]
                  %612 = vst [vmem:[%s610] sm:$0xff] %v611
                  %v613 = vld [vmem:[%s609 + $0x8] sm:$0xff]
                  %614 = vst [vmem:[%s610 + $0x10] sm:$0xff] %v613
                $region110: #{bert_forward.20} parent=104 // loop_footer
                  %s608 = sadd.s32 1, %s604
                $region111: #{bert_forward.20} parent=104 // loop_footer_branch
                  %603 = sbr.rel target = $region107
                $region112: #{bert_forward.20} parent=104 // loop_exit
                  _
              $region105: #{bert_forward.20} parent=89 // pred_fallthru
                _
              // Predicated region
              $region113: #{bert_forward.20} parent=89 // pred_check
                _
              $region114: #{bert_forward.20} parent=89 // pred_check_branch
                %616 = sbr.rel target = $region116
              $region115: #{bert_forward.20} parent=89 // pred_region
                _
              $region116: #{bert_forward.20} parent=89 // pred_fallthru
                _
            $region90: #{bert_forward.20} parent=85 // pred_fallthru
              _
            // Predicated region
            $region91: #{bert_forward.20} parent=85 // pred_check
              _
            $region92: #{bert_forward.20} parent=85 // pred_check_branch
              %586 = sbr.rel target = $region94
            $region93: #{bert_forward.20} parent=85 // pred_region
              %s588 = ssub.s32 256, 1
              loop: start=0, step=1, limit=1
              $region95: #{bert_forward.20} parent=93 // loop_pre_header
                _
              $region96: #{bert_forward.20} parent=93 // loop_header
                %s590 = sphi 0, %s594
                %p591 = scmp.ge.s32.totalorder %s590, 1
                %s595 = sphi %s571, %s571
                %s596 = sphi %s580, %s580
              $region97: #{bert_forward.20} parent=93 // loop_header_branch
                %593 = sbr.rel (%p591) target = $region101
              $region98: #{bert_forward.20} parent=93 // loop_body
                %v597 = vld [vmem:[%s595] sm:%s588]
                %598 = vst [vmem:[%s596] sm:%s588] %v597
                %v599 = vld [vmem:[%s595 + $0x8] sm:%s588]
                %600 = vst [vmem:[%s596 + $0x10] sm:%s588] %v599
              $region99: #{bert_forward.20} parent=93 // loop_footer
                %s594 = sadd.s32 1, %s590
              $region100: #{bert_forward.20} parent=93 // loop_footer_branch
                %589 = sbr.rel target = $region96
              $region101: #{bert_forward.20} parent=93 // loop_exit
                _
            $region94: #{bert_forward.20} parent=85 // pred_fallthru
              _
          $region86: #{bert_forward.20} parent=81 // pred_fallthru
            _
          %617 = vnop
        $region82: #{bert_forward.20} parent=65 // pred_fallthru
          _
      $region66: #{bert_forward.20} parent=5 // pred_fallthru
        _
      %p618 = scmp.le.s32.totalorder 2, %s9
      // Predicated region
      $region117: #{bert_forward.20} parent=5 // pred_check
        %p619 = pneg %p618
      $region118: #{bert_forward.20} parent=5 // pred_check_branch
        %621 = sbr.rel (%p619) target = $region120
      $region119: #{bert_forward.20} parent=5 // pred_region
        %s622 = ssub.s32 %s9, 2
        // Predicated region
        $region121: #{bert_forward.20} parent=119 // pred_check
          %p623 = pneg %p141
        $region122: #{bert_forward.20} parent=119 // pred_check_branch
          %625 = sbr.rel (%p623) target = $region124
        $region123: #{bert_forward.20} parent=119 // pred_region
          %s626 = sand.u32 %s126, 1
          %s627 = sand.u32 %s126, 1
          %s628 = smul.addr %s627, 16
          %s629 = scalar_lea.vmem [#allocation4], %s628
        $region124: #{bert_forward.20} parent=119 // pred_fallthru
          _
      $region120: #{bert_forward.20} parent=5 // pred_fallthru
        _
    $region6: #{bert_forward.20} parent=1 // loop_footer
      %s13 = sadd.s32 1, %s9
    $region7: #{bert_forward.20} parent=1 // loop_footer_branch
      %8 = sbr.rel target = $region3
    $region8: #{bert_forward.20} parent=1 // loop_exit
      _

// kernel: bert_forward.21
$region0: #{bert_forward.21}
  #allocation0 [shape = 'u32[]', space=smem, size = 0x4, offset = 0x4, fixed_abs, tag = 'smem constant byte address 0x4 - core index']
  #allocation1 [shape = 'u32[144,128]{1,0:T(1,128)}', space=vmem, size = 0x12000, scoped, tag = 'internal scratch']
  #allocation2 [shape = 'f32[16,128]{1,0:T(8,128)}', space=vmem, size = 0x2000, scoped, tag = 'scratch operand']
  %s0 = inlined_call_operand.vmem [shape: bf16[16,512], index: 0, kind: input, shape index: {}]
  %s1 = inlined_call_operand.vmem [shape: bf16[512,128], index: 1, kind: input, shape index: {}]
  %s2 = inlined_call_operand.vmem [shape: f32[1,128], index: 2, kind: input, shape index: {}]
  %s3 = inlined_call_operand.vmem [shape: bf16[16,128], index: 3, kind: output, shape index: {}]
  %s4 = sld [smem:[#allocation0]]
  $region30: #{bert_forward.21} parent=0
    _
  %s6 = ssub.s32 1, %s4
  %s7 = scalar_select 0, %s6, %s4
  // Predicated region
  $region2: #{bert_forward.21} parent=0 // pred_check
    _
  $region3: #{bert_forward.21} parent=0 // pred_check_branch
    %9 = sbr.rel (0) target = $region5
  $region4: #{bert_forward.21} parent=0 // pred_region
    _
  $region5: #{bert_forward.21} parent=0 // pred_fallthru
    _
  // Predicated region
  $region6: #{bert_forward.21} parent=0 // pred_check
    _
  $region7: #{bert_forward.21} parent=0 // pred_check_branch
    %11 = sbr.rel (0) target = $region9
  $region8: #{bert_forward.21} parent=0 // pred_region
    _
  $region9: #{bert_forward.21} parent=0 // pred_fallthru
    _
  // Predicated region
  $region10: #{bert_forward.21} parent=0 // pred_check
    _
  $region11: #{bert_forward.21} parent=0 // pred_check_branch
    %13 = sbr.rel (0) target = $region13
  $region12: #{bert_forward.21} parent=0 // pred_region
    _
  $region13: #{bert_forward.21} parent=0 // pred_fallthru
    _
  %p15 = scmp.eq.s32.totalorder 0, 0
  // Predicated region
  $region14: #{bert_forward.21} parent=0 // pred_check
    %p16 = pneg %p15
  $region15: #{bert_forward.21} parent=0 // pred_check_branch
    %18 = sbr.rel (%p16) target = $region17
  $region16: #{bert_forward.21} parent=0 // pred_region
    %19 = vst [vmem:[#allocation2] sm:$0xff] 0.0
    %20 = vst [vmem:[#allocation2 + $0x8] sm:$0xff] 0.0
  $region17: #{bert_forward.21} parent=0 // pred_fallthru
    _
  %v21 = vld [vmem:[#allocation2] sm:$0xff]
  %v22 = vld [vmem:[#allocation2 + $0x8] sm:$0xff]
  %v23 = vld [vmem:[%s0] sm:$0xff]
  %v24 = vld [vmem:[%s0 + $0x8] sm:$0xff]
  %v25 = vld [vmem:[%s0 + $0x10] sm:$0xff]
  %v26 = vld [vmem:[%s0 + $0x18] sm:$0xff]
  %v27 = vld [vmem:[%s1] sm:$0xf]
  %v28 = vld [vmem:[%s1 + $0x4] sm:$0xf]
  %v29 = vld [vmem:[%s1 + $0x8] sm:$0xf]
  %v30 = vld [vmem:[%s1 + $0xc] sm:$0xf]
  %v31 = vld [vmem:[%s1 + $0x10] sm:$0xf]
  %v32 = vld [vmem:[%s1 + $0x14] sm:$0xf]
  %v33 = vld [vmem:[%s1 + $0x18] sm:$0xf]
  %v34 = vld [vmem:[%s1 + $0x1c] sm:$0xf]
  %v35 = vld [vmem:[%s1 + $0x20] sm:$0xf]
  %v36 = vld [vmem:[%s1 + $0x24] sm:$0xf]
  %v37 = vld [vmem:[%s1 + $0x28] sm:$0xf]
  %v38 = vld [vmem:[%s1 + $0x2c] sm:$0xf]
  %v39 = vld [vmem:[%s1 + $0x30] sm:$0xf]
  %v40 = vld [vmem:[%s1 + $0x34] sm:$0xf]
  %v41 = vld [vmem:[%s1 + $0x38] sm:$0xf]
  %v42 = vld [vmem:[%s1 + $0x3c] sm:$0xf]
  %v43 = vld [vmem:[%s1 + $0x40] sm:$0xf]
  %v44 = vld [vmem:[%s1 + $0x44] sm:$0xf]
  %v45 = vld [vmem:[%s1 + $0x48] sm:$0xf]
  %v46 = vld [vmem:[%s1 + $0x4c] sm:$0xf]
  %v47 = vld [vmem:[%s1 + $0x50] sm:$0xf]
  %v48 = vld [vmem:[%s1 + $0x54] sm:$0xf]
  %v49 = vld [vmem:[%s1 + $0x58] sm:$0xf]
  %v50 = vld [vmem:[%s1 + $0x5c] sm:$0xf]
  %v51 = vld [vmem:[%s1 + $0x60] sm:$0xf]
  %v52 = vld [vmem:[%s1 + $0x64] sm:$0xf]
  %v53 = vld [vmem:[%s1 + $0x68] sm:$0xf]
  %v54 = vld [vmem:[%s1 + $0x6c] sm:$0xf]
  %v55 = vld [vmem:[%s1 + $0x70] sm:$0xf]
  %v56 = vld [vmem:[%s1 + $0x74] sm:$0xf]
  %v57 = vld [vmem:[%s1 + $0x78] sm:$0xf]
  %v58 = vld [vmem:[%s1 + $0x7c] sm:$0xf]
  %v59 = vld [vmem:[%s1 + $0x80] sm:$0xf]
  %v60 = vld [vmem:[%s1 + $0x84] sm:$0xf]
  %v61 = vld [vmem:[%s1 + $0x88] sm:$0xf]
  %v62 = vld [vmem:[%s1 + $0x8c] sm:$0xf]
  %v63 = vld [vmem:[%s1 + $0x90] sm:$0xf]
  %v64 = vld [vmem:[%s1 + $0x94] sm:$0xf]
  %v65 = vld [vmem:[%s1 + $0x98] sm:$0xf]
  %v66 = vld [vmem:[%s1 + $0x9c] sm:$0xf]
  %v67 = vld [vmem:[%s1 + $0xa0] sm:$0xf]
  %v68 = vld [vmem:[%s1 + $0xa4] sm:$0xf]
  %v69 = vld [vmem:[%s1 + $0xa8] sm:$0xf]
  %v70 = vld [vmem:[%s1 + $0xac] sm:$0xf]
  %v71 = vld [vmem:[%s1 + $0xb0] sm:$0xf]
  %v72 = vld [vmem:[%s1 + $0xb4] sm:$0xf]
  %v73 = vld [vmem:[%s1 + $0xb8] sm:$0xf]
  %v74 = vld [vmem:[%s1 + $0xbc] sm:$0xf]
  %v75 = vld [vmem:[%s1 + $0xc0] sm:$0xf]
  %v76 = vld [vmem:[%s1 + $0xc4] sm:$0xf]
  %v77 = vld [vmem:[%s1 + $0xc8] sm:$0xf]
  %v78 = vld [vmem:[%s1 + $0xcc] sm:$0xf]
  %v79 = vld [vmem:[%s1 + $0xd0] sm:$0xf]
  %v80 = vld [vmem:[%s1 + $0xd4] sm:$0xf]
  %v81 = vld [vmem:[%s1 + $0xd8] sm:$0xf]
  %v82 = vld [vmem:[%s1 + $0xdc] sm:$0xf]
  %v83 = vld [vmem:[%s1 + $0xe0] sm:$0xf]
  %v84 = vld [vmem:[%s1 + $0xe4] sm:$0xf]
  %v85 = vld [vmem:[%s1 + $0xe8] sm:$0xf]
  %v86 = vld [vmem:[%s1 + $0xec] sm:$0xf]
  %v87 = vld [vmem:[%s1 + $0xf0] sm:$0xf]
  %v88 = vld [vmem:[%s1 + $0xf4] sm:$0xf]
  %v89 = vld [vmem:[%s1 + $0xf8] sm:$0xf]
  %v90 = vld [vmem:[%s1 + $0xfc] sm:$0xf]
  %v95 = vunpack.c.l.b16 %v23
  %v96 = vunpack.c.h.b16 %v23
  %v97 = vunpack.c.l.b16 %v24
  %v98 = vunpack.c.h.b16 %v24
  %v99 = vunpack.c.l.b16 %v25
  %v100 = vunpack.c.h.b16 %v25
  %v101 = vunpack.c.l.b16 %v26
  %v102 = vunpack.c.h.b16 %v26
  %v103 = vpack.c.b16 %v99, %v95
  %v104 = vpack.c.b16 %v100, %v96
  %v105 = vpack.c.b16 %v101, %v97
  %v106 = vpack.c.b16 %v102, %v98
  %v175 = vunpack.c.l.b16 %v27
  %v176 = vunpack.c.l.b16 %v28
  %v177 = vunpack.c.l.b16 %v29
  %v178 = vunpack.c.l.b16 %v30
  %v179 = vunpack.c.l.b16 %v31
  %v180 = vunpack.c.l.b16 %v32
  %v181 = vunpack.c.l.b16 %v33
  %v182 = vunpack.c.l.b16 %v34
  %v183 = vunpack.c.l.b16 %v35
  %v184 = vunpack.c.l.b16 %v36
  %v185 = vunpack.c.l.b16 %v37
  %v186 = vunpack.c.l.b16 %v38
  %v187 = vunpack.c.l.b16 %v39
  %v188 = vunpack.c.l.b16 %v40
  %v189 = vunpack.c.l.b16 %v41
  %v190 = vunpack.c.l.b16 %v42
  %v191 = vunpack.c.l.b16 %v43
  %v192 = vunpack.c.l.b16 %v44
  %v193 = vunpack.c.l.b16 %v45
  %v194 = vunpack.c.l.b16 %v46
  %v195 = vunpack.c.l.b16 %v47
  %v196 = vunpack.c.l.b16 %v48
  %v197 = vunpack.c.l.b16 %v49
  %v198 = vunpack.c.l.b16 %v50
  %v199 = vunpack.c.l.b16 %v51
  %v200 = vunpack.c.l.b16 %v52
  %v201 = vunpack.c.l.b16 %v53
  %v202 = vunpack.c.l.b16 %v54
  %v203 = vunpack.c.l.b16 %v55
  %v204 = vunpack.c.l.b16 %v56
  %v205 = vunpack.c.l.b16 %v57
  %v206 = vunpack.c.l.b16 %v58
  %v207 = vunpack.c.l.b16 %v59
  %v208 = vunpack.c.l.b16 %v60
  %v209 = vunpack.c.l.b16 %v61
  %v210 = vunpack.c.l.b16 %v62
  %v211 = vunpack.c.l.b16 %v63
  %v212 = vunpack.c.l.b16 %v64
  %v213 = vunpack.c.l.b16 %v65
  %v214 = vunpack.c.l.b16 %v66
  %v215 = vunpack.c.l.b16 %v67
  %v216 = vunpack.c.l.b16 %v68
  %v217 = vunpack.c.l.b16 %v69
  %v218 = vunpack.c.l.b16 %v70
  %v219 = vunpack.c.l.b16 %v71
  %v220 = vunpack.c.l.b16 %v72
  %v221 = vunpack.c.l.b16 %v73
  %v222 = vunpack.c.l.b16 %v74
  %v223 = vunpack.c.l.b16 %v75
  %v224 = vunpack.c.l.b16 %v76
  %v225 = vunpack.c.l.b16 %v77
  %v226 = vunpack.c.l.b16 %v78
  %v227 = vunpack.c.l.b16 %v79
  %v228 = vunpack.c.l.b16 %v80
  %v229 = vunpack.c.l.b16 %v81
  %v230 = vunpack.c.l.b16 %v82
  %v231 = vunpack.c.l.b16 %v83
  %v232 = vunpack.c.l.b16 %v84
  %v233 = vunpack.c.l.b16 %v85
  %v234 = vunpack.c.l.b16 %v86
  %v235 = vunpack.c.l.b16 %v87
  %v236 = vunpack.c.l.b16 %v88
  %v237 = vunpack.c.l.b16 %v89
  %v238 = vunpack.c.l.b16 %v90
  %v239 = vpack.c.b16 %v176, %v175
  %v240 = vpack.c.b16 %v178, %v177
  %v241 = vpack.c.b16 %v180, %v179
  %v242 = vpack.c.b16 %v182, %v181
  %v243 = vpack.c.b16 %v184, %v183
  %v244 = vpack.c.b16 %v186, %v185
  %v245 = vpack.c.b16 %v188, %v187
  %v246 = vpack.c.b16 %v190, %v189
  %v247 = vpack.c.b16 %v192, %v191
  %v248 = vpack.c.b16 %v194, %v193
  %v249 = vpack.c.b16 %v196, %v195
  %v250 = vpack.c.b16 %v198, %v197
  %v251 = vpack.c.b16 %v200, %v199
  %v252 = vpack.c.b16 %v202, %v201
  %v253 = vpack.c.b16 %v204, %v203
  %v254 = vpack.c.b16 %v206, %v205
  %v255 = vpack.c.b16 %v208, %v207
  %v256 = vpack.c.b16 %v210, %v209
  %v257 = vpack.c.b16 %v212, %v211
  %v258 = vpack.c.b16 %v214, %v213
  %v259 = vpack.c.b16 %v216, %v215
  %v260 = vpack.c.b16 %v218, %v217
  %v261 = vpack.c.b16 %v220, %v219
  %v262 = vpack.c.b16 %v222, %v221
  %v263 = vpack.c.b16 %v224, %v223
  %v264 = vpack.c.b16 %v226, %v225
  %v265 = vpack.c.b16 %v228, %v227
  %v266 = vpack.c.b16 %v230, %v229
  %v267 = vpack.c.b16 %v232, %v231
  %v268 = vpack.c.b16 %v234, %v233
  %v269 = vpack.c.b16 %v236, %v235
  %v270 = vpack.c.b16 %v238, %v237
  %303 = vmatprep.subr.bf16.mxu0 0
  %304 = vmatpush1.bf16.msra.mxu0 %v246
  %305 = vmatprep.subr.bf16.mxu0 0
  %306 = vmatpush1.bf16.msra.mxu0 %v245
  %307 = vmatprep.subr.bf16.mxu0 0
  %308 = vmatpush1.bf16.msra.mxu0 %v244
  %309 = vmatprep.subr.bf16.mxu0 0
  %310 = vmatpush1.bf16.msra.mxu0 %v243
  %311 = vmatprep.subr.bf16.mxu0 0
  %312 = vmatpush1.bf16.msra.mxu0 %v242
  %313 = vmatprep.subr.bf16.mxu0 0
  %314 = vmatpush1.bf16.msra.mxu0 %v241
  %315 = vmatprep.subr.bf16.mxu0 0
  %316 = vmatpush1.bf16.msra.mxu0 %v240
  %317 = vmatprep.subr.bf16.mxu0 0
  %318 = vmatpush1.bf16.msra.mxu0 %v239
  %319 = vmatprep.subr.bf16.mxu0 0
  %320 = vmatpush2.bf16.msra.mxu0 %v254
  %321 = vmatprep.subr.bf16.mxu0 0
  %322 = vmatpush2.bf16.msra.mxu0 %v253
  %323 = vmatprep.subr.bf16.mxu0 0
  %324 = vmatpush2.bf16.msra.mxu0 %v252
  %325 = vmatprep.subr.bf16.mxu0 0
  %326 = vmatpush2.bf16.msra.mxu0 %v251
  %327 = vmatprep.subr.bf16.mxu0 0
  %328 = vmatpush2.bf16.msra.mxu0 %v250
  %329 = vmatprep.subr.bf16.mxu0 0
  %330 = vmatpush2.bf16.msra.mxu0 %v249
  %331 = vmatprep.subr.bf16.mxu0 0
  %332 = vmatpush2.bf16.msra.mxu0 %v248
  %333 = vmatprep.subr.bf16.mxu0 0
  %334 = vmatpush2.bf16.msra.mxu0 %v247
  %335 = vmatprep.mubr.bf16.mxu0 %v104
  %336 = vmatmul.mubr.bf16.gmra.mxu0 %v103
  %v337 = vpop.f32.mrf.mxu0
  %v338 = vadd.f32 0.0, %v337
  %v339 = vpop.f32.mrf.mxu0
  %v340 = vpop.f32.mrf.mxu0
  %v341 = vadd.f32 0.0, %v340
  %v342 = vpop.f32.mrf.mxu0
  %343 = vdwg.mxu0
  %344 = vmatprep.subr.bf16.mxu0 0
  %345 = vmatpush1.bf16.msra.mxu0 %v262
  %346 = vmatprep.subr.bf16.mxu0 0
  %347 = vmatpush1.bf16.msra.mxu0 %v261
  %348 = vmatprep.subr.bf16.mxu0 0
  %349 = vmatpush1.bf16.msra.mxu0 %v260
  %350 = vmatprep.subr.bf16.mxu0 0
  %351 = vmatpush1.bf16.msra.mxu0 %v259
  %352 = vmatprep.subr.bf16.mxu0 0
  %353 = vmatpush1.bf16.msra.mxu0 %v258
  %354 = vmatprep.subr.bf16.mxu0 0
  %355 = vmatpush1.bf16.msra.mxu0 %v257
  %356 = vmatprep.subr.bf16.mxu0 0
  %357 = vmatpush1.bf16.msra.mxu0 %v256
  %358 = vmatprep.subr.bf16.mxu0 0
  %359 = vmatpush1.bf16.msra.mxu0 %v255
  %360 = vmatprep.subr.bf16.mxu0 0
  %361 = vmatpush2.bf16.msra.mxu0 %v270
  %362 = vmatprep.subr.bf16.mxu0 0
  %363 = vmatpush2.bf16.msra.mxu0 %v269
  %364 = vmatprep.subr.bf16.mxu0 0
  %365 = vmatpush2.bf16.msra.mxu0 %v268
  %366 = vmatprep.subr.bf16.mxu0 0
  %367 = vmatpush2.bf16.msra.mxu0 %v267
  %368 = vmatprep.subr.bf16.mxu0 0
  %369 = vmatpush2.bf16.msra.mxu0 %v266
  %370 = vmatprep.subr.bf16.mxu0 0
  %371 = vmatpush2.bf16.msra.mxu0 %v265
  %372 = vmatprep.subr.bf16.mxu0 0
  %373 = vmatpush2.bf16.msra.mxu0 %v264
  %374 = vmatprep.subr.bf16.mxu0 0
  %375 = vmatpush2.bf16.msra.mxu0 %v263
  %376 = vmatprep.mubr.bf16.mxu0 %v106
  %377 = vmatmul.mubr.bf16.gmra.mxu0 %v105
  %v378 = vpop.f32.mrf.mxu0
  %v379 = vadd.f32 %v338, %v378
  %v380 = vpop.f32.mrf.mxu0
  %v381 = vpop.f32.mrf.mxu0
  %v382 = vadd.f32 %v341, %v381
  %v383 = vpop.f32.mrf.mxu0
  %384 = vdwg.mxu0
  %v385 = vadd.f32 %v21, %v379
  %v386 = vadd.f32 %v22, %v382
  %387 = vst [vmem:[#allocation2] sm:$0xff] %v385
  %388 = vst [vmem:[#allocation2 + $0x8] sm:$0xff] %v386
  // Predicated region
  $region18: #{bert_forward.21} parent=0 // pred_check
    %p389 = pneg %p15
  $region19: #{bert_forward.21} parent=0 // pred_check_branch
    %391 = sbr.rel (%p389) target = $region21
  $region20: #{bert_forward.21} parent=0 // pred_region
    %v392 = vld [vmem:[#allocation2] sm:$0xff]
    %v393 = vld [vmem:[#allocation2 + $0x8] sm:$0xff]
    %v394 = vld [vmem:[%s2] sm:$0x1]
    %v396 = vlaneseq
    %v397 = vshrl.u32 %v396, 7
    %v398 = vsub.s32 0, %v397
    %v399 = vrot.slane %v394, %v398
    %v401 = vadd.f32 %v392, %v399
    %v402 = vadd.f32 %v393, %v399
    %v403 = vpack.c.bf16 %v402, %v401
    %v405 = vunpack.c.l.b16 %v403
    %v406 = vunpack.c.h.b16 %v403
    %v407 = vpack.c.b16 %v405, %v405
    %v408 = vpack.c.b16 %v406, %v406
    %411 = vst [vmem:[%s3] sm:$0xf] %v407
    %412 = vst [vmem:[%s3 + $0x4] sm:$0xf] %v408
  $region21: #{bert_forward.21} parent=0 // pred_fallthru
    _
  // Predicated region
  $region22: #{bert_forward.21} parent=0 // pred_check
    _
  $region23: #{bert_forward.21} parent=0 // pred_check_branch
    %414 = sbr.rel (0) target = $region25
  $region24: #{bert_forward.21} parent=0 // pred_region
    _
  $region25: #{bert_forward.21} parent=0 // pred_fallthru
    _
  // Predicated region
  $region26: #{bert_forward.21} parent=0 // pred_check
    _
  $region27: #{bert_forward.21} parent=0 // pred_check_branch
    %416 = sbr.rel (0) target = $region29
  $region28: #{bert_forward.21} parent=0 // pred_region
    _
  $region29: #{bert_forward.21} parent=0 // pred_fallthru
    _

</llo_original>
